<compile_context>
chip_gen: v7x
topology: tpu7x:2x2x1
jax: 0.10.0
libtpu: 0.0.40
codegen_flags: <defaults>
</compile_context>

<pallas_src>
import numpy as np

import jax
import jax.numpy as jnp
from jax.experimental import pallas as pl
from jax.experimental.pallas import tpu as pltpu


# tap order k = kh*3 + kw  ->  (dt, dn) = (kh-1, kw-1)
_TAPS = tuple((kh - 1, kw - 1) for kh in range(3) for kw in range(3))


def _apply_act(x, act):
    if act is None or act == 'none':
        return x
    if act == 'relu':
        return jnp.maximum(x, 0.0)
    if act == 'tanh':
        return jnp.tanh(x)
    if act == 'sigmoid':
        return jax.nn.sigmoid(x)
    if act == 'leaky_relu':
        return jnp.where(x >= 0, x, 0.01 * x)
    raise ValueError(act)


def _tiny_matmul(a, b):
    """a @ b for tiny static shapes via outer-product accumulation (pure VPU).
    Used only for the (4x8)@(8x2)-sized gating MLP, where an MXU matmul is
    degenerate in every dimension."""
    acc = a[:, 0:1] * b[0:1, :]
    for k in range(1, a.shape[1]):
        acc = acc + a[:, k:k + 1] * b[k:k + 1, :]
    return acc


# --------------------------------------------------------------------------------
# Fused forward kernel (channels-major: activations are (C, P), P = B*T*N on lanes)
# --------------------------------------------------------------------------------
def _build_kernel(*, B, T, Nn, n_tc1_hidden, n_gcn_layers, n_tc2_hidden,
                  use_bn, use_gating, tc1_act, gcn_act, tc2_act):
    P = B * T * Nn
    TN = T * Nn

    def shift_lanes(x, delta):
        # y[:, p] = x[:, (p + delta) mod P]; wrapped entries are masked by the caller.
        d = delta % P
        if d == 0:
            return x
        return jnp.concatenate([x[:, d:], x[:, :d]], axis=1)

    def conv3x3(x, w_all, b_col, masks):
        """Channels-major 3x3 'same' conv over (H=T, W=N): x (Cin,P) -> (Cout,P).
        9 shift+mask taps, each a small MXU matmul with a lane-dense (Cout, 256)
        result; masks zero the positions whose source falls outside the T/N extent
        (PyTorch zero padding)."""
        cout = w_all.shape[0] // 9
        acc = None
        for k, (dt, dn) in enumerate(_TAPS):
            wk = w_all[k * cout:(k + 1) * cout, :]          # (Cout, Cin)
            delta = dt * Nn + dn
            src = shift_lanes(x, delta)
            if delta != 0:
                src = src * masks[k:k + 1, :]
            term = jnp.dot(wk, src, preferred_element_type=jnp.float32)
            acc = term if acc is None else acc + term
        return acc + b_col

    def kernel(*refs):
        refs = list(refs)
        idx = 0

        def nxt():
            nonlocal idx
            r = refs[idx]
            idx += 1
            return r

        x_ref = nxt(); masks_ref = nxt(); abig_ref = nxt()
        bn_g_ref = nxt(); bn_b_ref = nxt()
        gw1_ref = nxt(); gb1_ref = nxt(); gw2_ref = nxt(); gb2_ref = nxt()
        tc1_cat_w_ref = nxt(); tc1_cat_b_ref = nxt()
        tc1_h = [(nxt(), nxt()) for _ in range(n_tc1_hidden)]
        gcn = [(nxt(), nxt()) for _ in range(n_gcn_layers)]
        tc2_in_w_ref = nxt(); tc2_in_b_ref = nxt()
        tc2_h = [(nxt(), nxt()) for _ in range(n_tc2_hidden)]
        o_ref = nxt()

        masks = masks_ref[...]                              # (9, P)
        x = x_ref[...].astype(jnp.float32)                  # (C_in, P) channels-major

        # ---- BatchNorm2d (training-mode batch statistics, two-pass variance) ----
        if use_bn:
            mean = jnp.sum(x, axis=1, keepdims=True) * (1.0 / P)       # (C, 1)
            xc = x - mean
            var = jnp.sum(xc * xc, axis=1, keepdims=True) * (1.0 / P)  # biased
            x = xc * jax.lax.rsqrt(var + 1e-5) * bn_g_ref[...] + bn_b_ref[...]

        # ---- GatingLayer: per-(batch, channel) mean / unbiased std over (T, N) ----
        if use_gating:
            m_cols, s_cols = [], []
            for b in range(B):
                xb = x[:, b * TN:(b + 1) * TN]                          # (C, TN)
                mb = jnp.sum(xb, axis=1, keepdims=True) * (1.0 / TN)
                db = xb - mb
                sb = jnp.sqrt(jnp.sum(db * db, axis=1, keepdims=True)
                              * (1.0 / (TN - 1)))                       # torch.std
                m_cols.append(mb)
                s_cols.append(sb)
            stats = jnp.concatenate([jnp.concatenate(m_cols, axis=1),
                                     jnp.concatenate(s_cols, axis=1)], axis=0)  # (2C, B)
            h = jnp.maximum(_tiny_matmul(gw1_ref[...], stats) + gb1_ref[...], 0.0)
            gates = jax.nn.sigmoid(_tiny_matmul(gw2_ref[...], h) + gb2_ref[...])  # (C, B)
            x = jnp.concatenate(
                [x[:, b * TN:(b + 1) * TN] * gates[:, b:b + 1] for b in range(B)],
                axis=1)

        # ---- temp_conv1_in + channel concat (fused: identity rows on centre tap),
        #      then hidden convs with residual, then activation ----
        h1 = conv3x3(x, tc1_cat_w_ref[...], tc1_cat_b_ref[...], masks)   # (HID1, P)
        for (w_ref, b_ref) in tc1_h:
            h1 = conv3x3(h1, w_ref[...], b_ref[...], masks) + h1
        h1 = _apply_act(h1, tc1_act)

        # ---- GCN stack: out[g] = A @ X[g] @ W + b for all B*T graphs at once.
        #      Channels-major: (W^T @ H) is one lane-dense matmul; the per-graph A
        #      is a single matmul with kron(I_G, A)^T (block-diagonal, (P, P)). ----
        abig_t = abig_ref[...]                                           # (P, P)
        g = h1
        for li, (wt_ref, b_ref) in enumerate(gcn):
            xw = jnp.dot(wt_ref[...], g, preferred_element_type=jnp.float32)  # (Fout,P)
            g = jnp.dot(xw, abig_t, preferred_element_type=jnp.float32) + b_ref[...]
            if li == n_gcn_layers - 1:
                g = _apply_act(g, gcn_act)       # GCNModule: activation on last layer
        x2 = g + h1                              # ATGCN-level residual (gcn_outputs + x)

        # ---- temp_conv2 block: sum of [x2, conv_in(x2), hidden chain...], then act ----
        t = conv3x3(x2, tc2_in_w_ref[...], tc2_in_b_ref[...], masks)
        acc = x2 + t
        for (w_ref, b_ref) in tc2_h:
            t = conv3x3(t, w_ref[...], b_ref[...], masks)
            acc = acc + t
        o_ref[...] = _apply_act(acc, tc2_act).astype(o_ref.dtype)        # (C_out, P)

    return kernel


# --------------------------------------------------------------------------------
# Wrapper: layout plumbing + parameter re-packing around the single pallas_call.
# --------------------------------------------------------------------------------
def _prep_conv_weight(w_oihw):
    # (Cout, Cin, 3, 3) -> (9*Cout, Cin), tap-major row blocks (k = kh*3 + kw)
    cout, cin = int(w_oihw.shape[0]), int(w_oihw.shape[1])
    return jnp.transpose(w_oihw, (2, 3, 0, 1)).reshape(9 * cout, cin).astype(jnp.float32)


def _prep_bias(b):
    return jnp.asarray(b, jnp.float32).reshape(-1, 1)


def _tap_masks(B, T, Nn):
    # masks[k, p] = 1 iff (t+dt, n+dn) is inside the (T, N) extent (zero padding).
    P = B * T * Nn
    t = (np.arange(P) // Nn) % T
    n = np.arange(P) % Nn
    m = np.zeros((9, P), np.float32)
    for k, (dt, dn) in enumerate(_TAPS):
        m[k] = ((t + dt >= 0) & (t + dt < T) & (n + dn >= 0) & (n + dn < Nn))
    return jnp.asarray(m)


def atgcn_forward(x, a_norm, params, *, use_bn=True, use_gating=True,
                  tc1_act='relu', gcn_act='relu', tc2_act='tanh'):
    # x: (B, T, N, C_in)  -- the PyTorch input before its permute(0, 3, 1, 2).
    B, T, Nn, Cin = x.shape
    P = B * T * Nn
    G = B * T

    # layout plumbing (tiny XLA ops): channels-major input, block-diag adjacency.
    x_cm = jnp.transpose(x.reshape(P, Cin)).astype(jnp.float32)            # (Cin, P)
    masks = _tap_masks(B, T, Nn)                                           # (9, P)
    a_big_t = jnp.kron(jnp.eye(G, dtype=jnp.float32),
                       jnp.transpose(a_norm).astype(jnp.float32))          # (P, P)

    # temp_conv1_in fused with the channel concat: output rows 0:Cin copy x
    # (identity on the centre tap), rows Cin:HID1 are the real conv1_in weights.
    c1_out = int(params['tc1_in_w'].shape[0])
    hid1 = Cin + c1_out
    w_in = jnp.transpose(params['tc1_in_w'], (2, 3, 0, 1)).reshape(9, c1_out, Cin)
    ident = jnp.zeros((9, Cin, Cin), jnp.float32).at[4].set(jnp.eye(Cin, dtype=jnp.float32))
    w_cat = jnp.concatenate([ident, w_in.astype(jnp.float32)], axis=1).reshape(9 * hid1, Cin)
    b_cat = jnp.concatenate([jnp.zeros((Cin,), jnp.float32),
                             jnp.asarray(params['tc1_in_b'], jnp.float32)]).reshape(hid1, 1)

    args = [
        x_cm, masks, a_big_t,
        _prep_bias(params['bn_gamma']), _prep_bias(params['bn_beta']),
        jnp.transpose(params['gate_w1']).astype(jnp.float32), _prep_bias(params['gate_b1']),
        jnp.transpose(params['gate_w2']).astype(jnp.float32), _prep_bias(params['gate_b2']),
        w_cat, b_cat,
    ]
    for w, b in zip(params['tc1_hid_w'], params['tc1_hid_b']):
        args += [_prep_conv_weight(w), _prep_bias(b)]
    for w, b in zip(params['gcn_w'], params['gcn_b']):
        args += [jnp.transpose(w).astype(jnp.float32), _prep_bias(b)]
    args += [_prep_conv_weight(params['tc2_in_w']), _prep_bias(params['tc2_in_b'])]
    for w, b in zip(params['tc2_hid_w'], params['tc2_hid_b']):
        args += [_prep_conv_weight(w), _prep_bias(b)]

    cout = int(params['tc2_in_w'].shape[0])
    kernel = _build_kernel(
        B=B, T=T, Nn=Nn,
        n_tc1_hidden=len(params['tc1_hid_w']),
        n_gcn_layers=len(params['gcn_w']),
        n_tc2_hidden=len(params['tc2_hid_w']),
        use_bn=use_bn, use_gating=use_gating,
        tc1_act=tc1_act, gcn_act=gcn_act, tc2_act=tc2_act)

    out_cm = pl.pallas_call(
        kernel,
        out_shape=jax.ShapeDtypeStruct((cout, P), jnp.float32),
        in_specs=[pl.BlockSpec(memory_space=pltpu.MemorySpace.VMEM)] * len(args),
        out_specs=pl.BlockSpec(memory_space=pltpu.MemorySpace.VMEM),
    )(*args)                                                              # (C_out, P)

    # (C_out, P) -> (B, T, N*C_out), matching permute(0,2,3,1).view(B, T, -1).
    return jnp.transpose(out_cm).reshape(B, T, Nn * cout)


def gcn_normalized_adjacency(edge_index, num_nodes):
    """Dense D^-1/2 (A + I) D^-1/2, identical to GCNConv's symmetric normalization
    with self-loops for an unweighted (deduplicated) edge_index."""
    src, dst = edge_index[0], edge_index[1]
    a = jnp.zeros((num_nodes, num_nodes), jnp.float32).at[dst, src].set(1.0)
    a = a + jnp.eye(num_nodes, dtype=jnp.float32)
    deg = jnp.sum(a, axis=1)
    dinv = jax.lax.rsqrt(deg)
    return a * dinv[:, None] * dinv[None, :]


if __name__ == "__main__":
    B, T, N, C_in = 2, 8, 16, 4
    HID1 = 8            # tempcov1 hidden_channel
    GCN_HID = 16        # GCN hidden_channels
    GCN_OUT = HID1      # GCN out_channels (must == HID1 for "gcn_outputs + x")
    HID2 = HID1         # tempcov2 hidden_channel (must == HID1 for sum(outputs))
    REDUCTION = 4       # GatingLayer reduction_features

    key = jax.random.PRNGKey(0)
    ks = jax.random.split(key, 20)

    def nrm(k, shape, s=0.1):
        return (s * jax.random.normal(k, shape)).astype(jnp.float32)

    params = dict(
        bn_gamma=jnp.ones((C_in,), jnp.float32),       # BatchNorm2d default init
        bn_beta=jnp.zeros((C_in,), jnp.float32),
        gate_w1=nrm(ks[0], (2 * C_in, REDUCTION)),     # Linear(in*2 -> reduction)
        gate_b1=nrm(ks[1], (REDUCTION,)),
        gate_w2=nrm(ks[2], (REDUCTION, C_in)),         # Linear(reduction -> in)
        gate_b2=nrm(ks[3], (C_in,)),
        tc1_in_w=nrm(ks[4], (HID1 - C_in, C_in, 3, 3)),
        tc1_in_b=nrm(ks[5], (HID1 - C_in,)),
        tc1_hid_w=[nrm(ks[6], (HID1, HID1, 3, 3))],
        tc1_hid_b=[nrm(ks[7], (HID1,))],
        gcn_w=[nrm(ks[8], (HID1, GCN_HID)),
               nrm(ks[9], (GCN_HID, GCN_HID)),
               nrm(ks[10], (GCN_HID, GCN_OUT))],
        gcn_b=[nrm(ks[11], (GCN_HID,)),
               nrm(ks[12], (GCN_HID,)),
               nrm(ks[13], (GCN_OUT,))],
        tc2_in_w=nrm(ks[14], (HID2, GCN_OUT, 3, 3)),
        tc2_in_b=nrm(ks[15], (HID2,)),
        tc2_hid_w=[nrm(ks[16], (HID2, HID2, 3, 3))],
        tc2_hid_b=[nrm(ks[17], (HID2,))],
    )

    # deterministic input (B, T, N, C_in) and a bidirectional ring graph over N nodes
    x = jax.random.normal(jax.random.PRNGKey(42), (B, T, N, C_in), jnp.float32)
    src = jnp.arange(N, dtype=jnp.int32)
    dst = (src + 1) % N
    edge_index = jnp.stack([jnp.concatenate([src, dst]),
                            jnp.concatenate([dst, src])])      # (2, 2N)
    a_norm = gcn_normalized_adjacency(edge_index, N)

    fwd = jax.jit(atgcn_forward)
    out = jax.block_until_ready(fwd(x, a_norm, params))
    assert out.shape == (B, T, N * HID2), out.shape
    assert bool(jnp.all(jnp.isfinite(out)))
    print("KERNEL_OK")
</pallas_src>

<mosaic_0001>
module attributes {stable_mosaic.version = 11 : i64} {
  func.func @kernel(%arg0: memref<4x256xf32, #tpu.memory_space<vmem>>, %arg1: memref<9x256xf32, #tpu.memory_space<vmem>>, %arg2: memref<256x256xf32, #tpu.memory_space<vmem>>, %arg3: memref<4x1xf32, #tpu.memory_space<vmem>>, %arg4: memref<4x1xf32, #tpu.memory_space<vmem>>, %arg5: memref<4x8xf32, #tpu.memory_space<vmem>>, %arg6: memref<4x1xf32, #tpu.memory_space<vmem>>, %arg7: memref<4x4xf32, #tpu.memory_space<vmem>>, %arg8: memref<4x1xf32, #tpu.memory_space<vmem>>, %arg9: memref<72x4xf32, #tpu.memory_space<vmem>>, %arg10: memref<8x1xf32, #tpu.memory_space<vmem>>, %arg11: memref<72x8xf32, #tpu.memory_space<vmem>>, %arg12: memref<8x1xf32, #tpu.memory_space<vmem>>, %arg13: memref<16x8xf32, #tpu.memory_space<vmem>>, %arg14: memref<16x1xf32, #tpu.memory_space<vmem>>, %arg15: memref<16x16xf32, #tpu.memory_space<vmem>>, %arg16: memref<16x1xf32, #tpu.memory_space<vmem>>, %arg17: memref<8x16xf32, #tpu.memory_space<vmem>>, %arg18: memref<8x1xf32, #tpu.memory_space<vmem>>, %arg19: memref<72x8xf32, #tpu.memory_space<vmem>>, %arg20: memref<8x1xf32, #tpu.memory_space<vmem>>, %arg21: memref<72x8xf32, #tpu.memory_space<vmem>>, %arg22: memref<8x1xf32, #tpu.memory_space<vmem>>, %arg23: memref<8x256xf32, #tpu.memory_space<vmem>>) attributes {dimension_semantics = [], scalar_prefetch = 0 : i64, scratch_operands = 0 : i64, tpu.core_type = #tpu.core_type<tc>} {
    %c0 = arith.constant 0 : index
    %c0_0 = arith.constant 0 : index
    %0 = vector.load %arg1[%c0, %c0_0] : memref<9x256xf32, #tpu.memory_space<vmem>>, vector<9x256xf32>
    %c0_1 = arith.constant 0 : index
    %c0_2 = arith.constant 0 : index
    %1 = vector.load %arg0[%c0_1, %c0_2] : memref<4x256xf32, #tpu.memory_space<vmem>>, vector<4x256xf32>
    %cst = arith.constant dense<0.000000e+00> : vector<4xf32>
    %2 = vector.multi_reduction <add>, %1, %cst [1] : vector<4x256xf32> to vector<4xf32>
    %3 = vector.shape_cast %2 : vector<4xf32> to vector<4x1xf32>
    %cst_3 = arith.constant 3.906250e-03 : f32
    %4 = vector.broadcast %cst_3 : f32 to vector<4x1xf32>
    %5 = arith.mulf %3, %4 : vector<4x1xf32>
    %6 = vector.broadcast %5 : vector<4x1xf32> to vector<4x256xf32>
    %7 = arith.subf %1, %6 : vector<4x256xf32>
    %8 = arith.mulf %7, %7 : vector<4x256xf32>
    %cst_4 = arith.constant dense<0.000000e+00> : vector<4xf32>
    %9 = vector.multi_reduction <add>, %8, %cst_4 [1] : vector<4x256xf32> to vector<4xf32>
    %10 = vector.shape_cast %9 : vector<4xf32> to vector<4x1xf32>
    %cst_5 = arith.constant 3.906250e-03 : f32
    %11 = vector.broadcast %cst_5 : f32 to vector<4x1xf32>
    %12 = arith.mulf %10, %11 : vector<4x1xf32>
    %cst_6 = arith.constant 9.99999974E-6 : f32
    %13 = vector.broadcast %cst_6 : f32 to vector<4x1xf32>
    %14 = arith.addf %12, %13 : vector<4x1xf32>
    %15 = math.rsqrt %14 : vector<4x1xf32>
    %16 = vector.broadcast %15 : vector<4x1xf32> to vector<4x256xf32>
    %17 = arith.mulf %7, %16 : vector<4x256xf32>
    %c0_7 = arith.constant 0 : index
    %c0_8 = arith.constant 0 : index
    %18 = vector.load %arg3[%c0_7, %c0_8] : memref<4x1xf32, #tpu.memory_space<vmem>>, vector<4x1xf32>
    %19 = vector.broadcast %18 : vector<4x1xf32> to vector<4x256xf32>
    %20 = arith.mulf %17, %19 : vector<4x256xf32>
    %c0_9 = arith.constant 0 : index
    %c0_10 = arith.constant 0 : index
    %21 = vector.load %arg4[%c0_9, %c0_10] : memref<4x1xf32, #tpu.memory_space<vmem>>, vector<4x1xf32>
    %22 = vector.broadcast %21 : vector<4x1xf32> to vector<4x256xf32>
    %23 = arith.addf %20, %22 : vector<4x256xf32>
    %24 = vector.extract_strided_slice %23 {offsets = [0, 0], sizes = [4, 128], strides = [1, 1]} : vector<4x256xf32> to vector<4x128xf32>
    %cst_11 = arith.constant dense<0.000000e+00> : vector<4xf32>
    %25 = vector.multi_reduction <add>, %24, %cst_11 [1] : vector<4x128xf32> to vector<4xf32>
    %26 = vector.shape_cast %25 : vector<4xf32> to vector<4x1xf32>
    %cst_12 = arith.constant 7.812500e-03 : f32
    %27 = vector.broadcast %cst_12 : f32 to vector<4x1xf32>
    %28 = arith.mulf %26, %27 : vector<4x1xf32>
    %29 = vector.broadcast %28 : vector<4x1xf32> to vector<4x128xf32>
    %30 = arith.subf %24, %29 : vector<4x128xf32>
    %31 = arith.mulf %30, %30 : vector<4x128xf32>
    %cst_13 = arith.constant dense<0.000000e+00> : vector<4xf32>
    %32 = vector.multi_reduction <add>, %31, %cst_13 [1] : vector<4x128xf32> to vector<4xf32>
    %33 = vector.shape_cast %32 : vector<4xf32> to vector<4x1xf32>
    %cst_14 = arith.constant 0.00787401571 : f32
    %34 = vector.broadcast %cst_14 : f32 to vector<4x1xf32>
    %35 = arith.mulf %33, %34 : vector<4x1xf32>
    %36 = math.sqrt %35 : vector<4x1xf32>
    %37 = vector.extract_strided_slice %23 {offsets = [0, 128], sizes = [4, 128], strides = [1, 1]} : vector<4x256xf32> to vector<4x128xf32>
    %cst_15 = arith.constant dense<0.000000e+00> : vector<4xf32>
    %38 = vector.multi_reduction <add>, %37, %cst_15 [1] : vector<4x128xf32> to vector<4xf32>
    %39 = vector.shape_cast %38 : vector<4xf32> to vector<4x1xf32>
    %cst_16 = arith.constant 7.812500e-03 : f32
    %40 = vector.broadcast %cst_16 : f32 to vector<4x1xf32>
    %41 = arith.mulf %39, %40 : vector<4x1xf32>
    %42 = vector.broadcast %41 : vector<4x1xf32> to vector<4x128xf32>
    %43 = arith.subf %37, %42 : vector<4x128xf32>
    %44 = arith.mulf %43, %43 : vector<4x128xf32>
    %cst_17 = arith.constant dense<0.000000e+00> : vector<4xf32>
    %45 = vector.multi_reduction <add>, %44, %cst_17 [1] : vector<4x128xf32> to vector<4xf32>
    %46 = vector.shape_cast %45 : vector<4xf32> to vector<4x1xf32>
    %cst_18 = arith.constant 0.00787401571 : f32
    %47 = vector.broadcast %cst_18 : f32 to vector<4x1xf32>
    %48 = arith.mulf %46, %47 : vector<4x1xf32>
    %49 = math.sqrt %48 : vector<4x1xf32>
    %50 = tpu.concatenate %28, %41 in 1 : vector<4x1xf32>, vector<4x1xf32> -> vector<4x2xf32>
    %51 = tpu.concatenate %36, %49 in 1 : vector<4x1xf32>, vector<4x1xf32> -> vector<4x2xf32>
    %52 = tpu.concatenate %50, %51 in 0 : vector<4x2xf32>, vector<4x2xf32> -> vector<8x2xf32>
    %c0_19 = arith.constant 0 : index
    %c0_20 = arith.constant 0 : index
    %53 = vector.load %arg5[%c0_19, %c0_20] : memref<4x8xf32, #tpu.memory_space<vmem>>, vector<4x8xf32>
    %54 = vector.extract_strided_slice %53 {offsets = [0, 0], sizes = [4, 1], strides = [1, 1]} : vector<4x8xf32> to vector<4x1xf32>
    %55 = vector.extract_strided_slice %52 {offsets = [0, 0], sizes = [1, 2], strides = [1, 1]} : vector<8x2xf32> to vector<1x2xf32>
    %56 = vector.broadcast %54 : vector<4x1xf32> to vector<4x2xf32>
    %57 = vector.broadcast %55 : vector<1x2xf32> to vector<4x2xf32>
    %58 = arith.mulf %56, %57 : vector<4x2xf32>
    %59 = vector.extract_strided_slice %53 {offsets = [0, 1], sizes = [4, 1], strides = [1, 1]} : vector<4x8xf32> to vector<4x1xf32>
    %60 = vector.extract_strided_slice %52 {offsets = [1, 0], sizes = [1, 2], strides = [1, 1]} : vector<8x2xf32> to vector<1x2xf32>
    %61 = vector.broadcast %59 : vector<4x1xf32> to vector<4x2xf32>
    %62 = vector.broadcast %60 : vector<1x2xf32> to vector<4x2xf32>
    %63 = arith.mulf %61, %62 : vector<4x2xf32>
    %64 = arith.addf %58, %63 : vector<4x2xf32>
    %65 = vector.extract_strided_slice %53 {offsets = [0, 2], sizes = [4, 1], strides = [1, 1]} : vector<4x8xf32> to vector<4x1xf32>
    %66 = vector.extract_strided_slice %52 {offsets = [2, 0], sizes = [1, 2], strides = [1, 1]} : vector<8x2xf32> to vector<1x2xf32>
    %67 = vector.broadcast %65 : vector<4x1xf32> to vector<4x2xf32>
    %68 = vector.broadcast %66 : vector<1x2xf32> to vector<4x2xf32>
    %69 = arith.mulf %67, %68 : vector<4x2xf32>
    %70 = arith.addf %64, %69 : vector<4x2xf32>
    %71 = vector.extract_strided_slice %53 {offsets = [0, 3], sizes = [4, 1], strides = [1, 1]} : vector<4x8xf32> to vector<4x1xf32>
    %72 = vector.extract_strided_slice %52 {offsets = [3, 0], sizes = [1, 2], strides = [1, 1]} : vector<8x2xf32> to vector<1x2xf32>
    %73 = vector.broadcast %71 : vector<4x1xf32> to vector<4x2xf32>
    %74 = vector.broadcast %72 : vector<1x2xf32> to vector<4x2xf32>
    %75 = arith.mulf %73, %74 : vector<4x2xf32>
    %76 = arith.addf %70, %75 : vector<4x2xf32>
    %77 = vector.extract_strided_slice %53 {offsets = [0, 4], sizes = [4, 1], strides = [1, 1]} : vector<4x8xf32> to vector<4x1xf32>
    %78 = vector.extract_strided_slice %52 {offsets = [4, 0], sizes = [1, 2], strides = [1, 1]} : vector<8x2xf32> to vector<1x2xf32>
    %79 = vector.broadcast %77 : vector<4x1xf32> to vector<4x2xf32>
    %80 = vector.broadcast %78 : vector<1x2xf32> to vector<4x2xf32>
    %81 = arith.mulf %79, %80 : vector<4x2xf32>
    %82 = arith.addf %76, %81 : vector<4x2xf32>
    %83 = vector.extract_strided_slice %53 {offsets = [0, 5], sizes = [4, 1], strides = [1, 1]} : vector<4x8xf32> to vector<4x1xf32>
    %84 = vector.extract_strided_slice %52 {offsets = [5, 0], sizes = [1, 2], strides = [1, 1]} : vector<8x2xf32> to vector<1x2xf32>
    %85 = vector.broadcast %83 : vector<4x1xf32> to vector<4x2xf32>
    %86 = vector.broadcast %84 : vector<1x2xf32> to vector<4x2xf32>
    %87 = arith.mulf %85, %86 : vector<4x2xf32>
    %88 = arith.addf %82, %87 : vector<4x2xf32>
    %89 = vector.extract_strided_slice %53 {offsets = [0, 6], sizes = [4, 1], strides = [1, 1]} : vector<4x8xf32> to vector<4x1xf32>
    %90 = vector.extract_strided_slice %52 {offsets = [6, 0], sizes = [1, 2], strides = [1, 1]} : vector<8x2xf32> to vector<1x2xf32>
    %91 = vector.broadcast %89 : vector<4x1xf32> to vector<4x2xf32>
    %92 = vector.broadcast %90 : vector<1x2xf32> to vector<4x2xf32>
    %93 = arith.mulf %91, %92 : vector<4x2xf32>
    %94 = arith.addf %88, %93 : vector<4x2xf32>
    %95 = vector.extract_strided_slice %53 {offsets = [0, 7], sizes = [4, 1], strides = [1, 1]} : vector<4x8xf32> to vector<4x1xf32>
    %96 = vector.extract_strided_slice %52 {offsets = [7, 0], sizes = [1, 2], strides = [1, 1]} : vector<8x2xf32> to vector<1x2xf32>
    %97 = vector.broadcast %95 : vector<4x1xf32> to vector<4x2xf32>
    %98 = vector.broadcast %96 : vector<1x2xf32> to vector<4x2xf32>
    %99 = arith.mulf %97, %98 : vector<4x2xf32>
    %100 = arith.addf %94, %99 : vector<4x2xf32>
    %c0_21 = arith.constant 0 : index
    %c0_22 = arith.constant 0 : index
    %101 = vector.load %arg6[%c0_21, %c0_22] : memref<4x1xf32, #tpu.memory_space<vmem>>, vector<4x1xf32>
    %102 = vector.broadcast %101 : vector<4x1xf32> to vector<4x2xf32>
    %103 = arith.addf %100, %102 : vector<4x2xf32>
    %cst_23 = arith.constant 0.000000e+00 : f32
    %104 = vector.broadcast %cst_23 : f32 to vector<4x2xf32>
    %105 = arith.maximumf %103, %104 : vector<4x2xf32>
    %c0_24 = arith.constant 0 : index
    %c0_25 = arith.constant 0 : index
    %106 = vector.load %arg7[%c0_24, %c0_25] : memref<4x4xf32, #tpu.memory_space<vmem>>, vector<4x4xf32>
    %107 = vector.extract_strided_slice %106 {offsets = [0, 0], sizes = [4, 1], strides = [1, 1]} : vector<4x4xf32> to vector<4x1xf32>
    %108 = vector.extract_strided_slice %105 {offsets = [0, 0], sizes = [1, 2], strides = [1, 1]} : vector<4x2xf32> to vector<1x2xf32>
    %109 = vector.broadcast %107 : vector<4x1xf32> to vector<4x2xf32>
    %110 = vector.broadcast %108 : vector<1x2xf32> to vector<4x2xf32>
    %111 = arith.mulf %109, %110 : vector<4x2xf32>
    %112 = vector.extract_strided_slice %106 {offsets = [0, 1], sizes = [4, 1], strides = [1, 1]} : vector<4x4xf32> to vector<4x1xf32>
    %113 = vector.extract_strided_slice %105 {offsets = [1, 0], sizes = [1, 2], strides = [1, 1]} : vector<4x2xf32> to vector<1x2xf32>
    %114 = vector.broadcast %112 : vector<4x1xf32> to vector<4x2xf32>
    %115 = vector.broadcast %113 : vector<1x2xf32> to vector<4x2xf32>
    %116 = arith.mulf %114, %115 : vector<4x2xf32>
    %117 = arith.addf %111, %116 : vector<4x2xf32>
    %118 = vector.extract_strided_slice %106 {offsets = [0, 2], sizes = [4, 1], strides = [1, 1]} : vector<4x4xf32> to vector<4x1xf32>
    %119 = vector.extract_strided_slice %105 {offsets = [2, 0], sizes = [1, 2], strides = [1, 1]} : vector<4x2xf32> to vector<1x2xf32>
    %120 = vector.broadcast %118 : vector<4x1xf32> to vector<4x2xf32>
    %121 = vector.broadcast %119 : vector<1x2xf32> to vector<4x2xf32>
    %122 = arith.mulf %120, %121 : vector<4x2xf32>
    %123 = arith.addf %117, %122 : vector<4x2xf32>
    %124 = vector.extract_strided_slice %106 {offsets = [0, 3], sizes = [4, 1], strides = [1, 1]} : vector<4x4xf32> to vector<4x1xf32>
    %125 = vector.extract_strided_slice %105 {offsets = [3, 0], sizes = [1, 2], strides = [1, 1]} : vector<4x2xf32> to vector<1x2xf32>
    %126 = vector.broadcast %124 : vector<4x1xf32> to vector<4x2xf32>
    %127 = vector.broadcast %125 : vector<1x2xf32> to vector<4x2xf32>
    %128 = arith.mulf %126, %127 : vector<4x2xf32>
    %129 = arith.addf %123, %128 : vector<4x2xf32>
    %c0_26 = arith.constant 0 : index
    %c0_27 = arith.constant 0 : index
    %130 = vector.load %arg8[%c0_26, %c0_27] : memref<4x1xf32, #tpu.memory_space<vmem>>, vector<4x1xf32>
    %131 = vector.broadcast %130 : vector<4x1xf32> to vector<4x2xf32>
    %132 = arith.addf %129, %131 : vector<4x2xf32>
    %133 = arith.negf %132 : vector<4x2xf32>
    %134 = math.exp %133 : vector<4x2xf32>
    %cst_28 = arith.constant 1.000000e+00 : f32
    %135 = vector.broadcast %cst_28 : f32 to vector<4x2xf32>
    %136 = arith.addf %135, %134 : vector<4x2xf32>
    %137 = arith.divf %135, %136 : vector<4x2xf32>
    %138 = vector.extract_strided_slice %23 {offsets = [0, 0], sizes = [4, 128], strides = [1, 1]} : vector<4x256xf32> to vector<4x128xf32>
    %139 = vector.extract_strided_slice %137 {offsets = [0, 0], sizes = [4, 1], strides = [1, 1]} : vector<4x2xf32> to vector<4x1xf32>
    %140 = vector.broadcast %139 : vector<4x1xf32> to vector<4x128xf32>
    %141 = arith.mulf %138, %140 : vector<4x128xf32>
    %142 = vector.extract_strided_slice %23 {offsets = [0, 128], sizes = [4, 128], strides = [1, 1]} : vector<4x256xf32> to vector<4x128xf32>
    %143 = vector.extract_strided_slice %137 {offsets = [0, 1], sizes = [4, 1], strides = [1, 1]} : vector<4x2xf32> to vector<4x1xf32>
    %144 = vector.broadcast %143 : vector<4x1xf32> to vector<4x128xf32>
    %145 = arith.mulf %142, %144 : vector<4x128xf32>
    %146 = tpu.concatenate %141, %145 in 1 : vector<4x128xf32>, vector<4x128xf32> -> vector<4x256xf32>
    %c0_29 = arith.constant 0 : index
    %c0_30 = arith.constant 0 : index
    %147 = vector.load %arg9[%c0_29, %c0_30] : memref<72x4xf32, #tpu.memory_space<vmem>>, vector<72x4xf32>
    %c0_31 = arith.constant 0 : index
    %c0_32 = arith.constant 0 : index
    %148 = vector.load %arg10[%c0_31, %c0_32] : memref<8x1xf32, #tpu.memory_space<vmem>>, vector<8x1xf32>
    %149 = vector.extract_strided_slice %147 {offsets = [0, 0], sizes = [8, 4], strides = [1, 1]} : vector<72x4xf32> to vector<8x4xf32>
    %150 = vector.extract_strided_slice %146 {offsets = [0, 239], sizes = [4, 17], strides = [1, 1]} : vector<4x256xf32> to vector<4x17xf32>
    %151 = vector.extract_strided_slice %146 {offsets = [0, 0], sizes = [4, 239], strides = [1, 1]} : vector<4x256xf32> to vector<4x239xf32>
    %152 = tpu.concatenate %150, %151 in 1 : vector<4x17xf32>, vector<4x239xf32> -> vector<4x256xf32>
    %153 = vector.extract_strided_slice %0 {offsets = [0, 0], sizes = [1, 256], strides = [1, 1]} : vector<9x256xf32> to vector<1x256xf32>
    %154 = vector.broadcast %153 : vector<1x256xf32> to vector<4x256xf32>
    %155 = arith.mulf %152, %154 : vector<4x256xf32>
    %cst_33 = arith.constant dense<0.000000e+00> : vector<8x256xf32>
    %156 = tpu.matmul %149, %155, %cst_33 {dimension_numbers = #tpu.dot_dimension_numbers<[1], [0], [0], [1], [0, 0, 1, 1], [], []>} : vector<8x4xf32>, vector<4x256xf32>, vector<8x256xf32> -> vector<8x256xf32>
    %157 = vector.extract_strided_slice %147 {offsets = [8, 0], sizes = [8, 4], strides = [1, 1]} : vector<72x4xf32> to vector<8x4xf32>
    %158 = vector.extract_strided_slice %146 {offsets = [0, 240], sizes = [4, 16], strides = [1, 1]} : vector<4x256xf32> to vector<4x16xf32>
    %159 = vector.extract_strided_slice %146 {offsets = [0, 0], sizes = [4, 240], strides = [1, 1]} : vector<4x256xf32> to vector<4x240xf32>
    %160 = tpu.concatenate %158, %159 in 1 : vector<4x16xf32>, vector<4x240xf32> -> vector<4x256xf32>
    %161 = vector.extract_strided_slice %0 {offsets = [1, 0], sizes = [1, 256], strides = [1, 1]} : vector<9x256xf32> to vector<1x256xf32>
    %162 = vector.broadcast %161 : vector<1x256xf32> to vector<4x256xf32>
    %163 = arith.mulf %160, %162 : vector<4x256xf32>
    %cst_34 = arith.constant dense<0.000000e+00> : vector<8x256xf32>
    %164 = tpu.matmul %157, %163, %cst_34 {dimension_numbers = #tpu.dot_dimension_numbers<[1], [0], [0], [1], [0, 0, 1, 1], [], []>} : vector<8x4xf32>, vector<4x256xf32>, vector<8x256xf32> -> vector<8x256xf32>
    %165 = arith.addf %156, %164 : vector<8x256xf32>
    %166 = vector.extract_strided_slice %147 {offsets = [16, 0], sizes = [8, 4], strides = [1, 1]} : vector<72x4xf32> to vector<8x4xf32>
    %167 = vector.extract_strided_slice %146 {offsets = [0, 241], sizes = [4, 15], strides = [1, 1]} : vector<4x256xf32> to vector<4x15xf32>
    %168 = vector.extract_strided_slice %146 {offsets = [0, 0], sizes = [4, 241], strides = [1, 1]} : vector<4x256xf32> to vector<4x241xf32>
    %169 = tpu.concatenate %167, %168 in 1 : vector<4x15xf32>, vector<4x241xf32> -> vector<4x256xf32>
    %170 = vector.extract_strided_slice %0 {offsets = [2, 0], sizes = [1, 256], strides = [1, 1]} : vector<9x256xf32> to vector<1x256xf32>
    %171 = vector.broadcast %170 : vector<1x256xf32> to vector<4x256xf32>
    %172 = arith.mulf %169, %171 : vector<4x256xf32>
    %cst_35 = arith.constant dense<0.000000e+00> : vector<8x256xf32>
    %173 = tpu.matmul %166, %172, %cst_35 {dimension_numbers = #tpu.dot_dimension_numbers<[1], [0], [0], [1], [0, 0, 1, 1], [], []>} : vector<8x4xf32>, vector<4x256xf32>, vector<8x256xf32> -> vector<8x256xf32>
    %174 = arith.addf %165, %173 : vector<8x256xf32>
    %175 = vector.extract_strided_slice %147 {offsets = [24, 0], sizes = [8, 4], strides = [1, 1]} : vector<72x4xf32> to vector<8x4xf32>
    %176 = vector.extract_strided_slice %146 {offsets = [0, 255], sizes = [4, 1], strides = [1, 1]} : vector<4x256xf32> to vector<4x1xf32>
    %177 = vector.extract_strided_slice %146 {offsets = [0, 0], sizes = [4, 255], strides = [1, 1]} : vector<4x256xf32> to vector<4x255xf32>
    %178 = tpu.concatenate %176, %177 in 1 : vector<4x1xf32>, vector<4x255xf32> -> vector<4x256xf32>
    %179 = vector.extract_strided_slice %0 {offsets = [3, 0], sizes = [1, 256], strides = [1, 1]} : vector<9x256xf32> to vector<1x256xf32>
    %180 = vector.broadcast %179 : vector<1x256xf32> to vector<4x256xf32>
    %181 = arith.mulf %178, %180 : vector<4x256xf32>
    %cst_36 = arith.constant dense<0.000000e+00> : vector<8x256xf32>
    %182 = tpu.matmul %175, %181, %cst_36 {dimension_numbers = #tpu.dot_dimension_numbers<[1], [0], [0], [1], [0, 0, 1, 1], [], []>} : vector<8x4xf32>, vector<4x256xf32>, vector<8x256xf32> -> vector<8x256xf32>
    %183 = arith.addf %174, %182 : vector<8x256xf32>
    %184 = vector.extract_strided_slice %147 {offsets = [32, 0], sizes = [8, 4], strides = [1, 1]} : vector<72x4xf32> to vector<8x4xf32>
    %cst_37 = arith.constant dense<0.000000e+00> : vector<8x256xf32>
    %185 = tpu.matmul %184, %146, %cst_37 {dimension_numbers = #tpu.dot_dimension_numbers<[1], [0], [0], [1], [0, 0, 1, 1], [], []>} : vector<8x4xf32>, vector<4x256xf32>, vector<8x256xf32> -> vector<8x256xf32>
    %186 = arith.addf %183, %185 : vector<8x256xf32>
    %187 = vector.extract_strided_slice %147 {offsets = [40, 0], sizes = [8, 4], strides = [1, 1]} : vector<72x4xf32> to vector<8x4xf32>
    %188 = vector.extract_strided_slice %146 {offsets = [0, 1], sizes = [4, 255], strides = [1, 1]} : vector<4x256xf32> to vector<4x255xf32>
    %189 = vector.extract_strided_slice %146 {offsets = [0, 0], sizes = [4, 1], strides = [1, 1]} : vector<4x256xf32> to vector<4x1xf32>
    %190 = tpu.concatenate %188, %189 in 1 : vector<4x255xf32>, vector<4x1xf32> -> vector<4x256xf32>
    %191 = vector.extract_strided_slice %0 {offsets = [5, 0], sizes = [1, 256], strides = [1, 1]} : vector<9x256xf32> to vector<1x256xf32>
    %192 = vector.broadcast %191 : vector<1x256xf32> to vector<4x256xf32>
    %193 = arith.mulf %190, %192 : vector<4x256xf32>
    %cst_38 = arith.constant dense<0.000000e+00> : vector<8x256xf32>
    %194 = tpu.matmul %187, %193, %cst_38 {dimension_numbers = #tpu.dot_dimension_numbers<[1], [0], [0], [1], [0, 0, 1, 1], [], []>} : vector<8x4xf32>, vector<4x256xf32>, vector<8x256xf32> -> vector<8x256xf32>
    %195 = arith.addf %186, %194 : vector<8x256xf32>
    %196 = vector.extract_strided_slice %147 {offsets = [48, 0], sizes = [8, 4], strides = [1, 1]} : vector<72x4xf32> to vector<8x4xf32>
    %197 = vector.extract_strided_slice %146 {offsets = [0, 15], sizes = [4, 241], strides = [1, 1]} : vector<4x256xf32> to vector<4x241xf32>
    %198 = vector.extract_strided_slice %146 {offsets = [0, 0], sizes = [4, 15], strides = [1, 1]} : vector<4x256xf32> to vector<4x15xf32>
    %199 = tpu.concatenate %197, %198 in 1 : vector<4x241xf32>, vector<4x15xf32> -> vector<4x256xf32>
    %200 = vector.extract_strided_slice %0 {offsets = [6, 0], sizes = [1, 256], strides = [1, 1]} : vector<9x256xf32> to vector<1x256xf32>
    %201 = vector.broadcast %200 : vector<1x256xf32> to vector<4x256xf32>
    %202 = arith.mulf %199, %201 : vector<4x256xf32>
    %cst_39 = arith.constant dense<0.000000e+00> : vector<8x256xf32>
    %203 = tpu.matmul %196, %202, %cst_39 {dimension_numbers = #tpu.dot_dimension_numbers<[1], [0], [0], [1], [0, 0, 1, 1], [], []>} : vector<8x4xf32>, vector<4x256xf32>, vector<8x256xf32> -> vector<8x256xf32>
    %204 = arith.addf %195, %203 : vector<8x256xf32>
    %205 = vector.extract_strided_slice %147 {offsets = [56, 0], sizes = [8, 4], strides = [1, 1]} : vector<72x4xf32> to vector<8x4xf32>
    %206 = vector.extract_strided_slice %146 {offsets = [0, 16], sizes = [4, 240], strides = [1, 1]} : vector<4x256xf32> to vector<4x240xf32>
    %207 = vector.extract_strided_slice %146 {offsets = [0, 0], sizes = [4, 16], strides = [1, 1]} : vector<4x256xf32> to vector<4x16xf32>
    %208 = tpu.concatenate %206, %207 in 1 : vector<4x240xf32>, vector<4x16xf32> -> vector<4x256xf32>
    %209 = vector.extract_strided_slice %0 {offsets = [7, 0], sizes = [1, 256], strides = [1, 1]} : vector<9x256xf32> to vector<1x256xf32>
    %210 = vector.broadcast %209 : vector<1x256xf32> to vector<4x256xf32>
    %211 = arith.mulf %208, %210 : vector<4x256xf32>
    %cst_40 = arith.constant dense<0.000000e+00> : vector<8x256xf32>
    %212 = tpu.matmul %205, %211, %cst_40 {dimension_numbers = #tpu.dot_dimension_numbers<[1], [0], [0], [1], [0, 0, 1, 1], [], []>} : vector<8x4xf32>, vector<4x256xf32>, vector<8x256xf32> -> vector<8x256xf32>
    %213 = arith.addf %204, %212 : vector<8x256xf32>
    %214 = vector.extract_strided_slice %147 {offsets = [64, 0], sizes = [8, 4], strides = [1, 1]} : vector<72x4xf32> to vector<8x4xf32>
    %215 = vector.extract_strided_slice %146 {offsets = [0, 17], sizes = [4, 239], strides = [1, 1]} : vector<4x256xf32> to vector<4x239xf32>
    %216 = vector.extract_strided_slice %146 {offsets = [0, 0], sizes = [4, 17], strides = [1, 1]} : vector<4x256xf32> to vector<4x17xf32>
    %217 = tpu.concatenate %215, %216 in 1 : vector<4x239xf32>, vector<4x17xf32> -> vector<4x256xf32>
    %218 = vector.extract_strided_slice %0 {offsets = [8, 0], sizes = [1, 256], strides = [1, 1]} : vector<9x256xf32> to vector<1x256xf32>
    %219 = vector.broadcast %218 : vector<1x256xf32> to vector<4x256xf32>
    %220 = arith.mulf %217, %219 : vector<4x256xf32>
    %cst_41 = arith.constant dense<0.000000e+00> : vector<8x256xf32>
    %221 = tpu.matmul %214, %220, %cst_41 {dimension_numbers = #tpu.dot_dimension_numbers<[1], [0], [0], [1], [0, 0, 1, 1], [], []>} : vector<8x4xf32>, vector<4x256xf32>, vector<8x256xf32> -> vector<8x256xf32>
    %222 = arith.addf %213, %221 : vector<8x256xf32>
    %223 = vector.broadcast %148 : vector<8x1xf32> to vector<8x256xf32>
    %224 = arith.addf %222, %223 : vector<8x256xf32>
    %c0_42 = arith.constant 0 : index
    %c0_43 = arith.constant 0 : index
    %225 = vector.load %arg11[%c0_42, %c0_43] : memref<72x8xf32, #tpu.memory_space<vmem>>, vector<72x8xf32>
    %c0_44 = arith.constant 0 : index
    %c0_45 = arith.constant 0 : index
    %226 = vector.load %arg12[%c0_44, %c0_45] : memref<8x1xf32, #tpu.memory_space<vmem>>, vector<8x1xf32>
    %227 = vector.extract_strided_slice %225 {offsets = [0, 0], sizes = [8, 8], strides = [1, 1]} : vector<72x8xf32> to vector<8x8xf32>
    %228 = vector.extract_strided_slice %224 {offsets = [0, 239], sizes = [8, 17], strides = [1, 1]} : vector<8x256xf32> to vector<8x17xf32>
    %229 = vector.extract_strided_slice %224 {offsets = [0, 0], sizes = [8, 239], strides = [1, 1]} : vector<8x256xf32> to vector<8x239xf32>
    %230 = tpu.concatenate %228, %229 in 1 : vector<8x17xf32>, vector<8x239xf32> -> vector<8x256xf32>
    %231 = vector.extract_strided_slice %0 {offsets = [0, 0], sizes = [1, 256], strides = [1, 1]} : vector<9x256xf32> to vector<1x256xf32>
    %232 = vector.broadcast %231 : vector<1x256xf32> to vector<8x256xf32>
    %233 = arith.mulf %230, %232 : vector<8x256xf32>
    %cst_46 = arith.constant dense<0.000000e+00> : vector<8x256xf32>
    %234 = tpu.matmul %227, %233, %cst_46 {dimension_numbers = #tpu.dot_dimension_numbers<[1], [0], [0], [1], [0, 0, 1, 1], [], []>} : vector<8x8xf32>, vector<8x256xf32>, vector<8x256xf32> -> vector<8x256xf32>
    %235 = vector.extract_strided_slice %225 {offsets = [8, 0], sizes = [8, 8], strides = [1, 1]} : vector<72x8xf32> to vector<8x8xf32>
    %236 = vector.extract_strided_slice %224 {offsets = [0, 240], sizes = [8, 16], strides = [1, 1]} : vector<8x256xf32> to vector<8x16xf32>
    %237 = vector.extract_strided_slice %224 {offsets = [0, 0], sizes = [8, 240], strides = [1, 1]} : vector<8x256xf32> to vector<8x240xf32>
    %238 = tpu.concatenate %236, %237 in 1 : vector<8x16xf32>, vector<8x240xf32> -> vector<8x256xf32>
    %239 = vector.extract_strided_slice %0 {offsets = [1, 0], sizes = [1, 256], strides = [1, 1]} : vector<9x256xf32> to vector<1x256xf32>
    %240 = vector.broadcast %239 : vector<1x256xf32> to vector<8x256xf32>
    %241 = arith.mulf %238, %240 : vector<8x256xf32>
    %cst_47 = arith.constant dense<0.000000e+00> : vector<8x256xf32>
    %242 = tpu.matmul %235, %241, %cst_47 {dimension_numbers = #tpu.dot_dimension_numbers<[1], [0], [0], [1], [0, 0, 1, 1], [], []>} : vector<8x8xf32>, vector<8x256xf32>, vector<8x256xf32> -> vector<8x256xf32>
    %243 = arith.addf %234, %242 : vector<8x256xf32>
    %244 = vector.extract_strided_slice %225 {offsets = [16, 0], sizes = [8, 8], strides = [1, 1]} : vector<72x8xf32> to vector<8x8xf32>
    %245 = vector.extract_strided_slice %224 {offsets = [0, 241], sizes = [8, 15], strides = [1, 1]} : vector<8x256xf32> to vector<8x15xf32>
    %246 = vector.extract_strided_slice %224 {offsets = [0, 0], sizes = [8, 241], strides = [1, 1]} : vector<8x256xf32> to vector<8x241xf32>
    %247 = tpu.concatenate %245, %246 in 1 : vector<8x15xf32>, vector<8x241xf32> -> vector<8x256xf32>
    %248 = vector.extract_strided_slice %0 {offsets = [2, 0], sizes = [1, 256], strides = [1, 1]} : vector<9x256xf32> to vector<1x256xf32>
    %249 = vector.broadcast %248 : vector<1x256xf32> to vector<8x256xf32>
    %250 = arith.mulf %247, %249 : vector<8x256xf32>
    %cst_48 = arith.constant dense<0.000000e+00> : vector<8x256xf32>
    %251 = tpu.matmul %244, %250, %cst_48 {dimension_numbers = #tpu.dot_dimension_numbers<[1], [0], [0], [1], [0, 0, 1, 1], [], []>} : vector<8x8xf32>, vector<8x256xf32>, vector<8x256xf32> -> vector<8x256xf32>
    %252 = arith.addf %243, %251 : vector<8x256xf32>
    %253 = vector.extract_strided_slice %225 {offsets = [24, 0], sizes = [8, 8], strides = [1, 1]} : vector<72x8xf32> to vector<8x8xf32>
    %254 = vector.extract_strided_slice %224 {offsets = [0, 255], sizes = [8, 1], strides = [1, 1]} : vector<8x256xf32> to vector<8x1xf32>
    %255 = vector.extract_strided_slice %224 {offsets = [0, 0], sizes = [8, 255], strides = [1, 1]} : vector<8x256xf32> to vector<8x255xf32>
    %256 = tpu.concatenate %254, %255 in 1 : vector<8x1xf32>, vector<8x255xf32> -> vector<8x256xf32>
    %257 = vector.extract_strided_slice %0 {offsets = [3, 0], sizes = [1, 256], strides = [1, 1]} : vector<9x256xf32> to vector<1x256xf32>
    %258 = vector.broadcast %257 : vector<1x256xf32> to vector<8x256xf32>
    %259 = arith.mulf %256, %258 : vector<8x256xf32>
    %cst_49 = arith.constant dense<0.000000e+00> : vector<8x256xf32>
    %260 = tpu.matmul %253, %259, %cst_49 {dimension_numbers = #tpu.dot_dimension_numbers<[1], [0], [0], [1], [0, 0, 1, 1], [], []>} : vector<8x8xf32>, vector<8x256xf32>, vector<8x256xf32> -> vector<8x256xf32>
    %261 = arith.addf %252, %260 : vector<8x256xf32>
    %262 = vector.extract_strided_slice %225 {offsets = [32, 0], sizes = [8, 8], strides = [1, 1]} : vector<72x8xf32> to vector<8x8xf32>
    %cst_50 = arith.constant dense<0.000000e+00> : vector<8x256xf32>
    %263 = tpu.matmul %262, %224, %cst_50 {dimension_numbers = #tpu.dot_dimension_numbers<[1], [0], [0], [1], [0, 0, 1, 1], [], []>} : vector<8x8xf32>, vector<8x256xf32>, vector<8x256xf32> -> vector<8x256xf32>
    %264 = arith.addf %261, %263 : vector<8x256xf32>
    %265 = vector.extract_strided_slice %225 {offsets = [40, 0], sizes = [8, 8], strides = [1, 1]} : vector<72x8xf32> to vector<8x8xf32>
    %266 = vector.extract_strided_slice %224 {offsets = [0, 1], sizes = [8, 255], strides = [1, 1]} : vector<8x256xf32> to vector<8x255xf32>
    %267 = vector.extract_strided_slice %224 {offsets = [0, 0], sizes = [8, 1], strides = [1, 1]} : vector<8x256xf32> to vector<8x1xf32>
    %268 = tpu.concatenate %266, %267 in 1 : vector<8x255xf32>, vector<8x1xf32> -> vector<8x256xf32>
    %269 = vector.extract_strided_slice %0 {offsets = [5, 0], sizes = [1, 256], strides = [1, 1]} : vector<9x256xf32> to vector<1x256xf32>
    %270 = vector.broadcast %269 : vector<1x256xf32> to vector<8x256xf32>
    %271 = arith.mulf %268, %270 : vector<8x256xf32>
    %cst_51 = arith.constant dense<0.000000e+00> : vector<8x256xf32>
    %272 = tpu.matmul %265, %271, %cst_51 {dimension_numbers = #tpu.dot_dimension_numbers<[1], [0], [0], [1], [0, 0, 1, 1], [], []>} : vector<8x8xf32>, vector<8x256xf32>, vector<8x256xf32> -> vector<8x256xf32>
    %273 = arith.addf %264, %272 : vector<8x256xf32>
    %274 = vector.extract_strided_slice %225 {offsets = [48, 0], sizes = [8, 8], strides = [1, 1]} : vector<72x8xf32> to vector<8x8xf32>
    %275 = vector.extract_strided_slice %224 {offsets = [0, 15], sizes = [8, 241], strides = [1, 1]} : vector<8x256xf32> to vector<8x241xf32>
    %276 = vector.extract_strided_slice %224 {offsets = [0, 0], sizes = [8, 15], strides = [1, 1]} : vector<8x256xf32> to vector<8x15xf32>
    %277 = tpu.concatenate %275, %276 in 1 : vector<8x241xf32>, vector<8x15xf32> -> vector<8x256xf32>
    %278 = vector.extract_strided_slice %0 {offsets = [6, 0], sizes = [1, 256], strides = [1, 1]} : vector<9x256xf32> to vector<1x256xf32>
    %279 = vector.broadcast %278 : vector<1x256xf32> to vector<8x256xf32>
    %280 = arith.mulf %277, %279 : vector<8x256xf32>
    %cst_52 = arith.constant dense<0.000000e+00> : vector<8x256xf32>
    %281 = tpu.matmul %274, %280, %cst_52 {dimension_numbers = #tpu.dot_dimension_numbers<[1], [0], [0], [1], [0, 0, 1, 1], [], []>} : vector<8x8xf32>, vector<8x256xf32>, vector<8x256xf32> -> vector<8x256xf32>
    %282 = arith.addf %273, %281 : vector<8x256xf32>
    %283 = vector.extract_strided_slice %225 {offsets = [56, 0], sizes = [8, 8], strides = [1, 1]} : vector<72x8xf32> to vector<8x8xf32>
    %284 = vector.extract_strided_slice %224 {offsets = [0, 16], sizes = [8, 240], strides = [1, 1]} : vector<8x256xf32> to vector<8x240xf32>
    %285 = vector.extract_strided_slice %224 {offsets = [0, 0], sizes = [8, 16], strides = [1, 1]} : vector<8x256xf32> to vector<8x16xf32>
    %286 = tpu.concatenate %284, %285 in 1 : vector<8x240xf32>, vector<8x16xf32> -> vector<8x256xf32>
    %287 = vector.extract_strided_slice %0 {offsets = [7, 0], sizes = [1, 256], strides = [1, 1]} : vector<9x256xf32> to vector<1x256xf32>
    %288 = vector.broadcast %287 : vector<1x256xf32> to vector<8x256xf32>
    %289 = arith.mulf %286, %288 : vector<8x256xf32>
    %cst_53 = arith.constant dense<0.000000e+00> : vector<8x256xf32>
    %290 = tpu.matmul %283, %289, %cst_53 {dimension_numbers = #tpu.dot_dimension_numbers<[1], [0], [0], [1], [0, 0, 1, 1], [], []>} : vector<8x8xf32>, vector<8x256xf32>, vector<8x256xf32> -> vector<8x256xf32>
    %291 = arith.addf %282, %290 : vector<8x256xf32>
    %292 = vector.extract_strided_slice %225 {offsets = [64, 0], sizes = [8, 8], strides = [1, 1]} : vector<72x8xf32> to vector<8x8xf32>
    %293 = vector.extract_strided_slice %224 {offsets = [0, 17], sizes = [8, 239], strides = [1, 1]} : vector<8x256xf32> to vector<8x239xf32>
    %294 = vector.extract_strided_slice %224 {offsets = [0, 0], sizes = [8, 17], strides = [1, 1]} : vector<8x256xf32> to vector<8x17xf32>
    %295 = tpu.concatenate %293, %294 in 1 : vector<8x239xf32>, vector<8x17xf32> -> vector<8x256xf32>
    %296 = vector.extract_strided_slice %0 {offsets = [8, 0], sizes = [1, 256], strides = [1, 1]} : vector<9x256xf32> to vector<1x256xf32>
    %297 = vector.broadcast %296 : vector<1x256xf32> to vector<8x256xf32>
    %298 = arith.mulf %295, %297 : vector<8x256xf32>
    %cst_54 = arith.constant dense<0.000000e+00> : vector<8x256xf32>
    %299 = tpu.matmul %292, %298, %cst_54 {dimension_numbers = #tpu.dot_dimension_numbers<[1], [0], [0], [1], [0, 0, 1, 1], [], []>} : vector<8x8xf32>, vector<8x256xf32>, vector<8x256xf32> -> vector<8x256xf32>
    %300 = arith.addf %291, %299 : vector<8x256xf32>
    %301 = vector.broadcast %226 : vector<8x1xf32> to vector<8x256xf32>
    %302 = arith.addf %300, %301 : vector<8x256xf32>
    %303 = arith.addf %302, %224 : vector<8x256xf32>
    %cst_55 = arith.constant 0.000000e+00 : f32
    %304 = vector.broadcast %cst_55 : f32 to vector<8x256xf32>
    %305 = arith.maximumf %303, %304 : vector<8x256xf32>
    %c0_56 = arith.constant 0 : index
    %c0_57 = arith.constant 0 : index
    %306 = vector.load %arg2[%c0_56, %c0_57] : memref<256x256xf32, #tpu.memory_space<vmem>>, vector<256x256xf32>
    %c0_58 = arith.constant 0 : index
    %c0_59 = arith.constant 0 : index
    %307 = vector.load %arg13[%c0_58, %c0_59] : memref<16x8xf32, #tpu.memory_space<vmem>>, vector<16x8xf32>
    %cst_60 = arith.constant dense<0.000000e+00> : vector<16x256xf32>
    %308 = tpu.matmul %307, %305, %cst_60 {dimension_numbers = #tpu.dot_dimension_numbers<[1], [0], [0], [1], [0, 0, 1, 1], [], []>} : vector<16x8xf32>, vector<8x256xf32>, vector<16x256xf32> -> vector<16x256xf32>
    %cst_61 = arith.constant dense<0.000000e+00> : vector<16x256xf32>
    %309 = tpu.matmul %308, %306, %cst_61 {dimension_numbers = #tpu.dot_dimension_numbers<[1], [0], [0], [1], [0, 0, 1, 1], [], []>} : vector<16x256xf32>, vector<256x256xf32>, vector<16x256xf32> -> vector<16x256xf32>
    %c0_62 = arith.constant 0 : index
    %c0_63 = arith.constant 0 : index
    %310 = vector.load %arg14[%c0_62, %c0_63] : memref<16x1xf32, #tpu.memory_space<vmem>>, vector<16x1xf32>
    %311 = vector.broadcast %310 : vector<16x1xf32> to vector<16x256xf32>
    %312 = arith.addf %309, %311 : vector<16x256xf32>
    %c0_64 = arith.constant 0 : index
    %c0_65 = arith.constant 0 : index
    %313 = vector.load %arg15[%c0_64, %c0_65] : memref<16x16xf32, #tpu.memory_space<vmem>>, vector<16x16xf32>
    %cst_66 = arith.constant dense<0.000000e+00> : vector<16x256xf32>
    %314 = tpu.matmul %313, %312, %cst_66 {dimension_numbers = #tpu.dot_dimension_numbers<[1], [0], [0], [1], [0, 0, 1, 1], [], []>} : vector<16x16xf32>, vector<16x256xf32>, vector<16x256xf32> -> vector<16x256xf32>
    %cst_67 = arith.constant dense<0.000000e+00> : vector<16x256xf32>
    %315 = tpu.matmul %314, %306, %cst_67 {dimension_numbers = #tpu.dot_dimension_numbers<[1], [0], [0], [1], [0, 0, 1, 1], [], []>} : vector<16x256xf32>, vector<256x256xf32>, vector<16x256xf32> -> vector<16x256xf32>
    %c0_68 = arith.constant 0 : index
    %c0_69 = arith.constant 0 : index
    %316 = vector.load %arg16[%c0_68, %c0_69] : memref<16x1xf32, #tpu.memory_space<vmem>>, vector<16x1xf32>
    %317 = vector.broadcast %316 : vector<16x1xf32> to vector<16x256xf32>
    %318 = arith.addf %315, %317 : vector<16x256xf32>
    %c0_70 = arith.constant 0 : index
    %c0_71 = arith.constant 0 : index
    %319 = vector.load %arg17[%c0_70, %c0_71] : memref<8x16xf32, #tpu.memory_space<vmem>>, vector<8x16xf32>
    %cst_72 = arith.constant dense<0.000000e+00> : vector<8x256xf32>
    %320 = tpu.matmul %319, %318, %cst_72 {dimension_numbers = #tpu.dot_dimension_numbers<[1], [0], [0], [1], [0, 0, 1, 1], [], []>} : vector<8x16xf32>, vector<16x256xf32>, vector<8x256xf32> -> vector<8x256xf32>
    %cst_73 = arith.constant dense<0.000000e+00> : vector<8x256xf32>
    %321 = tpu.matmul %320, %306, %cst_73 {dimension_numbers = #tpu.dot_dimension_numbers<[1], [0], [0], [1], [0, 0, 1, 1], [], []>} : vector<8x256xf32>, vector<256x256xf32>, vector<8x256xf32> -> vector<8x256xf32>
    %c0_74 = arith.constant 0 : index
    %c0_75 = arith.constant 0 : index
    %322 = vector.load %arg18[%c0_74, %c0_75] : memref<8x1xf32, #tpu.memory_space<vmem>>, vector<8x1xf32>
    %323 = vector.broadcast %322 : vector<8x1xf32> to vector<8x256xf32>
    %324 = arith.addf %321, %323 : vector<8x256xf32>
    %cst_76 = arith.constant 0.000000e+00 : f32
    %325 = vector.broadcast %cst_76 : f32 to vector<8x256xf32>
    %326 = arith.maximumf %324, %325 : vector<8x256xf32>
    %327 = arith.addf %326, %305 : vector<8x256xf32>
    %c0_77 = arith.constant 0 : index
    %c0_78 = arith.constant 0 : index
    %328 = vector.load %arg19[%c0_77, %c0_78] : memref<72x8xf32, #tpu.memory_space<vmem>>, vector<72x8xf32>
    %c0_79 = arith.constant 0 : index
    %c0_80 = arith.constant 0 : index
    %329 = vector.load %arg20[%c0_79, %c0_80] : memref<8x1xf32, #tpu.memory_space<vmem>>, vector<8x1xf32>
    %330 = vector.extract_strided_slice %328 {offsets = [0, 0], sizes = [8, 8], strides = [1, 1]} : vector<72x8xf32> to vector<8x8xf32>
    %331 = vector.extract_strided_slice %327 {offsets = [0, 239], sizes = [8, 17], strides = [1, 1]} : vector<8x256xf32> to vector<8x17xf32>
    %332 = vector.extract_strided_slice %327 {offsets = [0, 0], sizes = [8, 239], strides = [1, 1]} : vector<8x256xf32> to vector<8x239xf32>
    %333 = tpu.concatenate %331, %332 in 1 : vector<8x17xf32>, vector<8x239xf32> -> vector<8x256xf32>
    %334 = vector.extract_strided_slice %0 {offsets = [0, 0], sizes = [1, 256], strides = [1, 1]} : vector<9x256xf32> to vector<1x256xf32>
    %335 = vector.broadcast %334 : vector<1x256xf32> to vector<8x256xf32>
    %336 = arith.mulf %333, %335 : vector<8x256xf32>
    %cst_81 = arith.constant dense<0.000000e+00> : vector<8x256xf32>
    %337 = tpu.matmul %330, %336, %cst_81 {dimension_numbers = #tpu.dot_dimension_numbers<[1], [0], [0], [1], [0, 0, 1, 1], [], []>} : vector<8x8xf32>, vector<8x256xf32>, vector<8x256xf32> -> vector<8x256xf32>
    %338 = vector.extract_strided_slice %328 {offsets = [8, 0], sizes = [8, 8], strides = [1, 1]} : vector<72x8xf32> to vector<8x8xf32>
    %339 = vector.extract_strided_slice %327 {offsets = [0, 240], sizes = [8, 16], strides = [1, 1]} : vector<8x256xf32> to vector<8x16xf32>
    %340 = vector.extract_strided_slice %327 {offsets = [0, 0], sizes = [8, 240], strides = [1, 1]} : vector<8x256xf32> to vector<8x240xf32>
    %341 = tpu.concatenate %339, %340 in 1 : vector<8x16xf32>, vector<8x240xf32> -> vector<8x256xf32>
    %342 = vector.extract_strided_slice %0 {offsets = [1, 0], sizes = [1, 256], strides = [1, 1]} : vector<9x256xf32> to vector<1x256xf32>
    %343 = vector.broadcast %342 : vector<1x256xf32> to vector<8x256xf32>
    %344 = arith.mulf %341, %343 : vector<8x256xf32>
    %cst_82 = arith.constant dense<0.000000e+00> : vector<8x256xf32>
    %345 = tpu.matmul %338, %344, %cst_82 {dimension_numbers = #tpu.dot_dimension_numbers<[1], [0], [0], [1], [0, 0, 1, 1], [], []>} : vector<8x8xf32>, vector<8x256xf32>, vector<8x256xf32> -> vector<8x256xf32>
    %346 = arith.addf %337, %345 : vector<8x256xf32>
    %347 = vector.extract_strided_slice %328 {offsets = [16, 0], sizes = [8, 8], strides = [1, 1]} : vector<72x8xf32> to vector<8x8xf32>
    %348 = vector.extract_strided_slice %327 {offsets = [0, 241], sizes = [8, 15], strides = [1, 1]} : vector<8x256xf32> to vector<8x15xf32>
    %349 = vector.extract_strided_slice %327 {offsets = [0, 0], sizes = [8, 241], strides = [1, 1]} : vector<8x256xf32> to vector<8x241xf32>
    %350 = tpu.concatenate %348, %349 in 1 : vector<8x15xf32>, vector<8x241xf32> -> vector<8x256xf32>
    %351 = vector.extract_strided_slice %0 {offsets = [2, 0], sizes = [1, 256], strides = [1, 1]} : vector<9x256xf32> to vector<1x256xf32>
    %352 = vector.broadcast %351 : vector<1x256xf32> to vector<8x256xf32>
    %353 = arith.mulf %350, %352 : vector<8x256xf32>
    %cst_83 = arith.constant dense<0.000000e+00> : vector<8x256xf32>
    %354 = tpu.matmul %347, %353, %cst_83 {dimension_numbers = #tpu.dot_dimension_numbers<[1], [0], [0], [1], [0, 0, 1, 1], [], []>} : vector<8x8xf32>, vector<8x256xf32>, vector<8x256xf32> -> vector<8x256xf32>
    %355 = arith.addf %346, %354 : vector<8x256xf32>
    %356 = vector.extract_strided_slice %328 {offsets = [24, 0], sizes = [8, 8], strides = [1, 1]} : vector<72x8xf32> to vector<8x8xf32>
    %357 = vector.extract_strided_slice %327 {offsets = [0, 255], sizes = [8, 1], strides = [1, 1]} : vector<8x256xf32> to vector<8x1xf32>
    %358 = vector.extract_strided_slice %327 {offsets = [0, 0], sizes = [8, 255], strides = [1, 1]} : vector<8x256xf32> to vector<8x255xf32>
    %359 = tpu.concatenate %357, %358 in 1 : vector<8x1xf32>, vector<8x255xf32> -> vector<8x256xf32>
    %360 = vector.extract_strided_slice %0 {offsets = [3, 0], sizes = [1, 256], strides = [1, 1]} : vector<9x256xf32> to vector<1x256xf32>
    %361 = vector.broadcast %360 : vector<1x256xf32> to vector<8x256xf32>
    %362 = arith.mulf %359, %361 : vector<8x256xf32>
    %cst_84 = arith.constant dense<0.000000e+00> : vector<8x256xf32>
    %363 = tpu.matmul %356, %362, %cst_84 {dimension_numbers = #tpu.dot_dimension_numbers<[1], [0], [0], [1], [0, 0, 1, 1], [], []>} : vector<8x8xf32>, vector<8x256xf32>, vector<8x256xf32> -> vector<8x256xf32>
    %364 = arith.addf %355, %363 : vector<8x256xf32>
    %365 = vector.extract_strided_slice %328 {offsets = [32, 0], sizes = [8, 8], strides = [1, 1]} : vector<72x8xf32> to vector<8x8xf32>
    %cst_85 = arith.constant dense<0.000000e+00> : vector<8x256xf32>
    %366 = tpu.matmul %365, %327, %cst_85 {dimension_numbers = #tpu.dot_dimension_numbers<[1], [0], [0], [1], [0, 0, 1, 1], [], []>} : vector<8x8xf32>, vector<8x256xf32>, vector<8x256xf32> -> vector<8x256xf32>
    %367 = arith.addf %364, %366 : vector<8x256xf32>
    %368 = vector.extract_strided_slice %328 {offsets = [40, 0], sizes = [8, 8], strides = [1, 1]} : vector<72x8xf32> to vector<8x8xf32>
    %369 = vector.extract_strided_slice %327 {offsets = [0, 1], sizes = [8, 255], strides = [1, 1]} : vector<8x256xf32> to vector<8x255xf32>
    %370 = vector.extract_strided_slice %327 {offsets = [0, 0], sizes = [8, 1], strides = [1, 1]} : vector<8x256xf32> to vector<8x1xf32>
    %371 = tpu.concatenate %369, %370 in 1 : vector<8x255xf32>, vector<8x1xf32> -> vector<8x256xf32>
    %372 = vector.extract_strided_slice %0 {offsets = [5, 0], sizes = [1, 256], strides = [1, 1]} : vector<9x256xf32> to vector<1x256xf32>
    %373 = vector.broadcast %372 : vector<1x256xf32> to vector<8x256xf32>
    %374 = arith.mulf %371, %373 : vector<8x256xf32>
    %cst_86 = arith.constant dense<0.000000e+00> : vector<8x256xf32>
    %375 = tpu.matmul %368, %374, %cst_86 {dimension_numbers = #tpu.dot_dimension_numbers<[1], [0], [0], [1], [0, 0, 1, 1], [], []>} : vector<8x8xf32>, vector<8x256xf32>, vector<8x256xf32> -> vector<8x256xf32>
    %376 = arith.addf %367, %375 : vector<8x256xf32>
    %377 = vector.extract_strided_slice %328 {offsets = [48, 0], sizes = [8, 8], strides = [1, 1]} : vector<72x8xf32> to vector<8x8xf32>
    %378 = vector.extract_strided_slice %327 {offsets = [0, 15], sizes = [8, 241], strides = [1, 1]} : vector<8x256xf32> to vector<8x241xf32>
    %379 = vector.extract_strided_slice %327 {offsets = [0, 0], sizes = [8, 15], strides = [1, 1]} : vector<8x256xf32> to vector<8x15xf32>
    %380 = tpu.concatenate %378, %379 in 1 : vector<8x241xf32>, vector<8x15xf32> -> vector<8x256xf32>
    %381 = vector.extract_strided_slice %0 {offsets = [6, 0], sizes = [1, 256], strides = [1, 1]} : vector<9x256xf32> to vector<1x256xf32>
    %382 = vector.broadcast %381 : vector<1x256xf32> to vector<8x256xf32>
    %383 = arith.mulf %380, %382 : vector<8x256xf32>
    %cst_87 = arith.constant dense<0.000000e+00> : vector<8x256xf32>
    %384 = tpu.matmul %377, %383, %cst_87 {dimension_numbers = #tpu.dot_dimension_numbers<[1], [0], [0], [1], [0, 0, 1, 1], [], []>} : vector<8x8xf32>, vector<8x256xf32>, vector<8x256xf32> -> vector<8x256xf32>
    %385 = arith.addf %376, %384 : vector<8x256xf32>
    %386 = vector.extract_strided_slice %328 {offsets = [56, 0], sizes = [8, 8], strides = [1, 1]} : vector<72x8xf32> to vector<8x8xf32>
    %387 = vector.extract_strided_slice %327 {offsets = [0, 16], sizes = [8, 240], strides = [1, 1]} : vector<8x256xf32> to vector<8x240xf32>
    %388 = vector.extract_strided_slice %327 {offsets = [0, 0], sizes = [8, 16], strides = [1, 1]} : vector<8x256xf32> to vector<8x16xf32>
    %389 = tpu.concatenate %387, %388 in 1 : vector<8x240xf32>, vector<8x16xf32> -> vector<8x256xf32>
    %390 = vector.extract_strided_slice %0 {offsets = [7, 0], sizes = [1, 256], strides = [1, 1]} : vector<9x256xf32> to vector<1x256xf32>
    %391 = vector.broadcast %390 : vector<1x256xf32> to vector<8x256xf32>
    %392 = arith.mulf %389, %391 : vector<8x256xf32>
    %cst_88 = arith.constant dense<0.000000e+00> : vector<8x256xf32>
    %393 = tpu.matmul %386, %392, %cst_88 {dimension_numbers = #tpu.dot_dimension_numbers<[1], [0], [0], [1], [0, 0, 1, 1], [], []>} : vector<8x8xf32>, vector<8x256xf32>, vector<8x256xf32> -> vector<8x256xf32>
    %394 = arith.addf %385, %393 : vector<8x256xf32>
    %395 = vector.extract_strided_slice %328 {offsets = [64, 0], sizes = [8, 8], strides = [1, 1]} : vector<72x8xf32> to vector<8x8xf32>
    %396 = vector.extract_strided_slice %327 {offsets = [0, 17], sizes = [8, 239], strides = [1, 1]} : vector<8x256xf32> to vector<8x239xf32>
    %397 = vector.extract_strided_slice %327 {offsets = [0, 0], sizes = [8, 17], strides = [1, 1]} : vector<8x256xf32> to vector<8x17xf32>
    %398 = tpu.concatenate %396, %397 in 1 : vector<8x239xf32>, vector<8x17xf32> -> vector<8x256xf32>
    %399 = vector.extract_strided_slice %0 {offsets = [8, 0], sizes = [1, 256], strides = [1, 1]} : vector<9x256xf32> to vector<1x256xf32>
    %400 = vector.broadcast %399 : vector<1x256xf32> to vector<8x256xf32>
    %401 = arith.mulf %398, %400 : vector<8x256xf32>
    %cst_89 = arith.constant dense<0.000000e+00> : vector<8x256xf32>
    %402 = tpu.matmul %395, %401, %cst_89 {dimension_numbers = #tpu.dot_dimension_numbers<[1], [0], [0], [1], [0, 0, 1, 1], [], []>} : vector<8x8xf32>, vector<8x256xf32>, vector<8x256xf32> -> vector<8x256xf32>
    %403 = arith.addf %394, %402 : vector<8x256xf32>
    %404 = vector.broadcast %329 : vector<8x1xf32> to vector<8x256xf32>
    %405 = arith.addf %403, %404 : vector<8x256xf32>
    %406 = arith.addf %327, %405 : vector<8x256xf32>
    %c0_90 = arith.constant 0 : index
    %c0_91 = arith.constant 0 : index
    %407 = vector.load %arg21[%c0_90, %c0_91] : memref<72x8xf32, #tpu.memory_space<vmem>>, vector<72x8xf32>
    %c0_92 = arith.constant 0 : index
    %c0_93 = arith.constant 0 : index
    %408 = vector.load %arg22[%c0_92, %c0_93] : memref<8x1xf32, #tpu.memory_space<vmem>>, vector<8x1xf32>
    %409 = vector.extract_strided_slice %407 {offsets = [0, 0], sizes = [8, 8], strides = [1, 1]} : vector<72x8xf32> to vector<8x8xf32>
    %410 = vector.extract_strided_slice %405 {offsets = [0, 239], sizes = [8, 17], strides = [1, 1]} : vector<8x256xf32> to vector<8x17xf32>
    %411 = vector.extract_strided_slice %405 {offsets = [0, 0], sizes = [8, 239], strides = [1, 1]} : vector<8x256xf32> to vector<8x239xf32>
    %412 = tpu.concatenate %410, %411 in 1 : vector<8x17xf32>, vector<8x239xf32> -> vector<8x256xf32>
    %413 = vector.extract_strided_slice %0 {offsets = [0, 0], sizes = [1, 256], strides = [1, 1]} : vector<9x256xf32> to vector<1x256xf32>
    %414 = vector.broadcast %413 : vector<1x256xf32> to vector<8x256xf32>
    %415 = arith.mulf %412, %414 : vector<8x256xf32>
    %cst_94 = arith.constant dense<0.000000e+00> : vector<8x256xf32>
    %416 = tpu.matmul %409, %415, %cst_94 {dimension_numbers = #tpu.dot_dimension_numbers<[1], [0], [0], [1], [0, 0, 1, 1], [], []>} : vector<8x8xf32>, vector<8x256xf32>, vector<8x256xf32> -> vector<8x256xf32>
    %417 = vector.extract_strided_slice %407 {offsets = [8, 0], sizes = [8, 8], strides = [1, 1]} : vector<72x8xf32> to vector<8x8xf32>
    %418 = vector.extract_strided_slice %405 {offsets = [0, 240], sizes = [8, 16], strides = [1, 1]} : vector<8x256xf32> to vector<8x16xf32>
    %419 = vector.extract_strided_slice %405 {offsets = [0, 0], sizes = [8, 240], strides = [1, 1]} : vector<8x256xf32> to vector<8x240xf32>
    %420 = tpu.concatenate %418, %419 in 1 : vector<8x16xf32>, vector<8x240xf32> -> vector<8x256xf32>
    %421 = vector.extract_strided_slice %0 {offsets = [1, 0], sizes = [1, 256], strides = [1, 1]} : vector<9x256xf32> to vector<1x256xf32>
    %422 = vector.broadcast %421 : vector<1x256xf32> to vector<8x256xf32>
    %423 = arith.mulf %420, %422 : vector<8x256xf32>
    %cst_95 = arith.constant dense<0.000000e+00> : vector<8x256xf32>
    %424 = tpu.matmul %417, %423, %cst_95 {dimension_numbers = #tpu.dot_dimension_numbers<[1], [0], [0], [1], [0, 0, 1, 1], [], []>} : vector<8x8xf32>, vector<8x256xf32>, vector<8x256xf32> -> vector<8x256xf32>
    %425 = arith.addf %416, %424 : vector<8x256xf32>
    %426 = vector.extract_strided_slice %407 {offsets = [16, 0], sizes = [8, 8], strides = [1, 1]} : vector<72x8xf32> to vector<8x8xf32>
    %427 = vector.extract_strided_slice %405 {offsets = [0, 241], sizes = [8, 15], strides = [1, 1]} : vector<8x256xf32> to vector<8x15xf32>
    %428 = vector.extract_strided_slice %405 {offsets = [0, 0], sizes = [8, 241], strides = [1, 1]} : vector<8x256xf32> to vector<8x241xf32>
    %429 = tpu.concatenate %427, %428 in 1 : vector<8x15xf32>, vector<8x241xf32> -> vector<8x256xf32>
    %430 = vector.extract_strided_slice %0 {offsets = [2, 0], sizes = [1, 256], strides = [1, 1]} : vector<9x256xf32> to vector<1x256xf32>
    %431 = vector.broadcast %430 : vector<1x256xf32> to vector<8x256xf32>
    %432 = arith.mulf %429, %431 : vector<8x256xf32>
    %cst_96 = arith.constant dense<0.000000e+00> : vector<8x256xf32>
    %433 = tpu.matmul %426, %432, %cst_96 {dimension_numbers = #tpu.dot_dimension_numbers<[1], [0], [0], [1], [0, 0, 1, 1], [], []>} : vector<8x8xf32>, vector<8x256xf32>, vector<8x256xf32> -> vector<8x256xf32>
    %434 = arith.addf %425, %433 : vector<8x256xf32>
    %435 = vector.extract_strided_slice %407 {offsets = [24, 0], sizes = [8, 8], strides = [1, 1]} : vector<72x8xf32> to vector<8x8xf32>
    %436 = vector.extract_strided_slice %405 {offsets = [0, 255], sizes = [8, 1], strides = [1, 1]} : vector<8x256xf32> to vector<8x1xf32>
    %437 = vector.extract_strided_slice %405 {offsets = [0, 0], sizes = [8, 255], strides = [1, 1]} : vector<8x256xf32> to vector<8x255xf32>
    %438 = tpu.concatenate %436, %437 in 1 : vector<8x1xf32>, vector<8x255xf32> -> vector<8x256xf32>
    %439 = vector.extract_strided_slice %0 {offsets = [3, 0], sizes = [1, 256], strides = [1, 1]} : vector<9x256xf32> to vector<1x256xf32>
    %440 = vector.broadcast %439 : vector<1x256xf32> to vector<8x256xf32>
    %441 = arith.mulf %438, %440 : vector<8x256xf32>
    %cst_97 = arith.constant dense<0.000000e+00> : vector<8x256xf32>
    %442 = tpu.matmul %435, %441, %cst_97 {dimension_numbers = #tpu.dot_dimension_numbers<[1], [0], [0], [1], [0, 0, 1, 1], [], []>} : vector<8x8xf32>, vector<8x256xf32>, vector<8x256xf32> -> vector<8x256xf32>
    %443 = arith.addf %434, %442 : vector<8x256xf32>
    %444 = vector.extract_strided_slice %407 {offsets = [32, 0], sizes = [8, 8], strides = [1, 1]} : vector<72x8xf32> to vector<8x8xf32>
    %cst_98 = arith.constant dense<0.000000e+00> : vector<8x256xf32>
    %445 = tpu.matmul %444, %405, %cst_98 {dimension_numbers = #tpu.dot_dimension_numbers<[1], [0], [0], [1], [0, 0, 1, 1], [], []>} : vector<8x8xf32>, vector<8x256xf32>, vector<8x256xf32> -> vector<8x256xf32>
    %446 = arith.addf %443, %445 : vector<8x256xf32>
    %447 = vector.extract_strided_slice %407 {offsets = [40, 0], sizes = [8, 8], strides = [1, 1]} : vector<72x8xf32> to vector<8x8xf32>
    %448 = vector.extract_strided_slice %405 {offsets = [0, 1], sizes = [8, 255], strides = [1, 1]} : vector<8x256xf32> to vector<8x255xf32>
    %449 = vector.extract_strided_slice %405 {offsets = [0, 0], sizes = [8, 1], strides = [1, 1]} : vector<8x256xf32> to vector<8x1xf32>
    %450 = tpu.concatenate %448, %449 in 1 : vector<8x255xf32>, vector<8x1xf32> -> vector<8x256xf32>
    %451 = vector.extract_strided_slice %0 {offsets = [5, 0], sizes = [1, 256], strides = [1, 1]} : vector<9x256xf32> to vector<1x256xf32>
    %452 = vector.broadcast %451 : vector<1x256xf32> to vector<8x256xf32>
    %453 = arith.mulf %450, %452 : vector<8x256xf32>
    %cst_99 = arith.constant dense<0.000000e+00> : vector<8x256xf32>
    %454 = tpu.matmul %447, %453, %cst_99 {dimension_numbers = #tpu.dot_dimension_numbers<[1], [0], [0], [1], [0, 0, 1, 1], [], []>} : vector<8x8xf32>, vector<8x256xf32>, vector<8x256xf32> -> vector<8x256xf32>
    %455 = arith.addf %446, %454 : vector<8x256xf32>
    %456 = vector.extract_strided_slice %407 {offsets = [48, 0], sizes = [8, 8], strides = [1, 1]} : vector<72x8xf32> to vector<8x8xf32>
    %457 = vector.extract_strided_slice %405 {offsets = [0, 15], sizes = [8, 241], strides = [1, 1]} : vector<8x256xf32> to vector<8x241xf32>
    %458 = vector.extract_strided_slice %405 {offsets = [0, 0], sizes = [8, 15], strides = [1, 1]} : vector<8x256xf32> to vector<8x15xf32>
    %459 = tpu.concatenate %457, %458 in 1 : vector<8x241xf32>, vector<8x15xf32> -> vector<8x256xf32>
    %460 = vector.extract_strided_slice %0 {offsets = [6, 0], sizes = [1, 256], strides = [1, 1]} : vector<9x256xf32> to vector<1x256xf32>
    %461 = vector.broadcast %460 : vector<1x256xf32> to vector<8x256xf32>
    %462 = arith.mulf %459, %461 : vector<8x256xf32>
    %cst_100 = arith.constant dense<0.000000e+00> : vector<8x256xf32>
    %463 = tpu.matmul %456, %462, %cst_100 {dimension_numbers = #tpu.dot_dimension_numbers<[1], [0], [0], [1], [0, 0, 1, 1], [], []>} : vector<8x8xf32>, vector<8x256xf32>, vector<8x256xf32> -> vector<8x256xf32>
    %464 = arith.addf %455, %463 : vector<8x256xf32>
    %465 = vector.extract_strided_slice %407 {offsets = [56, 0], sizes = [8, 8], strides = [1, 1]} : vector<72x8xf32> to vector<8x8xf32>
    %466 = vector.extract_strided_slice %405 {offsets = [0, 16], sizes = [8, 240], strides = [1, 1]} : vector<8x256xf32> to vector<8x240xf32>
    %467 = vector.extract_strided_slice %405 {offsets = [0, 0], sizes = [8, 16], strides = [1, 1]} : vector<8x256xf32> to vector<8x16xf32>
    %468 = tpu.concatenate %466, %467 in 1 : vector<8x240xf32>, vector<8x16xf32> -> vector<8x256xf32>
    %469 = vector.extract_strided_slice %0 {offsets = [7, 0], sizes = [1, 256], strides = [1, 1]} : vector<9x256xf32> to vector<1x256xf32>
    %470 = vector.broadcast %469 : vector<1x256xf32> to vector<8x256xf32>
    %471 = arith.mulf %468, %470 : vector<8x256xf32>
    %cst_101 = arith.constant dense<0.000000e+00> : vector<8x256xf32>
    %472 = tpu.matmul %465, %471, %cst_101 {dimension_numbers = #tpu.dot_dimension_numbers<[1], [0], [0], [1], [0, 0, 1, 1], [], []>} : vector<8x8xf32>, vector<8x256xf32>, vector<8x256xf32> -> vector<8x256xf32>
    %473 = arith.addf %464, %472 : vector<8x256xf32>
    %474 = vector.extract_strided_slice %407 {offsets = [64, 0], sizes = [8, 8], strides = [1, 1]} : vector<72x8xf32> to vector<8x8xf32>
    %475 = vector.extract_strided_slice %405 {offsets = [0, 17], sizes = [8, 239], strides = [1, 1]} : vector<8x256xf32> to vector<8x239xf32>
    %476 = vector.extract_strided_slice %405 {offsets = [0, 0], sizes = [8, 17], strides = [1, 1]} : vector<8x256xf32> to vector<8x17xf32>
    %477 = tpu.concatenate %475, %476 in 1 : vector<8x239xf32>, vector<8x17xf32> -> vector<8x256xf32>
    %478 = vector.extract_strided_slice %0 {offsets = [8, 0], sizes = [1, 256], strides = [1, 1]} : vector<9x256xf32> to vector<1x256xf32>
    %479 = vector.broadcast %478 : vector<1x256xf32> to vector<8x256xf32>
    %480 = arith.mulf %477, %479 : vector<8x256xf32>
    %cst_102 = arith.constant dense<0.000000e+00> : vector<8x256xf32>
    %481 = tpu.matmul %474, %480, %cst_102 {dimension_numbers = #tpu.dot_dimension_numbers<[1], [0], [0], [1], [0, 0, 1, 1], [], []>} : vector<8x8xf32>, vector<8x256xf32>, vector<8x256xf32> -> vector<8x256xf32>
    %482 = arith.addf %473, %481 : vector<8x256xf32>
    %483 = vector.broadcast %408 : vector<8x1xf32> to vector<8x256xf32>
    %484 = arith.addf %482, %483 : vector<8x256xf32>
    %485 = arith.addf %406, %484 : vector<8x256xf32>
    %486 = math.tanh %485 : vector<8x256xf32>
    %c0_103 = arith.constant 0 : index
    %c0_104 = arith.constant 0 : index
    %487 = vector.load %arg23[%c0_103, %c0_104] : memref<8x256xf32, #tpu.memory_space<vmem>>, vector<8x256xf32>
    tpu.vector_store %arg23[%c0_103, %c0_104], %486 {strides = array<i32>} : memref<8x256xf32, #tpu.memory_space<vmem>>, vector<8x256xf32>,
    return
  }
}

</mosaic_0001>

<llo_original>
// kernel: atgcn_forward.1
$region0: #{atgcn_forward.1}
  #allocation0 [shape = 'u32[]', space=smem, size = 0x4, offset = 0x4, fixed_abs, tag = 'smem constant byte address 0x4 - core index']
  #allocation1 [shape = 'u32[144,128]{1,0:T(1,128)}', space=vmem, size = 0x12000, scoped, tag = 'internal scratch']
  %s0 = inlined_call_operand.vmem [shape: f32[4,256], index: 0, kind: input, shape index: {}]
  %s1 = inlined_call_operand.vmem [shape: f32[9,256], index: 1, kind: input, shape index: {}]
  %s2 = inlined_call_operand.vmem [shape: f32[256,256], index: 2, kind: input, shape index: {}]
  %s3 = inlined_call_operand.vmem [shape: f32[4,1], index: 3, kind: input, shape index: {}]
  %s4 = inlined_call_operand.vmem [shape: f32[4,1], index: 4, kind: input, shape index: {}]
  %s5 = inlined_call_operand.vmem [shape: f32[4,8], index: 5, kind: input, shape index: {}]
  %s6 = inlined_call_operand.vmem [shape: f32[4,1], index: 6, kind: input, shape index: {}]
  %s7 = inlined_call_operand.vmem [shape: f32[4,4], index: 7, kind: input, shape index: {}]
  %s8 = inlined_call_operand.vmem [shape: f32[4,1], index: 8, kind: input, shape index: {}]
  %s9 = inlined_call_operand.vmem [shape: f32[72,4], index: 9, kind: input, shape index: {}]
  %s10 = inlined_call_operand.vmem [shape: f32[8,1], index: 10, kind: input, shape index: {}]
  %s11 = inlined_call_operand.vmem [shape: f32[72,8], index: 11, kind: input, shape index: {}]
  %s12 = inlined_call_operand.vmem [shape: f32[8,1], index: 12, kind: input, shape index: {}]
  %s13 = inlined_call_operand.vmem [shape: f32[16,8], index: 13, kind: input, shape index: {}]
  %s14 = inlined_call_operand.vmem [shape: f32[16,1], index: 14, kind: input, shape index: {}]
  %s15 = inlined_call_operand.vmem [shape: f32[16,16], index: 15, kind: input, shape index: {}]
  %s16 = inlined_call_operand.vmem [shape: f32[16,1], index: 16, kind: input, shape index: {}]
  %s17 = inlined_call_operand.vmem [shape: f32[8,16], index: 17, kind: input, shape index: {}]
  %s18 = inlined_call_operand.vmem [shape: f32[8,1], index: 18, kind: input, shape index: {}]
  %s19 = inlined_call_operand.vmem [shape: f32[72,8], index: 19, kind: input, shape index: {}]
  %s20 = inlined_call_operand.vmem [shape: f32[8,1], index: 20, kind: input, shape index: {}]
  %s21 = inlined_call_operand.vmem [shape: f32[72,8], index: 21, kind: input, shape index: {}]
  %s22 = inlined_call_operand.vmem [shape: f32[8,1], index: 22, kind: input, shape index: {}]
  %s23 = inlined_call_operand.vmem [shape: f32[8,256], index: 23, kind: output, shape index: {}]
  %s24 = sld [smem:[#allocation0]]
  $region102: #{atgcn_forward.1} parent=0
    _
  %s26 = ssub.s32 1, %s24
  %s27 = scalar_select 0, %s26, %s24
  // Predicated region
  $region2: #{atgcn_forward.1} parent=0 // pred_check
    _
  $region3: #{atgcn_forward.1} parent=0 // pred_check_branch
    %29 = sbr.rel (0) target = $region5
  $region4: #{atgcn_forward.1} parent=0 // pred_region
    _
  $region5: #{atgcn_forward.1} parent=0 // pred_fallthru
    _
  // Predicated region
  $region6: #{atgcn_forward.1} parent=0 // pred_check
    _
  $region7: #{atgcn_forward.1} parent=0 // pred_check_branch
    %31 = sbr.rel (0) target = $region9
  $region8: #{atgcn_forward.1} parent=0 // pred_region
    _
  $region9: #{atgcn_forward.1} parent=0 // pred_fallthru
    _
  // Predicated region
  $region10: #{atgcn_forward.1} parent=0 // pred_check
    _
  $region11: #{atgcn_forward.1} parent=0 // pred_check_branch
    %33 = sbr.rel (0) target = $region13
  $region12: #{atgcn_forward.1} parent=0 // pred_region
    _
  $region13: #{atgcn_forward.1} parent=0 // pred_fallthru
    _
  // Predicated region
  $region14: #{atgcn_forward.1} parent=0 // pred_check
    _
  $region15: #{atgcn_forward.1} parent=0 // pred_check_branch
    %35 = sbr.rel (0) target = $region17
  $region16: #{atgcn_forward.1} parent=0 // pred_region
    _
  $region17: #{atgcn_forward.1} parent=0 // pred_fallthru
    _
  // Predicated region
  $region18: #{atgcn_forward.1} parent=0 // pred_check
    _
  $region19: #{atgcn_forward.1} parent=0 // pred_check_branch
    %37 = sbr.rel (0) target = $region21
  $region20: #{atgcn_forward.1} parent=0 // pred_region
    _
  $region21: #{atgcn_forward.1} parent=0 // pred_fallthru
    _
  // Predicated region
  $region22: #{atgcn_forward.1} parent=0 // pred_check
    _
  $region23: #{atgcn_forward.1} parent=0 // pred_check_branch
    %39 = sbr.rel (0) target = $region25
  $region24: #{atgcn_forward.1} parent=0 // pred_region
    _
  $region25: #{atgcn_forward.1} parent=0 // pred_fallthru
    _
  // Predicated region
  $region26: #{atgcn_forward.1} parent=0 // pred_check
    _
  $region27: #{atgcn_forward.1} parent=0 // pred_check_branch
    %41 = sbr.rel (0) target = $region29
  $region28: #{atgcn_forward.1} parent=0 // pred_region
    _
  $region29: #{atgcn_forward.1} parent=0 // pred_fallthru
    _
  // Predicated region
  $region30: #{atgcn_forward.1} parent=0 // pred_check
    _
  $region31: #{atgcn_forward.1} parent=0 // pred_check_branch
    %43 = sbr.rel (0) target = $region33
  $region32: #{atgcn_forward.1} parent=0 // pred_region
    _
  $region33: #{atgcn_forward.1} parent=0 // pred_fallthru
    _
  // Predicated region
  $region34: #{atgcn_forward.1} parent=0 // pred_check
    _
  $region35: #{atgcn_forward.1} parent=0 // pred_check_branch
    %45 = sbr.rel (0) target = $region37
  $region36: #{atgcn_forward.1} parent=0 // pred_region
    _
  $region37: #{atgcn_forward.1} parent=0 // pred_fallthru
    _
  // Predicated region
  $region38: #{atgcn_forward.1} parent=0 // pred_check
    _
  $region39: #{atgcn_forward.1} parent=0 // pred_check_branch
    %47 = sbr.rel (0) target = $region41
  $region40: #{atgcn_forward.1} parent=0 // pred_region
    _
  $region41: #{atgcn_forward.1} parent=0 // pred_fallthru
    _
  // Predicated region
  $region42: #{atgcn_forward.1} parent=0 // pred_check
    _
  $region43: #{atgcn_forward.1} parent=0 // pred_check_branch
    %49 = sbr.rel (0) target = $region45
  $region44: #{atgcn_forward.1} parent=0 // pred_region
    _
  $region45: #{atgcn_forward.1} parent=0 // pred_fallthru
    _
  // Predicated region
  $region46: #{atgcn_forward.1} parent=0 // pred_check
    _
  $region47: #{atgcn_forward.1} parent=0 // pred_check_branch
    %51 = sbr.rel (0) target = $region49
  $region48: #{atgcn_forward.1} parent=0 // pred_region
    _
  $region49: #{atgcn_forward.1} parent=0 // pred_fallthru
    _
  // Predicated region
  $region50: #{atgcn_forward.1} parent=0 // pred_check
    _
  $region51: #{atgcn_forward.1} parent=0 // pred_check_branch
    %53 = sbr.rel (0) target = $region53
  $region52: #{atgcn_forward.1} parent=0 // pred_region
    _
  $region53: #{atgcn_forward.1} parent=0 // pred_fallthru
    _
  // Predicated region
  $region54: #{atgcn_forward.1} parent=0 // pred_check
    _
  $region55: #{atgcn_forward.1} parent=0 // pred_check_branch
    %55 = sbr.rel (0) target = $region57
  $region56: #{atgcn_forward.1} parent=0 // pred_region
    _
  $region57: #{atgcn_forward.1} parent=0 // pred_fallthru
    _
  // Predicated region
  $region58: #{atgcn_forward.1} parent=0 // pred_check
    _
  $region59: #{atgcn_forward.1} parent=0 // pred_check_branch
    %57 = sbr.rel (0) target = $region61
  $region60: #{atgcn_forward.1} parent=0 // pred_region
    _
  $region61: #{atgcn_forward.1} parent=0 // pred_fallthru
    _
  // Predicated region
  $region62: #{atgcn_forward.1} parent=0 // pred_check
    _
  $region63: #{atgcn_forward.1} parent=0 // pred_check_branch
    %59 = sbr.rel (0) target = $region65
  $region64: #{atgcn_forward.1} parent=0 // pred_region
    _
  $region65: #{atgcn_forward.1} parent=0 // pred_fallthru
    _
  // Predicated region
  $region66: #{atgcn_forward.1} parent=0 // pred_check
    _
  $region67: #{atgcn_forward.1} parent=0 // pred_check_branch
    %61 = sbr.rel (0) target = $region69
  $region68: #{atgcn_forward.1} parent=0 // pred_region
    _
  $region69: #{atgcn_forward.1} parent=0 // pred_fallthru
    _
  // Predicated region
  $region70: #{atgcn_forward.1} parent=0 // pred_check
    _
  $region71: #{atgcn_forward.1} parent=0 // pred_check_branch
    %63 = sbr.rel (0) target = $region73
  $region72: #{atgcn_forward.1} parent=0 // pred_region
    _
  $region73: #{atgcn_forward.1} parent=0 // pred_fallthru
    _
  // Predicated region
  $region74: #{atgcn_forward.1} parent=0 // pred_check
    _
  $region75: #{atgcn_forward.1} parent=0 // pred_check_branch
    %65 = sbr.rel (0) target = $region77
  $region76: #{atgcn_forward.1} parent=0 // pred_region
    _
  $region77: #{atgcn_forward.1} parent=0 // pred_fallthru
    _
  // Predicated region
  $region78: #{atgcn_forward.1} parent=0 // pred_check
    _
  $region79: #{atgcn_forward.1} parent=0 // pred_check_branch
    %67 = sbr.rel (0) target = $region81
  $region80: #{atgcn_forward.1} parent=0 // pred_region
    _
  $region81: #{atgcn_forward.1} parent=0 // pred_fallthru
    _
  // Predicated region
  $region82: #{atgcn_forward.1} parent=0 // pred_check
    _
  $region83: #{atgcn_forward.1} parent=0 // pred_check_branch
    %69 = sbr.rel (0) target = $region85
  $region84: #{atgcn_forward.1} parent=0 // pred_region
    _
  $region85: #{atgcn_forward.1} parent=0 // pred_fallthru
    _
  // Predicated region
  $region86: #{atgcn_forward.1} parent=0 // pred_check
    _
  $region87: #{atgcn_forward.1} parent=0 // pred_check_branch
    %71 = sbr.rel (0) target = $region89
  $region88: #{atgcn_forward.1} parent=0 // pred_region
    _
  $region89: #{atgcn_forward.1} parent=0 // pred_fallthru
    _
  // Predicated region
  $region90: #{atgcn_forward.1} parent=0 // pred_check
    _
  $region91: #{atgcn_forward.1} parent=0 // pred_check_branch
    %73 = sbr.rel (0) target = $region93
  $region92: #{atgcn_forward.1} parent=0 // pred_region
    _
  $region93: #{atgcn_forward.1} parent=0 // pred_fallthru
    _
  %v74 = vld [vmem:[%s1] sm:$0xff]
  %v75 = vld [vmem:[%s1 + $0x8] sm:$0xff]
  %v76 = vld [vmem:[%s1 + $0x10] sm:$0x1]
  %v77 = vld [vmem:[%s1 + $0x18] sm:$0x1]
  %v78 = vld [vmem:[%s0] sm:$0xff]
  %v80 = vcombine.high %v78, %v78
  %vm82 = vcmask 1043456
  %v83 = vsel %vm82, %v78, 0.0
  %v84 = vsel %vm82, %v80, 0.0
  %v85 = vadd.f32 %v83, %v84
  %86 = vadd.xlane.f32.xlu0 %v85
  %v87 = vpop.xlane.xlu0 %86
  %v88 = vmul.f32 %v87, 0.00390625
  %v91 = vunpack.c.l.s4 839922192
  %v92 = vunpack.c.0.s8 %v91
  %v93 = vlaneseq
  %v94 = vshrl.u32 %v93, 7
  %v95 = vsub.s32 %v92, %v94
  %v96 = vrot.slane %v88, %v95
  %v98 = vsub.f32 %v78, %v96
  %v99 = vmul.f32 %v98, %v98
  %v101 = vcombine.high %v99, %v99
  %v103 = vsel %vm82, %v99, 0.0
  %v104 = vsel %vm82, %v101, 0.0
  %v105 = vadd.f32 %v103, %v104
  %106 = vadd.xlane.f32.xlu0 %v105
  %v107 = vpop.xlane.xlu0 %106
  %v108 = vmul.f32 %v107, 0.00390625
  %v109 = vadd.f32 %v108, 1e-05
  %v110 = vrsqrt.pop %v109
  %v113 = vunpack.c.l.s4 839922192
  %v114 = vunpack.c.0.s8 %v113
  %v115 = vlaneseq
  %v116 = vshrl.u32 %v115, 7
  %v117 = vsub.s32 %v114, %v116
  %v118 = vrot.slane %v110, %v117
  %v120 = vmul.f32 %v98, %v118
  %v121 = vld [vmem:[%s3] sm:$0xf]
  %123 = vset.pattern.permute.xlu0 0
  %124 = vperm.xlu0 %123, %v121
  %v125 = vpop.permute.xlu0 %124
  %v127 = vunpack.c.l.s4 839922192
  %v128 = vunpack.c.0.s8 %v127
  %v129 = vlaneseq
  %v130 = vshrl.u32 %v129, 7
  %v131 = vsub.s32 %v128, %v130
  %v132 = vrot.slane %v125, %v131
  %v134 = vmul.f32 %v120, %v132
  %v135 = vld [vmem:[%s4] sm:$0xf]
  %137 = vset.pattern.permute.xlu0 0
  %138 = vperm.xlu0 %137, %v135
  %v139 = vpop.permute.xlu0 %138
  %v141 = vunpack.c.l.s4 839922192
  %v142 = vunpack.c.0.s8 %v141
  %v143 = vlaneseq
  %v144 = vshrl.u32 %v143, 7
  %v145 = vsub.s32 %v142, %v144
  %v146 = vrot.slane %v139, %v145
  %v148 = vadd.f32 %v134, %v146
  %v149 = vsel %vm82, %v148, 0.0
  %150 = vadd.xlane.f32.xlu0 %v149
  %v151 = vpop.xlane.xlu0 %150
  %v152 = vmul.f32 %v151, 0.0078125
  %v153 = vsub.f32 %v148, %v152
  %v154 = vmul.f32 %v153, %v153
  %v155 = vsel %vm82, %v154, 0.0
  %156 = vadd.xlane.f32.xlu0 %v155
  %v157 = vpop.xlane.xlu0 %156
  %v158 = vmul.f32 %v157, 0.007874016
  %v159 = vrsqrt.pop %v158
  %v160 = vmul.f32 %v158, %v159
  %vm161 = vcmp.eq.f32.partialorder %v158, inf
  %v162 = vsel %vm161, %v158, %v160
  %vm163 = vcmp.eq.f32.partialorder %v158, 0.0
  %v164 = vand.u32 %v158, 2147483648
  %v165 = vsel %vm163, %v164, %v162
  %v167 = vcombine.high %v148, %v148
  %v169 = vsel %vm82, %v167, 0.0
  %170 = vadd.xlane.f32.xlu0 %v169
  %v171 = vpop.xlane.xlu0 %170
  %v172 = vmul.f32 %v171, 0.0078125
  %v173 = vrot.slane %v148, 4
  %v175 = vsub.f32 %v173, %v172
  %v176 = vmul.f32 %v175, %v175
  %v177 = vsel %vm82, %v176, 0.0
  %178 = vadd.xlane.f32.xlu0 %v177
  %v179 = vpop.xlane.xlu0 %178
  %v180 = vmul.f32 %v179, 0.007874016
  %v181 = vrsqrt.pop %v180
  %v182 = vmul.f32 %v180, %v181
  %vm183 = vcmp.eq.f32.partialorder %v180, inf
  %v184 = vsel %vm183, %v180, %v182
  %vm185 = vcmp.eq.f32.partialorder %v180, 0.0
  %v186 = vand.u32 %v180, 2147483648
  %v187 = vsel %vm185, %v186, %v184
  %vm188 = vcmask 7168
  %v189 = vsel %vm188, %v152, %v172
  %v190 = vsel %vm188, %v165, %v187
  %v192 = vrot.slane %v190, 4
  %v194 = vsel %vm82, %v189, %v192
  %v195 = vld [vmem:[%s5] sm:$0xf]
  %197 = vset.pattern.permute.xlu0 0
  %198 = vperm.xlu0 %197, %v195
  %v199 = vpop.permute.xlu0 %198
  %v201 = vlaneseq
  %v202 = vshrl.u32 %v201, 7
  %v203 = vsub.s32 0, %v202
  %v204 = vrot.slane %v194, %v203
  %v205 = vmul.f32 %v199, %v204
  %206 = vset.pattern.permute.xlu0 1
  %207 = vperm.xlu0 %206, %v195
  %v208 = vpop.permute.xlu0 %207
  %v210 = vlaneseq
  %v211 = vshrl.u32 %v210, 7
  %v212 = vsub.s32 1, %v211
  %v213 = vrot.slane %v194, %v212
  %v214 = vmul.f32 %v208, %v213
  %v215 = vadd.f32 %v205, %v214
  %216 = vset.pattern.permute.xlu0 2
  %217 = vperm.xlu0 %216, %v195
  %v218 = vpop.permute.xlu0 %217
  %v220 = vlaneseq
  %v221 = vshrl.u32 %v220, 7
  %v222 = vsub.s32 2, %v221
  %v223 = vrot.slane %v194, %v222
  %v224 = vmul.f32 %v218, %v223
  %v225 = vadd.f32 %v215, %v224
  %226 = vset.pattern.permute.xlu0 3
  %227 = vperm.xlu0 %226, %v195
  %v228 = vpop.permute.xlu0 %227
  %v230 = vlaneseq
  %v231 = vshrl.u32 %v230, 7
  %v232 = vsub.s32 3, %v231
  %v233 = vrot.slane %v194, %v232
  %v234 = vmul.f32 %v228, %v233
  %v235 = vadd.f32 %v225, %v234
  %236 = vset.pattern.permute.xlu0 4
  %237 = vperm.xlu0 %236, %v195
  %v238 = vpop.permute.xlu0 %237
  %v240 = vlaneseq
  %v241 = vshrl.u32 %v240, 7
  %v242 = vsub.s32 4, %v241
  %v243 = vrot.slane %v194, %v242
  %v244 = vmul.f32 %v238, %v243
  %v245 = vadd.f32 %v235, %v244
  %246 = vset.pattern.permute.xlu0 5
  %247 = vperm.xlu0 %246, %v195
  %v248 = vpop.permute.xlu0 %247
  %v250 = vlaneseq
  %v251 = vshrl.u32 %v250, 7
  %v252 = vsub.s32 5, %v251
  %v253 = vrot.slane %v194, %v252
  %v254 = vmul.f32 %v248, %v253
  %v255 = vadd.f32 %v245, %v254
  %256 = vset.pattern.permute.xlu0 6
  %257 = vperm.xlu0 %256, %v195
  %v258 = vpop.permute.xlu0 %257
  %v260 = vlaneseq
  %v261 = vshrl.u32 %v260, 7
  %v262 = vsub.s32 6, %v261
  %v263 = vrot.slane %v194, %v262
  %v264 = vmul.f32 %v258, %v263
  %v265 = vadd.f32 %v255, %v264
  %266 = vset.pattern.permute.xlu0 7
  %267 = vperm.xlu0 %266, %v195
  %v268 = vpop.permute.xlu0 %267
  %v270 = vlaneseq
  %v271 = vshrl.u32 %v270, 7
  %v272 = vsub.s32 7, %v271
  %v273 = vrot.slane %v194, %v272
  %v274 = vmul.f32 %v268, %v273
  %v275 = vadd.f32 %v265, %v274
  %v276 = vld [vmem:[%s6] sm:$0xf]
  %278 = vset.pattern.permute.xlu0 0
  %279 = vperm.xlu0 %278, %v276
  %v280 = vpop.permute.xlu0 %279
  %v282 = vadd.f32 %v275, %v280
  %v283 = vmax.f32 %v282, 0.0
  %v284 = vld [vmem:[%s7] sm:$0xf]
  %286 = vset.pattern.permute.xlu0 0
  %287 = vperm.xlu0 %286, %v284
  %v288 = vpop.permute.xlu0 %287
  %v290 = vlaneseq
  %v291 = vshrl.u32 %v290, 7
  %v292 = vsub.s32 0, %v291
  %v293 = vrot.slane %v283, %v292
  %v294 = vmul.f32 %v288, %v293
  %295 = vset.pattern.permute.xlu0 1
  %296 = vperm.xlu0 %295, %v284
  %v297 = vpop.permute.xlu0 %296
  %v299 = vlaneseq
  %v300 = vshrl.u32 %v299, 7
  %v301 = vsub.s32 1, %v300
  %v302 = vrot.slane %v283, %v301
  %v303 = vmul.f32 %v297, %v302
  %v304 = vadd.f32 %v294, %v303
  %305 = vset.pattern.permute.xlu0 2
  %306 = vperm.xlu0 %305, %v284
  %v307 = vpop.permute.xlu0 %306
  %v309 = vlaneseq
  %v310 = vshrl.u32 %v309, 7
  %v311 = vsub.s32 2, %v310
  %v312 = vrot.slane %v283, %v311
  %v313 = vmul.f32 %v307, %v312
  %v314 = vadd.f32 %v304, %v313
  %315 = vset.pattern.permute.xlu0 3
  %316 = vperm.xlu0 %315, %v284
  %v317 = vpop.permute.xlu0 %316
  %v319 = vlaneseq
  %v320 = vshrl.u32 %v319, 7
  %v321 = vsub.s32 3, %v320
  %v322 = vrot.slane %v283, %v321
  %v323 = vmul.f32 %v317, %v322
  %v324 = vadd.f32 %v314, %v323
  %v325 = vld [vmem:[%s8] sm:$0xf]
  %327 = vset.pattern.permute.xlu0 0
  %328 = vperm.xlu0 %327, %v325
  %v329 = vpop.permute.xlu0 %328
  %v331 = vadd.f32 %v324, %v329
  %v332 = vxor.u32 %v331, 2147483648
  %v333 = vmul.f32 %v332, 1.442695
  %v334 = vpow.pop %v333
  %v335 = vadd.f32 %v334, 1.0
  %v336 = vrcp.pop %v335
  %v337 = vmul.f32 1.0, %v336
  %339 = vset.pattern.permute.xlu0 0
  %340 = vperm.xlu0 %339, %v337
  %v341 = vpop.permute.xlu0 %340
  %v343 = vmul.f32 %v148, %v341
  %344 = vset.pattern.permute.xlu0 1
  %345 = vperm.xlu0 %344, %v337
  %v346 = vpop.permute.xlu0 %345
  %v348 = vmul.f32 %v173, %v346
  %v349 = vld [vmem:[%s9] sm:$0xff]
  %v350 = vld [vmem:[%s9 + $0x8] sm:$0xff]
  %v351 = vld [vmem:[%s9 + $0x10] sm:$0xff]
  %v352 = vld [vmem:[%s9 + $0x18] sm:$0xff]
  %v353 = vld [vmem:[%s9 + $0x20] sm:$0xff]
  %v354 = vld [vmem:[%s9 + $0x28] sm:$0xff]
  %v355 = vld [vmem:[%s9 + $0x30] sm:$0xff]
  %v356 = vld [vmem:[%s9 + $0x38] sm:$0xff]
  %v357 = vld [vmem:[%s9 + $0x40] sm:$0xff]
  %v358 = vld [vmem:[%s10] sm:$0xff]
  %360 = vrot.lane.b32.xlu0 %v348, 17
  %v361 = vpop.permute.xlu0 %360
  %364 = vrot.lane.b32.xlu0 %v343, 17
  %v365 = vpop.permute.xlu0 %364
  %vm366 = vcmask 138240
  %v367 = vsel %vm366, %v365, %v361
  %v370 = vsel %vm366, %v361, %v365
  %v371 = vlaneseq
  %v372 = vshrl.u32 %v371, 7
  %v373 = vsub.s32 0, %v372
  %v374 = vrot.slane %v74, %v373
  %v375 = vlaneseq
  %v376 = vshrl.u32 %v375, 7
  %v377 = vsub.s32 0, %v376
  %v378 = vrot.slane %v75, %v377
  %v379 = vmul.f32 %v370, %v374
  %v380 = vmul.f32 %v367, %v378
  %381 = vrot.lane.b32.xlu0 %v348, 16
  %v382 = vpop.permute.xlu0 %381
  %384 = vrot.lane.b32.xlu0 %v343, 16
  %v385 = vpop.permute.xlu0 %384
  %vm386 = vcmask 130048
  %v387 = vsel %vm386, %v385, %v382
  %v390 = vsel %vm386, %v382, %v385
  %v391 = vlaneseq
  %v392 = vshrl.u32 %v391, 7
  %v393 = vsub.s32 1, %v392
  %v394 = vrot.slane %v74, %v393
  %v395 = vlaneseq
  %v396 = vshrl.u32 %v395, 7
  %v397 = vsub.s32 1, %v396
  %v398 = vrot.slane %v75, %v397
  %v399 = vmul.f32 %v390, %v394
  %v400 = vmul.f32 %v387, %v398
  %vm401 = vcmask 31744
  %v403 = vsel %vm401, %v350, 0
  %v406 = vsel %vm82, %v399, 0
  %v409 = vsel %vm82, %v400, 0
  %411 = vmatprep.subr.mxu0 %v409
  %412 = vmatpush1.msra.mxu0 %v406
  %413 = vmatprep.subr.mxu0 0.0
  %414 = vmatpush1.msra.mxu0 0.0
  %415 = vmatprep.subr.mxu0 0.0
  %416 = vmatpush1.msra.mxu0 0.0
  %417 = vmatprep.subr.mxu0 0.0
  %418 = vmatpush1.msra.mxu0 0.0
  %419 = vmatprep.subr.mxu0 0.0
  %420 = vmatpush1.msra.mxu0 0.0
  %421 = vmatprep.subr.mxu0 0.0
  %422 = vmatpush1.msra.mxu0 0.0
  %423 = vmatprep.subr.mxu0 0.0
  %424 = vmatpush1.msra.mxu0 0.0
  %425 = vmatprep.subr.mxu0 0.0
  %426 = vmatpush1.msra.mxu0 0.0
  %427 = vmatprep.subr.mxu0 0.0
  %428 = vmatpush1.msra.mxu0 0.0
  %429 = vmatprep.subr.mxu0 0.0
  %430 = vmatpush1.msra.mxu0 0.0
  %431 = vmatprep.subr.mxu0 0.0
  %432 = vmatpush1.msra.mxu0 0.0
  %433 = vmatprep.subr.mxu0 0.0
  %434 = vmatpush1.msra.mxu0 0.0
  %435 = vmatprep.subr.mxu0 0.0
  %436 = vmatpush1.msra.mxu0 0.0
  %437 = vmatprep.subr.mxu0 0.0
  %438 = vmatpush1.msra.mxu0 0.0
  %439 = vmatprep.subr.mxu0 0.0
  %440 = vmatpush1.msra.mxu0 0.0
  %441 = vmatprep.subr.mxu0 0.0
  %442 = vmatpush1.msra.mxu0 0.0
  %443 = vmatprep.subr.mxu0 0.0
  %444 = vmatpush1.msra.mxu0 0.0
  %445 = vmatprep.subr.mxu0 0.0
  %446 = vmatpush1.msra.mxu0 0.0
  %447 = vmatprep.subr.mxu0 0.0
  %448 = vmatpush1.msra.mxu0 0.0
  %449 = vmatprep.subr.mxu0 0.0
  %450 = vmatpush1.msra.mxu0 0.0
  %451 = vmatprep.subr.mxu0 0.0
  %452 = vmatpush1.msra.mxu0 0.0
  %453 = vmatprep.subr.mxu0 0.0
  %454 = vmatpush1.msra.mxu0 0.0
  %455 = vmatprep.subr.mxu0 0.0
  %456 = vmatpush1.msra.mxu0 0.0
  %457 = vmatprep.subr.mxu0 0.0
  %458 = vmatpush1.msra.mxu0 0.0
  %459 = vmatprep.subr.mxu0 0.0
  %460 = vmatpush1.msra.mxu0 0.0
  %461 = vmatprep.subr.mxu0 0.0
  %462 = vmatpush1.msra.mxu0 0.0
  %463 = vmatprep.subr.mxu0 0.0
  %464 = vmatpush1.msra.mxu0 0.0
  %465 = vmatprep.subr.mxu0 0.0
  %466 = vmatpush1.msra.mxu0 0.0
  %467 = vmatprep.subr.mxu0 0.0
  %468 = vmatpush1.msra.mxu0 0.0
  %469 = vmatprep.subr.mxu0 0.0
  %470 = vmatpush1.msra.mxu0 0.0
  %471 = vmatprep.subr.mxu0 0.0
  %472 = vmatpush1.msra.mxu0 0.0
  %473 = vmatprep.subr.mxu0 0.0
  %474 = vmatpush1.msra.mxu0 0.0
  %475 = vmatprep.mubr.f32.mxu0 0.0
  %476 = vmatmul.mubr.f32.gmra.mrb[0].mxu0 %v403
  %v477 = vpop.f32.mrb[0].mxu0
  %v478 = vadd.f32 0.0, %v477
  %v479 = vpop.f32.mrb[0].mxu0
  %v480 = vadd.f32 0.0, %v479
  %481 = vdwg.mxu0
  %v483 = vsel %vm401, %v349, 0
  %v486 = vsel %vm82, %v379, 0
  %v489 = vsel %vm82, %v380, 0
  %491 = vmatprep.subr.mxu0 %v489
  %492 = vmatpush1.msra.mxu0 %v486
  %493 = vmatprep.subr.mxu0 0.0
  %494 = vmatpush1.msra.mxu0 0.0
  %495 = vmatprep.subr.mxu0 0.0
  %496 = vmatpush1.msra.mxu0 0.0
  %497 = vmatprep.subr.mxu0 0.0
  %498 = vmatpush1.msra.mxu0 0.0
  %499 = vmatprep.subr.mxu0 0.0
  %500 = vmatpush1.msra.mxu0 0.0
  %501 = vmatprep.subr.mxu0 0.0
  %502 = vmatpush1.msra.mxu0 0.0
  %503 = vmatprep.subr.mxu0 0.0
  %504 = vmatpush1.msra.mxu0 0.0
  %505 = vmatprep.subr.mxu0 0.0
  %506 = vmatpush1.msra.mxu0 0.0
  %507 = vmatprep.subr.mxu0 0.0
  %508 = vmatpush1.msra.mxu0 0.0
  %509 = vmatprep.subr.mxu0 0.0
  %510 = vmatpush1.msra.mxu0 0.0
  %511 = vmatprep.subr.mxu0 0.0
  %512 = vmatpush1.msra.mxu0 0.0
  %513 = vmatprep.subr.mxu0 0.0
  %514 = vmatpush1.msra.mxu0 0.0
  %515 = vmatprep.subr.mxu0 0.0
  %516 = vmatpush1.msra.mxu0 0.0
  %517 = vmatprep.subr.mxu0 0.0
  %518 = vmatpush1.msra.mxu0 0.0
  %519 = vmatprep.subr.mxu0 0.0
  %520 = vmatpush1.msra.mxu0 0.0
  %521 = vmatprep.subr.mxu0 0.0
  %522 = vmatpush1.msra.mxu0 0.0
  %523 = vmatprep.subr.mxu0 0.0
  %524 = vmatpush1.msra.mxu0 0.0
  %525 = vmatprep.subr.mxu0 0.0
  %526 = vmatpush1.msra.mxu0 0.0
  %527 = vmatprep.subr.mxu0 0.0
  %528 = vmatpush1.msra.mxu0 0.0
  %529 = vmatprep.subr.mxu0 0.0
  %530 = vmatpush1.msra.mxu0 0.0
  %531 = vmatprep.subr.mxu0 0.0
  %532 = vmatpush1.msra.mxu0 0.0
  %533 = vmatprep.subr.mxu0 0.0
  %534 = vmatpush1.msra.mxu0 0.0
  %535 = vmatprep.subr.mxu0 0.0
  %536 = vmatpush1.msra.mxu0 0.0
  %537 = vmatprep.subr.mxu0 0.0
  %538 = vmatpush1.msra.mxu0 0.0
  %539 = vmatprep.subr.mxu0 0.0
  %540 = vmatpush1.msra.mxu0 0.0
  %541 = vmatprep.subr.mxu0 0.0
  %542 = vmatpush1.msra.mxu0 0.0
  %543 = vmatprep.subr.mxu0 0.0
  %544 = vmatpush1.msra.mxu0 0.0
  %545 = vmatprep.subr.mxu0 0.0
  %546 = vmatpush1.msra.mxu0 0.0
  %547 = vmatprep.subr.mxu0 0.0
  %548 = vmatpush1.msra.mxu0 0.0
  %549 = vmatprep.subr.mxu0 0.0
  %550 = vmatpush1.msra.mxu0 0.0
  %551 = vmatprep.subr.mxu0 0.0
  %552 = vmatpush1.msra.mxu0 0.0
  %553 = vmatprep.subr.mxu0 0.0
  %554 = vmatpush1.msra.mxu0 0.0
  %555 = vmatprep.mubr.f32.mxu0 0.0
  %556 = vmatmul.mubr.f32.gmra.mrb[0].mxu0 %v483
  %v557 = vpop.f32.mrb[0].mxu0
  %v558 = vadd.f32 %v478, %v557
  %v559 = vpop.f32.mrb[0].mxu0
  %v560 = vadd.f32 %v480, %v559
  %561 = vdwg.mxu0
  %562 = vrot.lane.b32.xlu0 %v348, 15
  %v563 = vpop.permute.xlu0 %562
  %565 = vrot.lane.b32.xlu0 %v343, 15
  %v566 = vpop.permute.xlu0 %565
  %vm567 = vcmask 121856
  %v568 = vsel %vm567, %v566, %v563
  %v571 = vsel %vm567, %v563, %v566
  %v572 = vlaneseq
  %v573 = vshrl.u32 %v572, 7
  %v574 = vsub.s32 2, %v573
  %v575 = vrot.slane %v74, %v574
  %v576 = vlaneseq
  %v577 = vshrl.u32 %v576, 7
  %v578 = vsub.s32 2, %v577
  %v579 = vrot.slane %v75, %v578
  %v580 = vmul.f32 %v571, %v575
  %v581 = vmul.f32 %v568, %v579
  %v583 = vsel %vm401, %v351, 0
  %v586 = vsel %vm82, %v580, 0
  %v589 = vsel %vm82, %v581, 0
  %591 = vmatprep.subr.mxu0 %v589
  %592 = vmatpush1.msra.mxu0 %v586
  %593 = vmatprep.subr.mxu0 0.0
  %594 = vmatpush1.msra.mxu0 0.0
  %595 = vmatprep.subr.mxu0 0.0
  %596 = vmatpush1.msra.mxu0 0.0
  %597 = vmatprep.subr.mxu0 0.0
  %598 = vmatpush1.msra.mxu0 0.0
  %599 = vmatprep.subr.mxu0 0.0
  %600 = vmatpush1.msra.mxu0 0.0
  %601 = vmatprep.subr.mxu0 0.0
  %602 = vmatpush1.msra.mxu0 0.0
  %603 = vmatprep.subr.mxu0 0.0
  %604 = vmatpush1.msra.mxu0 0.0
  %605 = vmatprep.subr.mxu0 0.0
  %606 = vmatpush1.msra.mxu0 0.0
  %607 = vmatprep.subr.mxu0 0.0
  %608 = vmatpush1.msra.mxu0 0.0
  %609 = vmatprep.subr.mxu0 0.0
  %610 = vmatpush1.msra.mxu0 0.0
  %611 = vmatprep.subr.mxu0 0.0
  %612 = vmatpush1.msra.mxu0 0.0
  %613 = vmatprep.subr.mxu0 0.0
  %614 = vmatpush1.msra.mxu0 0.0
  %615 = vmatprep.subr.mxu0 0.0
  %616 = vmatpush1.msra.mxu0 0.0
  %617 = vmatprep.subr.mxu0 0.0
  %618 = vmatpush1.msra.mxu0 0.0
  %619 = vmatprep.subr.mxu0 0.0
  %620 = vmatpush1.msra.mxu0 0.0
  %621 = vmatprep.subr.mxu0 0.0
  %622 = vmatpush1.msra.mxu0 0.0
  %623 = vmatprep.subr.mxu0 0.0
  %624 = vmatpush1.msra.mxu0 0.0
  %625 = vmatprep.subr.mxu0 0.0
  %626 = vmatpush1.msra.mxu0 0.0
  %627 = vmatprep.subr.mxu0 0.0
  %628 = vmatpush1.msra.mxu0 0.0
  %629 = vmatprep.subr.mxu0 0.0
  %630 = vmatpush1.msra.mxu0 0.0
  %631 = vmatprep.subr.mxu0 0.0
  %632 = vmatpush1.msra.mxu0 0.0
  %633 = vmatprep.subr.mxu0 0.0
  %634 = vmatpush1.msra.mxu0 0.0
  %635 = vmatprep.subr.mxu0 0.0
  %636 = vmatpush1.msra.mxu0 0.0
  %637 = vmatprep.subr.mxu0 0.0
  %638 = vmatpush1.msra.mxu0 0.0
  %639 = vmatprep.subr.mxu0 0.0
  %640 = vmatpush1.msra.mxu0 0.0
  %641 = vmatprep.subr.mxu0 0.0
  %642 = vmatpush1.msra.mxu0 0.0
  %643 = vmatprep.subr.mxu0 0.0
  %644 = vmatpush1.msra.mxu0 0.0
  %645 = vmatprep.subr.mxu0 0.0
  %646 = vmatpush1.msra.mxu0 0.0
  %647 = vmatprep.subr.mxu0 0.0
  %648 = vmatpush1.msra.mxu0 0.0
  %649 = vmatprep.subr.mxu0 0.0
  %650 = vmatpush1.msra.mxu0 0.0
  %651 = vmatprep.subr.mxu0 0.0
  %652 = vmatpush1.msra.mxu0 0.0
  %653 = vmatprep.subr.mxu0 0.0
  %654 = vmatpush1.msra.mxu0 0.0
  %655 = vmatprep.mubr.f32.mxu0 0.0
  %656 = vmatmul.mubr.f32.gmra.mrb[0].mxu0 %v583
  %v657 = vpop.f32.mrb[0].mxu0
  %v658 = vadd.f32 0.0, %v657
  %v659 = vpop.f32.mrb[0].mxu0
  %v660 = vadd.f32 0.0, %v659
  %661 = vdwg.mxu0
  %v662 = vadd.f32 %v558, %v658
  %v663 = vadd.f32 %v560, %v660
  %664 = vrot.lane.b32.xlu0 %v348, 1
  %v665 = vpop.permute.xlu0 %664
  %667 = vrot.lane.b32.xlu0 %v343, 1
  %v668 = vpop.permute.xlu0 %667
  %v669 = vsel %vm188, %v668, %v665
  %v672 = vsel %vm188, %v665, %v668
  %v673 = vlaneseq
  %v674 = vshrl.u32 %v673, 7
  %v675 = vsub.s32 3, %v674
  %v676 = vrot.slane %v74, %v675
  %v677 = vlaneseq
  %v678 = vshrl.u32 %v677, 7
  %v679 = vsub.s32 3, %v678
  %v680 = vrot.slane %v75, %v679
  %v681 = vmul.f32 %v672, %v676
  %v682 = vmul.f32 %v669, %v680
  %v684 = vsel %vm401, %v352, 0
  %v687 = vsel %vm82, %v681, 0
  %v690 = vsel %vm82, %v682, 0
  %692 = vmatprep.subr.mxu0 %v690
  %693 = vmatpush1.msra.mxu0 %v687
  %694 = vmatprep.subr.mxu0 0.0
  %695 = vmatpush1.msra.mxu0 0.0
  %696 = vmatprep.subr.mxu0 0.0
  %697 = vmatpush1.msra.mxu0 0.0
  %698 = vmatprep.subr.mxu0 0.0
  %699 = vmatpush1.msra.mxu0 0.0
  %700 = vmatprep.subr.mxu0 0.0
  %701 = vmatpush1.msra.mxu0 0.0
  %702 = vmatprep.subr.mxu0 0.0
  %703 = vmatpush1.msra.mxu0 0.0
  %704 = vmatprep.subr.mxu0 0.0
  %705 = vmatpush1.msra.mxu0 0.0
  %706 = vmatprep.subr.mxu0 0.0
  %707 = vmatpush1.msra.mxu0 0.0
  %708 = vmatprep.subr.mxu0 0.0
  %709 = vmatpush1.msra.mxu0 0.0
  %710 = vmatprep.subr.mxu0 0.0
  %711 = vmatpush1.msra.mxu0 0.0
  %712 = vmatprep.subr.mxu0 0.0
  %713 = vmatpush1.msra.mxu0 0.0
  %714 = vmatprep.subr.mxu0 0.0
  %715 = vmatpush1.msra.mxu0 0.0
  %716 = vmatprep.subr.mxu0 0.0
  %717 = vmatpush1.msra.mxu0 0.0
  %718 = vmatprep.subr.mxu0 0.0
  %719 = vmatpush1.msra.mxu0 0.0
  %720 = vmatprep.subr.mxu0 0.0
  %721 = vmatpush1.msra.mxu0 0.0
  %722 = vmatprep.subr.mxu0 0.0
  %723 = vmatpush1.msra.mxu0 0.0
  %724 = vmatprep.subr.mxu0 0.0
  %725 = vmatpush1.msra.mxu0 0.0
  %726 = vmatprep.subr.mxu0 0.0
  %727 = vmatpush1.msra.mxu0 0.0
  %728 = vmatprep.subr.mxu0 0.0
  %729 = vmatpush1.msra.mxu0 0.0
  %730 = vmatprep.subr.mxu0 0.0
  %731 = vmatpush1.msra.mxu0 0.0
  %732 = vmatprep.subr.mxu0 0.0
  %733 = vmatpush1.msra.mxu0 0.0
  %734 = vmatprep.subr.mxu0 0.0
  %735 = vmatpush1.msra.mxu0 0.0
  %736 = vmatprep.subr.mxu0 0.0
  %737 = vmatpush1.msra.mxu0 0.0
  %738 = vmatprep.subr.mxu0 0.0
  %739 = vmatpush1.msra.mxu0 0.0
  %740 = vmatprep.subr.mxu0 0.0
  %741 = vmatpush1.msra.mxu0 0.0
  %742 = vmatprep.subr.mxu0 0.0
  %743 = vmatpush1.msra.mxu0 0.0
  %744 = vmatprep.subr.mxu0 0.0
  %745 = vmatpush1.msra.mxu0 0.0
  %746 = vmatprep.subr.mxu0 0.0
  %747 = vmatpush1.msra.mxu0 0.0
  %748 = vmatprep.subr.mxu0 0.0
  %749 = vmatpush1.msra.mxu0 0.0
  %750 = vmatprep.subr.mxu0 0.0
  %751 = vmatpush1.msra.mxu0 0.0
  %752 = vmatprep.subr.mxu0 0.0
  %753 = vmatpush1.msra.mxu0 0.0
  %754 = vmatprep.subr.mxu0 0.0
  %755 = vmatpush1.msra.mxu0 0.0
  %756 = vmatprep.mubr.f32.mxu0 0.0
  %757 = vmatmul.mubr.f32.gmra.mrb[0].mxu0 %v684
  %v758 = vpop.f32.mrb[0].mxu0
  %v759 = vadd.f32 0.0, %v758
  %v760 = vpop.f32.mrb[0].mxu0
  %v761 = vadd.f32 0.0, %v760
  %762 = vdwg.mxu0
  %v763 = vadd.f32 %v662, %v759
  %v764 = vadd.f32 %v663, %v761
  %v766 = vsel %vm401, %v353, 0
  %v768 = vsel %vm82, %v343, 0
  %v770 = vsel %vm82, %v348, 0
  %772 = vmatprep.subr.mxu0 %v770
  %773 = vmatpush1.msra.mxu0 %v768
  %774 = vmatprep.subr.mxu0 0.0
  %775 = vmatpush1.msra.mxu0 0.0
  %776 = vmatprep.subr.mxu0 0.0
  %777 = vmatpush1.msra.mxu0 0.0
  %778 = vmatprep.subr.mxu0 0.0
  %779 = vmatpush1.msra.mxu0 0.0
  %780 = vmatprep.subr.mxu0 0.0
  %781 = vmatpush1.msra.mxu0 0.0
  %782 = vmatprep.subr.mxu0 0.0
  %783 = vmatpush1.msra.mxu0 0.0
  %784 = vmatprep.subr.mxu0 0.0
  %785 = vmatpush1.msra.mxu0 0.0
  %786 = vmatprep.subr.mxu0 0.0
  %787 = vmatpush1.msra.mxu0 0.0
  %788 = vmatprep.subr.mxu0 0.0
  %789 = vmatpush1.msra.mxu0 0.0
  %790 = vmatprep.subr.mxu0 0.0
  %791 = vmatpush1.msra.mxu0 0.0
  %792 = vmatprep.subr.mxu0 0.0
  %793 = vmatpush1.msra.mxu0 0.0
  %794 = vmatprep.subr.mxu0 0.0
  %795 = vmatpush1.msra.mxu0 0.0
  %796 = vmatprep.subr.mxu0 0.0
  %797 = vmatpush1.msra.mxu0 0.0
  %798 = vmatprep.subr.mxu0 0.0
  %799 = vmatpush1.msra.mxu0 0.0
  %800 = vmatprep.subr.mxu0 0.0
  %801 = vmatpush1.msra.mxu0 0.0
  %802 = vmatprep.subr.mxu0 0.0
  %803 = vmatpush1.msra.mxu0 0.0
  %804 = vmatprep.subr.mxu0 0.0
  %805 = vmatpush1.msra.mxu0 0.0
  %806 = vmatprep.subr.mxu0 0.0
  %807 = vmatpush1.msra.mxu0 0.0
  %808 = vmatprep.subr.mxu0 0.0
  %809 = vmatpush1.msra.mxu0 0.0
  %810 = vmatprep.subr.mxu0 0.0
  %811 = vmatpush1.msra.mxu0 0.0
  %812 = vmatprep.subr.mxu0 0.0
  %813 = vmatpush1.msra.mxu0 0.0
  %814 = vmatprep.subr.mxu0 0.0
  %815 = vmatpush1.msra.mxu0 0.0
  %816 = vmatprep.subr.mxu0 0.0
  %817 = vmatpush1.msra.mxu0 0.0
  %818 = vmatprep.subr.mxu0 0.0
  %819 = vmatpush1.msra.mxu0 0.0
  %820 = vmatprep.subr.mxu0 0.0
  %821 = vmatpush1.msra.mxu0 0.0
  %822 = vmatprep.subr.mxu0 0.0
  %823 = vmatpush1.msra.mxu0 0.0
  %824 = vmatprep.subr.mxu0 0.0
  %825 = vmatpush1.msra.mxu0 0.0
  %826 = vmatprep.subr.mxu0 0.0
  %827 = vmatpush1.msra.mxu0 0.0
  %828 = vmatprep.subr.mxu0 0.0
  %829 = vmatpush1.msra.mxu0 0.0
  %830 = vmatprep.subr.mxu0 0.0
  %831 = vmatpush1.msra.mxu0 0.0
  %832 = vmatprep.subr.mxu0 0.0
  %833 = vmatpush1.msra.mxu0 0.0
  %834 = vmatprep.subr.mxu0 0.0
  %835 = vmatpush1.msra.mxu0 0.0
  %836 = vmatprep.mubr.f32.mxu0 0.0
  %837 = vmatmul.mubr.f32.gmra.mrb[0].mxu0 %v766
  %v838 = vpop.f32.mrb[0].mxu0
  %v839 = vadd.f32 0.0, %v838
  %v840 = vpop.f32.mrb[0].mxu0
  %v841 = vadd.f32 0.0, %v840
  %842 = vdwg.mxu0
  %v843 = vadd.f32 %v763, %v839
  %v844 = vadd.f32 %v764, %v841
  %845 = vrot.lane.b32.xlu0 %v343, 127
  %v846 = vpop.permute.xlu0 %845
  %847 = vrot.lane.b32.xlu0 %v348, 127
  %v848 = vpop.permute.xlu0 %847
  %vm849 = vcmask 1039360
  %v850 = vsel %vm849, %v846, %v848
  %v854 = vsel %vm849, %v848, %v846
  %v855 = vlaneseq
  %v856 = vshrl.u32 %v855, 7
  %v857 = vsub.s32 5, %v856
  %v858 = vrot.slane %v74, %v857
  %v859 = vlaneseq
  %v860 = vshrl.u32 %v859, 7
  %v861 = vsub.s32 5, %v860
  %v862 = vrot.slane %v75, %v861
  %v863 = vmul.f32 %v850, %v858
  %v864 = vmul.f32 %v854, %v862
  %v866 = vsel %vm401, %v354, 0
  %v869 = vsel %vm82, %v863, 0
  %v872 = vsel %vm82, %v864, 0
  %874 = vmatprep.subr.mxu0 %v872
  %875 = vmatpush1.msra.mxu0 %v869
  %876 = vmatprep.subr.mxu0 0.0
  %877 = vmatpush1.msra.mxu0 0.0
  %878 = vmatprep.subr.mxu0 0.0
  %879 = vmatpush1.msra.mxu0 0.0
  %880 = vmatprep.subr.mxu0 0.0
  %881 = vmatpush1.msra.mxu0 0.0
  %882 = vmatprep.subr.mxu0 0.0
  %883 = vmatpush1.msra.mxu0 0.0
  %884 = vmatprep.subr.mxu0 0.0
  %885 = vmatpush1.msra.mxu0 0.0
  %886 = vmatprep.subr.mxu0 0.0
  %887 = vmatpush1.msra.mxu0 0.0
  %888 = vmatprep.subr.mxu0 0.0
  %889 = vmatpush1.msra.mxu0 0.0
  %890 = vmatprep.subr.mxu0 0.0
  %891 = vmatpush1.msra.mxu0 0.0
  %892 = vmatprep.subr.mxu0 0.0
  %893 = vmatpush1.msra.mxu0 0.0
  %894 = vmatprep.subr.mxu0 0.0
  %895 = vmatpush1.msra.mxu0 0.0
  %896 = vmatprep.subr.mxu0 0.0
  %897 = vmatpush1.msra.mxu0 0.0
  %898 = vmatprep.subr.mxu0 0.0
  %899 = vmatpush1.msra.mxu0 0.0
  %900 = vmatprep.subr.mxu0 0.0
  %901 = vmatpush1.msra.mxu0 0.0
  %902 = vmatprep.subr.mxu0 0.0
  %903 = vmatpush1.msra.mxu0 0.0
  %904 = vmatprep.subr.mxu0 0.0
  %905 = vmatpush1.msra.mxu0 0.0
  %906 = vmatprep.subr.mxu0 0.0
  %907 = vmatpush1.msra.mxu0 0.0
  %908 = vmatprep.subr.mxu0 0.0
  %909 = vmatpush1.msra.mxu0 0.0
  %910 = vmatprep.subr.mxu0 0.0
  %911 = vmatpush1.msra.mxu0 0.0
  %912 = vmatprep.subr.mxu0 0.0
  %913 = vmatpush1.msra.mxu0 0.0
  %914 = vmatprep.subr.mxu0 0.0
  %915 = vmatpush1.msra.mxu0 0.0
  %916 = vmatprep.subr.mxu0 0.0
  %917 = vmatpush1.msra.mxu0 0.0
  %918 = vmatprep.subr.mxu0 0.0
  %919 = vmatpush1.msra.mxu0 0.0
  %920 = vmatprep.subr.mxu0 0.0
  %921 = vmatpush1.msra.mxu0 0.0
  %922 = vmatprep.subr.mxu0 0.0
  %923 = vmatpush1.msra.mxu0 0.0
  %924 = vmatprep.subr.mxu0 0.0
  %925 = vmatpush1.msra.mxu0 0.0
  %926 = vmatprep.subr.mxu0 0.0
  %927 = vmatpush1.msra.mxu0 0.0
  %928 = vmatprep.subr.mxu0 0.0
  %929 = vmatpush1.msra.mxu0 0.0
  %930 = vmatprep.subr.mxu0 0.0
  %931 = vmatpush1.msra.mxu0 0.0
  %932 = vmatprep.subr.mxu0 0.0
  %933 = vmatpush1.msra.mxu0 0.0
  %934 = vmatprep.subr.mxu0 0.0
  %935 = vmatpush1.msra.mxu0 0.0
  %936 = vmatprep.subr.mxu0 0.0
  %937 = vmatpush1.msra.mxu0 0.0
  %938 = vmatprep.mubr.f32.mxu0 0.0
  %939 = vmatmul.mubr.f32.gmra.mrb[0].mxu0 %v866
  %v940 = vpop.f32.mrb[0].mxu0
  %v941 = vadd.f32 0.0, %v940
  %v942 = vpop.f32.mrb[0].mxu0
  %v943 = vadd.f32 0.0, %v942
  %944 = vdwg.mxu0
  %v945 = vadd.f32 %v843, %v941
  %v946 = vadd.f32 %v844, %v943
  %947 = vrot.lane.b32.xlu0 %v343, 113
  %v948 = vpop.permute.xlu0 %947
  %949 = vrot.lane.b32.xlu0 %v348, 113
  %v950 = vpop.permute.xlu0 %949
  %vm951 = vcmask 924672
  %v952 = vsel %vm951, %v948, %v950
  %v956 = vsel %vm951, %v950, %v948
  %v957 = vlaneseq
  %v958 = vshrl.u32 %v957, 7
  %v959 = vsub.s32 6, %v958
  %v960 = vrot.slane %v74, %v959
  %v961 = vlaneseq
  %v962 = vshrl.u32 %v961, 7
  %v963 = vsub.s32 6, %v962
  %v964 = vrot.slane %v75, %v963
  %v965 = vmul.f32 %v952, %v960
  %v966 = vmul.f32 %v956, %v964
  %v968 = vsel %vm401, %v355, 0
  %v971 = vsel %vm82, %v965, 0
  %v974 = vsel %vm82, %v966, 0
  %976 = vmatprep.subr.mxu0 %v974
  %977 = vmatpush1.msra.mxu0 %v971
  %978 = vmatprep.subr.mxu0 0.0
  %979 = vmatpush1.msra.mxu0 0.0
  %980 = vmatprep.subr.mxu0 0.0
  %981 = vmatpush1.msra.mxu0 0.0
  %982 = vmatprep.subr.mxu0 0.0
  %983 = vmatpush1.msra.mxu0 0.0
  %984 = vmatprep.subr.mxu0 0.0
  %985 = vmatpush1.msra.mxu0 0.0
  %986 = vmatprep.subr.mxu0 0.0
  %987 = vmatpush1.msra.mxu0 0.0
  %988 = vmatprep.subr.mxu0 0.0
  %989 = vmatpush1.msra.mxu0 0.0
  %990 = vmatprep.subr.mxu0 0.0
  %991 = vmatpush1.msra.mxu0 0.0
  %992 = vmatprep.subr.mxu0 0.0
  %993 = vmatpush1.msra.mxu0 0.0
  %994 = vmatprep.subr.mxu0 0.0
  %995 = vmatpush1.msra.mxu0 0.0
  %996 = vmatprep.subr.mxu0 0.0
  %997 = vmatpush1.msra.mxu0 0.0
  %998 = vmatprep.subr.mxu0 0.0
  %999 = vmatpush1.msra.mxu0 0.0
  %1000 = vmatprep.subr.mxu0 0.0
  %1001 = vmatpush1.msra.mxu0 0.0
  %1002 = vmatprep.subr.mxu0 0.0
  %1003 = vmatpush1.msra.mxu0 0.0
  %1004 = vmatprep.subr.mxu0 0.0
  %1005 = vmatpush1.msra.mxu0 0.0
  %1006 = vmatprep.subr.mxu0 0.0
  %1007 = vmatpush1.msra.mxu0 0.0
  %1008 = vmatprep.subr.mxu0 0.0
  %1009 = vmatpush1.msra.mxu0 0.0
  %1010 = vmatprep.subr.mxu0 0.0
  %1011 = vmatpush1.msra.mxu0 0.0
  %1012 = vmatprep.subr.mxu0 0.0
  %1013 = vmatpush1.msra.mxu0 0.0
  %1014 = vmatprep.subr.mxu0 0.0
  %1015 = vmatpush1.msra.mxu0 0.0
  %1016 = vmatprep.subr.mxu0 0.0
  %1017 = vmatpush1.msra.mxu0 0.0
  %1018 = vmatprep.subr.mxu0 0.0
  %1019 = vmatpush1.msra.mxu0 0.0
  %1020 = vmatprep.subr.mxu0 0.0
  %1021 = vmatpush1.msra.mxu0 0.0
  %1022 = vmatprep.subr.mxu0 0.0
  %1023 = vmatpush1.msra.mxu0 0.0
  %1024 = vmatprep.subr.mxu0 0.0
  %1025 = vmatpush1.msra.mxu0 0.0
  %1026 = vmatprep.subr.mxu0 0.0
  %1027 = vmatpush1.msra.mxu0 0.0
  %1028 = vmatprep.subr.mxu0 0.0
  %1029 = vmatpush1.msra.mxu0 0.0
  %1030 = vmatprep.subr.mxu0 0.0
  %1031 = vmatpush1.msra.mxu0 0.0
  %1032 = vmatprep.subr.mxu0 0.0
  %1033 = vmatpush1.msra.mxu0 0.0
  %1034 = vmatprep.subr.mxu0 0.0
  %1035 = vmatpush1.msra.mxu0 0.0
  %1036 = vmatprep.subr.mxu0 0.0
  %1037 = vmatpush1.msra.mxu0 0.0
  %1038 = vmatprep.subr.mxu0 0.0
  %1039 = vmatpush1.msra.mxu0 0.0
  %1040 = vmatprep.mubr.f32.mxu0 0.0
  %1041 = vmatmul.mubr.f32.gmra.mrb[0].mxu0 %v968
  %v1042 = vpop.f32.mrb[0].mxu0
  %v1043 = vadd.f32 0.0, %v1042
  %v1044 = vpop.f32.mrb[0].mxu0
  %v1045 = vadd.f32 0.0, %v1044
  %1046 = vdwg.mxu0
  %v1047 = vadd.f32 %v945, %v1043
  %v1048 = vadd.f32 %v946, %v1045
  %1049 = vrot.lane.b32.xlu0 %v343, 112
  %v1050 = vpop.permute.xlu0 %1049
  %1051 = vrot.lane.b32.xlu0 %v348, 112
  %v1052 = vpop.permute.xlu0 %1051
  %vm1053 = vcmask 916480
  %v1054 = vsel %vm1053, %v1050, %v1052
  %v1058 = vsel %vm1053, %v1052, %v1050
  %v1059 = vlaneseq
  %v1060 = vshrl.u32 %v1059, 7
  %v1061 = vsub.s32 7, %v1060
  %v1062 = vrot.slane %v74, %v1061
  %v1063 = vlaneseq
  %v1064 = vshrl.u32 %v1063, 7
  %v1065 = vsub.s32 7, %v1064
  %v1066 = vrot.slane %v75, %v1065
  %v1067 = vmul.f32 %v1054, %v1062
  %v1068 = vmul.f32 %v1058, %v1066
  %v1070 = vsel %vm401, %v356, 0
  %v1073 = vsel %vm82, %v1067, 0
  %v1076 = vsel %vm82, %v1068, 0
  %1078 = vmatprep.subr.mxu0 %v1076
  %1079 = vmatpush1.msra.mxu0 %v1073
  %1080 = vmatprep.subr.mxu0 0.0
  %1081 = vmatpush1.msra.mxu0 0.0
  %1082 = vmatprep.subr.mxu0 0.0
  %1083 = vmatpush1.msra.mxu0 0.0
  %1084 = vmatprep.subr.mxu0 0.0
  %1085 = vmatpush1.msra.mxu0 0.0
  %1086 = vmatprep.subr.mxu0 0.0
  %1087 = vmatpush1.msra.mxu0 0.0
  %1088 = vmatprep.subr.mxu0 0.0
  %1089 = vmatpush1.msra.mxu0 0.0
  %1090 = vmatprep.subr.mxu0 0.0
  %1091 = vmatpush1.msra.mxu0 0.0
  %1092 = vmatprep.subr.mxu0 0.0
  %1093 = vmatpush1.msra.mxu0 0.0
  %1094 = vmatprep.subr.mxu0 0.0
  %1095 = vmatpush1.msra.mxu0 0.0
  %1096 = vmatprep.subr.mxu0 0.0
  %1097 = vmatpush1.msra.mxu0 0.0
  %1098 = vmatprep.subr.mxu0 0.0
  %1099 = vmatpush1.msra.mxu0 0.0
  %1100 = vmatprep.subr.mxu0 0.0
  %1101 = vmatpush1.msra.mxu0 0.0
  %1102 = vmatprep.subr.mxu0 0.0
  %1103 = vmatpush1.msra.mxu0 0.0
  %1104 = vmatprep.subr.mxu0 0.0
  %1105 = vmatpush1.msra.mxu0 0.0
  %1106 = vmatprep.subr.mxu0 0.0
  %1107 = vmatpush1.msra.mxu0 0.0
  %1108 = vmatprep.subr.mxu0 0.0
  %1109 = vmatpush1.msra.mxu0 0.0
  %1110 = vmatprep.subr.mxu0 0.0
  %1111 = vmatpush1.msra.mxu0 0.0
  %1112 = vmatprep.subr.mxu0 0.0
  %1113 = vmatpush1.msra.mxu0 0.0
  %1114 = vmatprep.subr.mxu0 0.0
  %1115 = vmatpush1.msra.mxu0 0.0
  %1116 = vmatprep.subr.mxu0 0.0
  %1117 = vmatpush1.msra.mxu0 0.0
  %1118 = vmatprep.subr.mxu0 0.0
  %1119 = vmatpush1.msra.mxu0 0.0
  %1120 = vmatprep.subr.mxu0 0.0
  %1121 = vmatpush1.msra.mxu0 0.0
  %1122 = vmatprep.subr.mxu0 0.0
  %1123 = vmatpush1.msra.mxu0 0.0
  %1124 = vmatprep.subr.mxu0 0.0
  %1125 = vmatpush1.msra.mxu0 0.0
  %1126 = vmatprep.subr.mxu0 0.0
  %1127 = vmatpush1.msra.mxu0 0.0
  %1128 = vmatprep.subr.mxu0 0.0
  %1129 = vmatpush1.msra.mxu0 0.0
  %1130 = vmatprep.subr.mxu0 0.0
  %1131 = vmatpush1.msra.mxu0 0.0
  %1132 = vmatprep.subr.mxu0 0.0
  %1133 = vmatpush1.msra.mxu0 0.0
  %1134 = vmatprep.subr.mxu0 0.0
  %1135 = vmatpush1.msra.mxu0 0.0
  %1136 = vmatprep.subr.mxu0 0.0
  %1137 = vmatpush1.msra.mxu0 0.0
  %1138 = vmatprep.subr.mxu0 0.0
  %1139 = vmatpush1.msra.mxu0 0.0
  %1140 = vmatprep.subr.mxu0 0.0
  %1141 = vmatpush1.msra.mxu0 0.0
  %1142 = vmatprep.mubr.f32.mxu0 0.0
  %1143 = vmatmul.mubr.f32.gmra.mrb[0].mxu0 %v1070
  %v1144 = vpop.f32.mrb[0].mxu0
  %v1145 = vadd.f32 0.0, %v1144
  %v1146 = vpop.f32.mrb[0].mxu0
  %v1147 = vadd.f32 0.0, %v1146
  %1148 = vdwg.mxu0
  %v1149 = vadd.f32 %v1047, %v1145
  %v1150 = vadd.f32 %v1048, %v1147
  %1151 = vrot.lane.b32.xlu0 %v343, 111
  %v1152 = vpop.permute.xlu0 %1151
  %1153 = vrot.lane.b32.xlu0 %v348, 111
  %v1154 = vpop.permute.xlu0 %1153
  %vm1155 = vcmask 908288
  %v1156 = vsel %vm1155, %v1152, %v1154
  %v1160 = vsel %vm1155, %v1154, %v1152
  %v1161 = vlaneseq
  %v1162 = vshrl.u32 %v1161, 7
  %v1163 = vsub.s32 0, %v1162
  %v1164 = vrot.slane %v76, %v1163
  %v1165 = vlaneseq
  %v1166 = vshrl.u32 %v1165, 7
  %v1167 = vsub.s32 0, %v1166
  %v1168 = vrot.slane %v77, %v1167
  %v1169 = vmul.f32 %v1156, %v1164
  %v1170 = vmul.f32 %v1160, %v1168
  %v1172 = vsel %vm401, %v357, 0
  %v1175 = vsel %vm82, %v1169, 0
  %v1178 = vsel %vm82, %v1170, 0
  %1180 = vmatprep.subr.mxu0 %v1178
  %1181 = vmatpush1.msra.mxu0 %v1175
  %1182 = vmatprep.subr.mxu0 0.0
  %1183 = vmatpush1.msra.mxu0 0.0
  %1184 = vmatprep.subr.mxu0 0.0
  %1185 = vmatpush1.msra.mxu0 0.0
  %1186 = vmatprep.subr.mxu0 0.0
  %1187 = vmatpush1.msra.mxu0 0.0
  %1188 = vmatprep.subr.mxu0 0.0
  %1189 = vmatpush1.msra.mxu0 0.0
  %1190 = vmatprep.subr.mxu0 0.0
  %1191 = vmatpush1.msra.mxu0 0.0
  %1192 = vmatprep.subr.mxu0 0.0
  %1193 = vmatpush1.msra.mxu0 0.0
  %1194 = vmatprep.subr.mxu0 0.0
  %1195 = vmatpush1.msra.mxu0 0.0
  %1196 = vmatprep.subr.mxu0 0.0
  %1197 = vmatpush1.msra.mxu0 0.0
  %1198 = vmatprep.subr.mxu0 0.0
  %1199 = vmatpush1.msra.mxu0 0.0
  %1200 = vmatprep.subr.mxu0 0.0
  %1201 = vmatpush1.msra.mxu0 0.0
  %1202 = vmatprep.subr.mxu0 0.0
  %1203 = vmatpush1.msra.mxu0 0.0
  %1204 = vmatprep.subr.mxu0 0.0
  %1205 = vmatpush1.msra.mxu0 0.0
  %1206 = vmatprep.subr.mxu0 0.0
  %1207 = vmatpush1.msra.mxu0 0.0
  %1208 = vmatprep.subr.mxu0 0.0
  %1209 = vmatpush1.msra.mxu0 0.0
  %1210 = vmatprep.subr.mxu0 0.0
  %1211 = vmatpush1.msra.mxu0 0.0
  %1212 = vmatprep.subr.mxu0 0.0
  %1213 = vmatpush1.msra.mxu0 0.0
  %1214 = vmatprep.subr.mxu0 0.0
  %1215 = vmatpush1.msra.mxu0 0.0
  %1216 = vmatprep.subr.mxu0 0.0
  %1217 = vmatpush1.msra.mxu0 0.0
  %1218 = vmatprep.subr.mxu0 0.0
  %1219 = vmatpush1.msra.mxu0 0.0
  %1220 = vmatprep.subr.mxu0 0.0
  %1221 = vmatpush1.msra.mxu0 0.0
  %1222 = vmatprep.subr.mxu0 0.0
  %1223 = vmatpush1.msra.mxu0 0.0
  %1224 = vmatprep.subr.mxu0 0.0
  %1225 = vmatpush1.msra.mxu0 0.0
  %1226 = vmatprep.subr.mxu0 0.0
  %1227 = vmatpush1.msra.mxu0 0.0
  %1228 = vmatprep.subr.mxu0 0.0
  %1229 = vmatpush1.msra.mxu0 0.0
  %1230 = vmatprep.subr.mxu0 0.0
  %1231 = vmatpush1.msra.mxu0 0.0
  %1232 = vmatprep.subr.mxu0 0.0
  %1233 = vmatpush1.msra.mxu0 0.0
  %1234 = vmatprep.subr.mxu0 0.0
  %1235 = vmatpush1.msra.mxu0 0.0
  %1236 = vmatprep.subr.mxu0 0.0
  %1237 = vmatpush1.msra.mxu0 0.0
  %1238 = vmatprep.subr.mxu0 0.0
  %1239 = vmatpush1.msra.mxu0 0.0
  %1240 = vmatprep.subr.mxu0 0.0
  %1241 = vmatpush1.msra.mxu0 0.0
  %1242 = vmatprep.subr.mxu0 0.0
  %1243 = vmatpush1.msra.mxu0 0.0
  %1244 = vmatprep.mubr.f32.mxu0 0.0
  %1245 = vmatmul.mubr.f32.gmra.mrb[0].mxu0 %v1172
  %v1246 = vpop.f32.mrb[0].mxu0
  %v1247 = vadd.f32 0.0, %v1246
  %v1248 = vpop.f32.mrb[0].mxu0
  %v1249 = vadd.f32 0.0, %v1248
  %1250 = vdwg.mxu0
  %v1251 = vadd.f32 %v1149, %v1247
  %v1252 = vadd.f32 %v1150, %v1249
  %1254 = vset.pattern.permute.xlu0 0
  %1255 = vperm.xlu0 %1254, %v358
  %v1256 = vpop.permute.xlu0 %1255
  %v1258 = vadd.f32 %v1251, %v1256
  %v1259 = vadd.f32 %v1252, %v1256
  %v1260 = vld [vmem:[%s11] sm:$0xff]
  %v1261 = vld [vmem:[%s11 + $0x8] sm:$0xff]
  %v1262 = vld [vmem:[%s11 + $0x10] sm:$0xff]
  %v1263 = vld [vmem:[%s11 + $0x18] sm:$0xff]
  %v1264 = vld [vmem:[%s11 + $0x20] sm:$0xff]
  %v1265 = vld [vmem:[%s11 + $0x28] sm:$0xff]
  %v1266 = vld [vmem:[%s11 + $0x30] sm:$0xff]
  %v1267 = vld [vmem:[%s11 + $0x38] sm:$0xff]
  %v1268 = vld [vmem:[%s11 + $0x40] sm:$0xff]
  %v1269 = vld [vmem:[%s12] sm:$0xff]
  %1271 = vrot.lane.b32.xlu0 %v1259, 17
  %v1272 = vpop.permute.xlu0 %1271
  %1275 = vrot.lane.b32.xlu0 %v1258, 17
  %v1276 = vpop.permute.xlu0 %1275
  %v1277 = vsel %vm366, %v1276, %v1272
  %v1280 = vsel %vm366, %v1272, %v1276
  %v1281 = vmul.f32 %v1280, %v374
  %v1282 = vmul.f32 %v1277, %v378
  %1283 = vrot.lane.b32.xlu0 %v1259, 16
  %v1284 = vpop.permute.xlu0 %1283
  %1286 = vrot.lane.b32.xlu0 %v1258, 16
  %v1287 = vpop.permute.xlu0 %1286
  %v1288 = vsel %vm386, %v1287, %v1284
  %v1291 = vsel %vm386, %v1284, %v1287
  %v1292 = vmul.f32 %v1291, %v394
  %v1293 = vmul.f32 %v1288, %v398
  %vm1294 = vcmask 64512
  %v1296 = vsel %vm1294, %v1261, 0
  %1298 = vmatprep.subr.mxu0 %v1293
  %1299 = vmatpush1.msra.mxu0 %v1292
  %1300 = vmatprep.subr.mxu0 0.0
  %1301 = vmatpush1.msra.mxu0 0.0
  %1302 = vmatprep.subr.mxu0 0.0
  %1303 = vmatpush1.msra.mxu0 0.0
  %1304 = vmatprep.subr.mxu0 0.0
  %1305 = vmatpush1.msra.mxu0 0.0
  %1306 = vmatprep.subr.mxu0 0.0
  %1307 = vmatpush1.msra.mxu0 0.0
  %1308 = vmatprep.subr.mxu0 0.0
  %1309 = vmatpush1.msra.mxu0 0.0
  %1310 = vmatprep.subr.mxu0 0.0
  %1311 = vmatpush1.msra.mxu0 0.0
  %1312 = vmatprep.subr.mxu0 0.0
  %1313 = vmatpush1.msra.mxu0 0.0
  %1314 = vmatprep.subr.mxu0 0.0
  %1315 = vmatpush1.msra.mxu0 0.0
  %1316 = vmatprep.subr.mxu0 0.0
  %1317 = vmatpush1.msra.mxu0 0.0
  %1318 = vmatprep.subr.mxu0 0.0
  %1319 = vmatpush1.msra.mxu0 0.0
  %1320 = vmatprep.subr.mxu0 0.0
  %1321 = vmatpush1.msra.mxu0 0.0
  %1322 = vmatprep.subr.mxu0 0.0
  %1323 = vmatpush1.msra.mxu0 0.0
  %1324 = vmatprep.subr.mxu0 0.0
  %1325 = vmatpush1.msra.mxu0 0.0
  %1326 = vmatprep.subr.mxu0 0.0
  %1327 = vmatpush1.msra.mxu0 0.0
  %1328 = vmatprep.subr.mxu0 0.0
  %1329 = vmatpush1.msra.mxu0 0.0
  %1330 = vmatprep.subr.mxu0 0.0
  %1331 = vmatpush1.msra.mxu0 0.0
  %1332 = vmatprep.subr.mxu0 0.0
  %1333 = vmatpush1.msra.mxu0 0.0
  %1334 = vmatprep.subr.mxu0 0.0
  %1335 = vmatpush1.msra.mxu0 0.0
  %1336 = vmatprep.subr.mxu0 0.0
  %1337 = vmatpush1.msra.mxu0 0.0
  %1338 = vmatprep.subr.mxu0 0.0
  %1339 = vmatpush1.msra.mxu0 0.0
  %1340 = vmatprep.subr.mxu0 0.0
  %1341 = vmatpush1.msra.mxu0 0.0
  %1342 = vmatprep.subr.mxu0 0.0
  %1343 = vmatpush1.msra.mxu0 0.0
  %1344 = vmatprep.subr.mxu0 0.0
  %1345 = vmatpush1.msra.mxu0 0.0
  %1346 = vmatprep.subr.mxu0 0.0
  %1347 = vmatpush1.msra.mxu0 0.0
  %1348 = vmatprep.subr.mxu0 0.0
  %1349 = vmatpush1.msra.mxu0 0.0
  %1350 = vmatprep.subr.mxu0 0.0
  %1351 = vmatpush1.msra.mxu0 0.0
  %1352 = vmatprep.subr.mxu0 0.0
  %1353 = vmatpush1.msra.mxu0 0.0
  %1354 = vmatprep.subr.mxu0 0.0
  %1355 = vmatpush1.msra.mxu0 0.0
  %1356 = vmatprep.subr.mxu0 0.0
  %1357 = vmatpush1.msra.mxu0 0.0
  %1358 = vmatprep.subr.mxu0 0.0
  %1359 = vmatpush1.msra.mxu0 0.0
  %1360 = vmatprep.subr.mxu0 0.0
  %1361 = vmatpush1.msra.mxu0 0.0
  %1362 = vmatprep.mubr.f32.mxu0 0.0
  %1363 = vmatmul.mubr.f32.gmra.mrb[0].mxu0 %v1296
  %v1364 = vpop.f32.mrb[0].mxu0
  %v1365 = vadd.f32 0.0, %v1364
  %v1366 = vpop.f32.mrb[0].mxu0
  %v1367 = vadd.f32 0.0, %v1366
  %1368 = vdwg.mxu0
  %v1370 = vsel %vm1294, %v1260, 0
  %1372 = vmatprep.subr.mxu0 %v1282
  %1373 = vmatpush1.msra.mxu0 %v1281
  %1374 = vmatprep.subr.mxu0 0.0
  %1375 = vmatpush1.msra.mxu0 0.0
  %1376 = vmatprep.subr.mxu0 0.0
  %1377 = vmatpush1.msra.mxu0 0.0
  %1378 = vmatprep.subr.mxu0 0.0
  %1379 = vmatpush1.msra.mxu0 0.0
  %1380 = vmatprep.subr.mxu0 0.0
  %1381 = vmatpush1.msra.mxu0 0.0
  %1382 = vmatprep.subr.mxu0 0.0
  %1383 = vmatpush1.msra.mxu0 0.0
  %1384 = vmatprep.subr.mxu0 0.0
  %1385 = vmatpush1.msra.mxu0 0.0
  %1386 = vmatprep.subr.mxu0 0.0
  %1387 = vmatpush1.msra.mxu0 0.0
  %1388 = vmatprep.subr.mxu0 0.0
  %1389 = vmatpush1.msra.mxu0 0.0
  %1390 = vmatprep.subr.mxu0 0.0
  %1391 = vmatpush1.msra.mxu0 0.0
  %1392 = vmatprep.subr.mxu0 0.0
  %1393 = vmatpush1.msra.mxu0 0.0
  %1394 = vmatprep.subr.mxu0 0.0
  %1395 = vmatpush1.msra.mxu0 0.0
  %1396 = vmatprep.subr.mxu0 0.0
  %1397 = vmatpush1.msra.mxu0 0.0
  %1398 = vmatprep.subr.mxu0 0.0
  %1399 = vmatpush1.msra.mxu0 0.0
  %1400 = vmatprep.subr.mxu0 0.0
  %1401 = vmatpush1.msra.mxu0 0.0
  %1402 = vmatprep.subr.mxu0 0.0
  %1403 = vmatpush1.msra.mxu0 0.0
  %1404 = vmatprep.subr.mxu0 0.0
  %1405 = vmatpush1.msra.mxu0 0.0
  %1406 = vmatprep.subr.mxu0 0.0
  %1407 = vmatpush1.msra.mxu0 0.0
  %1408 = vmatprep.subr.mxu0 0.0
  %1409 = vmatpush1.msra.mxu0 0.0
  %1410 = vmatprep.subr.mxu0 0.0
  %1411 = vmatpush1.msra.mxu0 0.0
  %1412 = vmatprep.subr.mxu0 0.0
  %1413 = vmatpush1.msra.mxu0 0.0
  %1414 = vmatprep.subr.mxu0 0.0
  %1415 = vmatpush1.msra.mxu0 0.0
  %1416 = vmatprep.subr.mxu0 0.0
  %1417 = vmatpush1.msra.mxu0 0.0
  %1418 = vmatprep.subr.mxu0 0.0
  %1419 = vmatpush1.msra.mxu0 0.0
  %1420 = vmatprep.subr.mxu0 0.0
  %1421 = vmatpush1.msra.mxu0 0.0
  %1422 = vmatprep.subr.mxu0 0.0
  %1423 = vmatpush1.msra.mxu0 0.0
  %1424 = vmatprep.subr.mxu0 0.0
  %1425 = vmatpush1.msra.mxu0 0.0
  %1426 = vmatprep.subr.mxu0 0.0
  %1427 = vmatpush1.msra.mxu0 0.0
  %1428 = vmatprep.subr.mxu0 0.0
  %1429 = vmatpush1.msra.mxu0 0.0
  %1430 = vmatprep.subr.mxu0 0.0
  %1431 = vmatpush1.msra.mxu0 0.0
  %1432 = vmatprep.subr.mxu0 0.0
  %1433 = vmatpush1.msra.mxu0 0.0
  %1434 = vmatprep.subr.mxu0 0.0
  %1435 = vmatpush1.msra.mxu0 0.0
  %1436 = vmatprep.mubr.f32.mxu0 0.0
  %1437 = vmatmul.mubr.f32.gmra.mrb[0].mxu0 %v1370
  %v1438 = vpop.f32.mrb[0].mxu0
  %v1439 = vadd.f32 %v1365, %v1438
  %v1440 = vpop.f32.mrb[0].mxu0
  %v1441 = vadd.f32 %v1367, %v1440
  %1442 = vdwg.mxu0
  %1443 = vrot.lane.b32.xlu0 %v1259, 15
  %v1444 = vpop.permute.xlu0 %1443
  %1446 = vrot.lane.b32.xlu0 %v1258, 15
  %v1447 = vpop.permute.xlu0 %1446
  %v1448 = vsel %vm567, %v1447, %v1444
  %v1451 = vsel %vm567, %v1444, %v1447
  %v1452 = vmul.f32 %v1451, %v575
  %v1453 = vmul.f32 %v1448, %v579
  %v1455 = vsel %vm1294, %v1262, 0
  %1457 = vmatprep.subr.mxu0 %v1453
  %1458 = vmatpush1.msra.mxu0 %v1452
  %1459 = vmatprep.subr.mxu0 0.0
  %1460 = vmatpush1.msra.mxu0 0.0
  %1461 = vmatprep.subr.mxu0 0.0
  %1462 = vmatpush1.msra.mxu0 0.0
  %1463 = vmatprep.subr.mxu0 0.0
  %1464 = vmatpush1.msra.mxu0 0.0
  %1465 = vmatprep.subr.mxu0 0.0
  %1466 = vmatpush1.msra.mxu0 0.0
  %1467 = vmatprep.subr.mxu0 0.0
  %1468 = vmatpush1.msra.mxu0 0.0
  %1469 = vmatprep.subr.mxu0 0.0
  %1470 = vmatpush1.msra.mxu0 0.0
  %1471 = vmatprep.subr.mxu0 0.0
  %1472 = vmatpush1.msra.mxu0 0.0
  %1473 = vmatprep.subr.mxu0 0.0
  %1474 = vmatpush1.msra.mxu0 0.0
  %1475 = vmatprep.subr.mxu0 0.0
  %1476 = vmatpush1.msra.mxu0 0.0
  %1477 = vmatprep.subr.mxu0 0.0
  %1478 = vmatpush1.msra.mxu0 0.0
  %1479 = vmatprep.subr.mxu0 0.0
  %1480 = vmatpush1.msra.mxu0 0.0
  %1481 = vmatprep.subr.mxu0 0.0
  %1482 = vmatpush1.msra.mxu0 0.0
  %1483 = vmatprep.subr.mxu0 0.0
  %1484 = vmatpush1.msra.mxu0 0.0
  %1485 = vmatprep.subr.mxu0 0.0
  %1486 = vmatpush1.msra.mxu0 0.0
  %1487 = vmatprep.subr.mxu0 0.0
  %1488 = vmatpush1.msra.mxu0 0.0
  %1489 = vmatprep.subr.mxu0 0.0
  %1490 = vmatpush1.msra.mxu0 0.0
  %1491 = vmatprep.subr.mxu0 0.0
  %1492 = vmatpush1.msra.mxu0 0.0
  %1493 = vmatprep.subr.mxu0 0.0
  %1494 = vmatpush1.msra.mxu0 0.0
  %1495 = vmatprep.subr.mxu0 0.0
  %1496 = vmatpush1.msra.mxu0 0.0
  %1497 = vmatprep.subr.mxu0 0.0
  %1498 = vmatpush1.msra.mxu0 0.0
  %1499 = vmatprep.subr.mxu0 0.0
  %1500 = vmatpush1.msra.mxu0 0.0
  %1501 = vmatprep.subr.mxu0 0.0
  %1502 = vmatpush1.msra.mxu0 0.0
  %1503 = vmatprep.subr.mxu0 0.0
  %1504 = vmatpush1.msra.mxu0 0.0
  %1505 = vmatprep.subr.mxu0 0.0
  %1506 = vmatpush1.msra.mxu0 0.0
  %1507 = vmatprep.subr.mxu0 0.0
  %1508 = vmatpush1.msra.mxu0 0.0
  %1509 = vmatprep.subr.mxu0 0.0
  %1510 = vmatpush1.msra.mxu0 0.0
  %1511 = vmatprep.subr.mxu0 0.0
  %1512 = vmatpush1.msra.mxu0 0.0
  %1513 = vmatprep.subr.mxu0 0.0
  %1514 = vmatpush1.msra.mxu0 0.0
  %1515 = vmatprep.subr.mxu0 0.0
  %1516 = vmatpush1.msra.mxu0 0.0
  %1517 = vmatprep.subr.mxu0 0.0
  %1518 = vmatpush1.msra.mxu0 0.0
  %1519 = vmatprep.subr.mxu0 0.0
  %1520 = vmatpush1.msra.mxu0 0.0
  %1521 = vmatprep.mubr.f32.mxu0 0.0
  %1522 = vmatmul.mubr.f32.gmra.mrb[0].mxu0 %v1455
  %v1523 = vpop.f32.mrb[0].mxu0
  %v1524 = vadd.f32 0.0, %v1523
  %v1525 = vpop.f32.mrb[0].mxu0
  %v1526 = vadd.f32 0.0, %v1525
  %1527 = vdwg.mxu0
  %v1528 = vadd.f32 %v1439, %v1524
  %v1529 = vadd.f32 %v1441, %v1526
  %1530 = vrot.lane.b32.xlu0 %v1259, 1
  %v1531 = vpop.permute.xlu0 %1530
  %1533 = vrot.lane.b32.xlu0 %v1258, 1
  %v1534 = vpop.permute.xlu0 %1533
  %v1535 = vsel %vm188, %v1534, %v1531
  %v1538 = vsel %vm188, %v1531, %v1534
  %v1539 = vmul.f32 %v1538, %v676
  %v1540 = vmul.f32 %v1535, %v680
  %v1542 = vsel %vm1294, %v1263, 0
  %1544 = vmatprep.subr.mxu0 %v1540
  %1545 = vmatpush1.msra.mxu0 %v1539
  %1546 = vmatprep.subr.mxu0 0.0
  %1547 = vmatpush1.msra.mxu0 0.0
  %1548 = vmatprep.subr.mxu0 0.0
  %1549 = vmatpush1.msra.mxu0 0.0
  %1550 = vmatprep.subr.mxu0 0.0
  %1551 = vmatpush1.msra.mxu0 0.0
  %1552 = vmatprep.subr.mxu0 0.0
  %1553 = vmatpush1.msra.mxu0 0.0
  %1554 = vmatprep.subr.mxu0 0.0
  %1555 = vmatpush1.msra.mxu0 0.0
  %1556 = vmatprep.subr.mxu0 0.0
  %1557 = vmatpush1.msra.mxu0 0.0
  %1558 = vmatprep.subr.mxu0 0.0
  %1559 = vmatpush1.msra.mxu0 0.0
  %1560 = vmatprep.subr.mxu0 0.0
  %1561 = vmatpush1.msra.mxu0 0.0
  %1562 = vmatprep.subr.mxu0 0.0
  %1563 = vmatpush1.msra.mxu0 0.0
  %1564 = vmatprep.subr.mxu0 0.0
  %1565 = vmatpush1.msra.mxu0 0.0
  %1566 = vmatprep.subr.mxu0 0.0
  %1567 = vmatpush1.msra.mxu0 0.0
  %1568 = vmatprep.subr.mxu0 0.0
  %1569 = vmatpush1.msra.mxu0 0.0
  %1570 = vmatprep.subr.mxu0 0.0
  %1571 = vmatpush1.msra.mxu0 0.0
  %1572 = vmatprep.subr.mxu0 0.0
  %1573 = vmatpush1.msra.mxu0 0.0
  %1574 = vmatprep.subr.mxu0 0.0
  %1575 = vmatpush1.msra.mxu0 0.0
  %1576 = vmatprep.subr.mxu0 0.0
  %1577 = vmatpush1.msra.mxu0 0.0
  %1578 = vmatprep.subr.mxu0 0.0
  %1579 = vmatpush1.msra.mxu0 0.0
  %1580 = vmatprep.subr.mxu0 0.0
  %1581 = vmatpush1.msra.mxu0 0.0
  %1582 = vmatprep.subr.mxu0 0.0
  %1583 = vmatpush1.msra.mxu0 0.0
  %1584 = vmatprep.subr.mxu0 0.0
  %1585 = vmatpush1.msra.mxu0 0.0
  %1586 = vmatprep.subr.mxu0 0.0
  %1587 = vmatpush1.msra.mxu0 0.0
  %1588 = vmatprep.subr.mxu0 0.0
  %1589 = vmatpush1.msra.mxu0 0.0
  %1590 = vmatprep.subr.mxu0 0.0
  %1591 = vmatpush1.msra.mxu0 0.0
  %1592 = vmatprep.subr.mxu0 0.0
  %1593 = vmatpush1.msra.mxu0 0.0
  %1594 = vmatprep.subr.mxu0 0.0
  %1595 = vmatpush1.msra.mxu0 0.0
  %1596 = vmatprep.subr.mxu0 0.0
  %1597 = vmatpush1.msra.mxu0 0.0
  %1598 = vmatprep.subr.mxu0 0.0
  %1599 = vmatpush1.msra.mxu0 0.0
  %1600 = vmatprep.subr.mxu0 0.0
  %1601 = vmatpush1.msra.mxu0 0.0
  %1602 = vmatprep.subr.mxu0 0.0
  %1603 = vmatpush1.msra.mxu0 0.0
  %1604 = vmatprep.subr.mxu0 0.0
  %1605 = vmatpush1.msra.mxu0 0.0
  %1606 = vmatprep.subr.mxu0 0.0
  %1607 = vmatpush1.msra.mxu0 0.0
  %1608 = vmatprep.mubr.f32.mxu0 0.0
  %1609 = vmatmul.mubr.f32.gmra.mrb[0].mxu0 %v1542
  %v1610 = vpop.f32.mrb[0].mxu0
  %v1611 = vadd.f32 0.0, %v1610
  %v1612 = vpop.f32.mrb[0].mxu0
  %v1613 = vadd.f32 0.0, %v1612
  %1614 = vdwg.mxu0
  %v1615 = vadd.f32 %v1528, %v1611
  %v1616 = vadd.f32 %v1529, %v1613
  %v1618 = vsel %vm1294, %v1264, 0
  %1620 = vmatprep.subr.mxu0 %v1259
  %1621 = vmatpush1.msra.mxu0 %v1258
  %1622 = vmatprep.subr.mxu0 0.0
  %1623 = vmatpush1.msra.mxu0 0.0
  %1624 = vmatprep.subr.mxu0 0.0
  %1625 = vmatpush1.msra.mxu0 0.0
  %1626 = vmatprep.subr.mxu0 0.0
  %1627 = vmatpush1.msra.mxu0 0.0
  %1628 = vmatprep.subr.mxu0 0.0
  %1629 = vmatpush1.msra.mxu0 0.0
  %1630 = vmatprep.subr.mxu0 0.0
  %1631 = vmatpush1.msra.mxu0 0.0
  %1632 = vmatprep.subr.mxu0 0.0
  %1633 = vmatpush1.msra.mxu0 0.0
  %1634 = vmatprep.subr.mxu0 0.0
  %1635 = vmatpush1.msra.mxu0 0.0
  %1636 = vmatprep.subr.mxu0 0.0
  %1637 = vmatpush1.msra.mxu0 0.0
  %1638 = vmatprep.subr.mxu0 0.0
  %1639 = vmatpush1.msra.mxu0 0.0
  %1640 = vmatprep.subr.mxu0 0.0
  %1641 = vmatpush1.msra.mxu0 0.0
  %1642 = vmatprep.subr.mxu0 0.0
  %1643 = vmatpush1.msra.mxu0 0.0
  %1644 = vmatprep.subr.mxu0 0.0
  %1645 = vmatpush1.msra.mxu0 0.0
  %1646 = vmatprep.subr.mxu0 0.0
  %1647 = vmatpush1.msra.mxu0 0.0
  %1648 = vmatprep.subr.mxu0 0.0
  %1649 = vmatpush1.msra.mxu0 0.0
  %1650 = vmatprep.subr.mxu0 0.0
  %1651 = vmatpush1.msra.mxu0 0.0
  %1652 = vmatprep.subr.mxu0 0.0
  %1653 = vmatpush1.msra.mxu0 0.0
  %1654 = vmatprep.subr.mxu0 0.0
  %1655 = vmatpush1.msra.mxu0 0.0
  %1656 = vmatprep.subr.mxu0 0.0
  %1657 = vmatpush1.msra.mxu0 0.0
  %1658 = vmatprep.subr.mxu0 0.0
  %1659 = vmatpush1.msra.mxu0 0.0
  %1660 = vmatprep.subr.mxu0 0.0
  %1661 = vmatpush1.msra.mxu0 0.0
  %1662 = vmatprep.subr.mxu0 0.0
  %1663 = vmatpush1.msra.mxu0 0.0
  %1664 = vmatprep.subr.mxu0 0.0
  %1665 = vmatpush1.msra.mxu0 0.0
  %1666 = vmatprep.subr.mxu0 0.0
  %1667 = vmatpush1.msra.mxu0 0.0
  %1668 = vmatprep.subr.mxu0 0.0
  %1669 = vmatpush1.msra.mxu0 0.0
  %1670 = vmatprep.subr.mxu0 0.0
  %1671 = vmatpush1.msra.mxu0 0.0
  %1672 = vmatprep.subr.mxu0 0.0
  %1673 = vmatpush1.msra.mxu0 0.0
  %1674 = vmatprep.subr.mxu0 0.0
  %1675 = vmatpush1.msra.mxu0 0.0
  %1676 = vmatprep.subr.mxu0 0.0
  %1677 = vmatpush1.msra.mxu0 0.0
  %1678 = vmatprep.subr.mxu0 0.0
  %1679 = vmatpush1.msra.mxu0 0.0
  %1680 = vmatprep.subr.mxu0 0.0
  %1681 = vmatpush1.msra.mxu0 0.0
  %1682 = vmatprep.subr.mxu0 0.0
  %1683 = vmatpush1.msra.mxu0 0.0
  %1684 = vmatprep.mubr.f32.mxu0 0.0
  %1685 = vmatmul.mubr.f32.gmra.mrb[0].mxu0 %v1618
  %v1686 = vpop.f32.mrb[0].mxu0
  %v1687 = vadd.f32 0.0, %v1686
  %v1688 = vpop.f32.mrb[0].mxu0
  %v1689 = vadd.f32 0.0, %v1688
  %1690 = vdwg.mxu0
  %v1691 = vadd.f32 %v1615, %v1687
  %v1692 = vadd.f32 %v1616, %v1689
  %1693 = vrot.lane.b32.xlu0 %v1258, 127
  %v1694 = vpop.permute.xlu0 %1693
  %1695 = vrot.lane.b32.xlu0 %v1259, 127
  %v1696 = vpop.permute.xlu0 %1695
  %v1697 = vsel %vm849, %v1694, %v1696
  %v1701 = vsel %vm849, %v1696, %v1694
  %v1702 = vmul.f32 %v1697, %v858
  %v1703 = vmul.f32 %v1701, %v862
  %v1705 = vsel %vm1294, %v1265, 0
  %1707 = vmatprep.subr.mxu0 %v1703
  %1708 = vmatpush1.msra.mxu0 %v1702
  %1709 = vmatprep.subr.mxu0 0.0
  %1710 = vmatpush1.msra.mxu0 0.0
  %1711 = vmatprep.subr.mxu0 0.0
  %1712 = vmatpush1.msra.mxu0 0.0
  %1713 = vmatprep.subr.mxu0 0.0
  %1714 = vmatpush1.msra.mxu0 0.0
  %1715 = vmatprep.subr.mxu0 0.0
  %1716 = vmatpush1.msra.mxu0 0.0
  %1717 = vmatprep.subr.mxu0 0.0
  %1718 = vmatpush1.msra.mxu0 0.0
  %1719 = vmatprep.subr.mxu0 0.0
  %1720 = vmatpush1.msra.mxu0 0.0
  %1721 = vmatprep.subr.mxu0 0.0
  %1722 = vmatpush1.msra.mxu0 0.0
  %1723 = vmatprep.subr.mxu0 0.0
  %1724 = vmatpush1.msra.mxu0 0.0
  %1725 = vmatprep.subr.mxu0 0.0
  %1726 = vmatpush1.msra.mxu0 0.0
  %1727 = vmatprep.subr.mxu0 0.0
  %1728 = vmatpush1.msra.mxu0 0.0
  %1729 = vmatprep.subr.mxu0 0.0
  %1730 = vmatpush1.msra.mxu0 0.0
  %1731 = vmatprep.subr.mxu0 0.0
  %1732 = vmatpush1.msra.mxu0 0.0
  %1733 = vmatprep.subr.mxu0 0.0
  %1734 = vmatpush1.msra.mxu0 0.0
  %1735 = vmatprep.subr.mxu0 0.0
  %1736 = vmatpush1.msra.mxu0 0.0
  %1737 = vmatprep.subr.mxu0 0.0
  %1738 = vmatpush1.msra.mxu0 0.0
  %1739 = vmatprep.subr.mxu0 0.0
  %1740 = vmatpush1.msra.mxu0 0.0
  %1741 = vmatprep.subr.mxu0 0.0
  %1742 = vmatpush1.msra.mxu0 0.0
  %1743 = vmatprep.subr.mxu0 0.0
  %1744 = vmatpush1.msra.mxu0 0.0
  %1745 = vmatprep.subr.mxu0 0.0
  %1746 = vmatpush1.msra.mxu0 0.0
  %1747 = vmatprep.subr.mxu0 0.0
  %1748 = vmatpush1.msra.mxu0 0.0
  %1749 = vmatprep.subr.mxu0 0.0
  %1750 = vmatpush1.msra.mxu0 0.0
  %1751 = vmatprep.subr.mxu0 0.0
  %1752 = vmatpush1.msra.mxu0 0.0
  %1753 = vmatprep.subr.mxu0 0.0
  %1754 = vmatpush1.msra.mxu0 0.0
  %1755 = vmatprep.subr.mxu0 0.0
  %1756 = vmatpush1.msra.mxu0 0.0
  %1757 = vmatprep.subr.mxu0 0.0
  %1758 = vmatpush1.msra.mxu0 0.0
  %1759 = vmatprep.subr.mxu0 0.0
  %1760 = vmatpush1.msra.mxu0 0.0
  %1761 = vmatprep.subr.mxu0 0.0
  %1762 = vmatpush1.msra.mxu0 0.0
  %1763 = vmatprep.subr.mxu0 0.0
  %1764 = vmatpush1.msra.mxu0 0.0
  %1765 = vmatprep.subr.mxu0 0.0
  %1766 = vmatpush1.msra.mxu0 0.0
  %1767 = vmatprep.subr.mxu0 0.0
  %1768 = vmatpush1.msra.mxu0 0.0
  %1769 = vmatprep.subr.mxu0 0.0
  %1770 = vmatpush1.msra.mxu0 0.0
  %1771 = vmatprep.mubr.f32.mxu0 0.0
  %1772 = vmatmul.mubr.f32.gmra.mrb[0].mxu0 %v1705
  %v1773 = vpop.f32.mrb[0].mxu0
  %v1774 = vadd.f32 0.0, %v1773
  %v1775 = vpop.f32.mrb[0].mxu0
  %v1776 = vadd.f32 0.0, %v1775
  %1777 = vdwg.mxu0
  %v1778 = vadd.f32 %v1691, %v1774
  %v1779 = vadd.f32 %v1692, %v1776
  %1780 = vrot.lane.b32.xlu0 %v1258, 113
  %v1781 = vpop.permute.xlu0 %1780
  %1782 = vrot.lane.b32.xlu0 %v1259, 113
  %v1783 = vpop.permute.xlu0 %1782
  %v1784 = vsel %vm951, %v1781, %v1783
  %v1788 = vsel %vm951, %v1783, %v1781
  %v1789 = vmul.f32 %v1784, %v960
  %v1790 = vmul.f32 %v1788, %v964
  %v1792 = vsel %vm1294, %v1266, 0
  %1794 = vmatprep.subr.mxu0 %v1790
  %1795 = vmatpush1.msra.mxu0 %v1789
  %1796 = vmatprep.subr.mxu0 0.0
  %1797 = vmatpush1.msra.mxu0 0.0
  %1798 = vmatprep.subr.mxu0 0.0
  %1799 = vmatpush1.msra.mxu0 0.0
  %1800 = vmatprep.subr.mxu0 0.0
  %1801 = vmatpush1.msra.mxu0 0.0
  %1802 = vmatprep.subr.mxu0 0.0
  %1803 = vmatpush1.msra.mxu0 0.0
  %1804 = vmatprep.subr.mxu0 0.0
  %1805 = vmatpush1.msra.mxu0 0.0
  %1806 = vmatprep.subr.mxu0 0.0
  %1807 = vmatpush1.msra.mxu0 0.0
  %1808 = vmatprep.subr.mxu0 0.0
  %1809 = vmatpush1.msra.mxu0 0.0
  %1810 = vmatprep.subr.mxu0 0.0
  %1811 = vmatpush1.msra.mxu0 0.0
  %1812 = vmatprep.subr.mxu0 0.0
  %1813 = vmatpush1.msra.mxu0 0.0
  %1814 = vmatprep.subr.mxu0 0.0
  %1815 = vmatpush1.msra.mxu0 0.0
  %1816 = vmatprep.subr.mxu0 0.0
  %1817 = vmatpush1.msra.mxu0 0.0
  %1818 = vmatprep.subr.mxu0 0.0
  %1819 = vmatpush1.msra.mxu0 0.0
  %1820 = vmatprep.subr.mxu0 0.0
  %1821 = vmatpush1.msra.mxu0 0.0
  %1822 = vmatprep.subr.mxu0 0.0
  %1823 = vmatpush1.msra.mxu0 0.0
  %1824 = vmatprep.subr.mxu0 0.0
  %1825 = vmatpush1.msra.mxu0 0.0
  %1826 = vmatprep.subr.mxu0 0.0
  %1827 = vmatpush1.msra.mxu0 0.0
  %1828 = vmatprep.subr.mxu0 0.0
  %1829 = vmatpush1.msra.mxu0 0.0
  %1830 = vmatprep.subr.mxu0 0.0
  %1831 = vmatpush1.msra.mxu0 0.0
  %1832 = vmatprep.subr.mxu0 0.0
  %1833 = vmatpush1.msra.mxu0 0.0
  %1834 = vmatprep.subr.mxu0 0.0
  %1835 = vmatpush1.msra.mxu0 0.0
  %1836 = vmatprep.subr.mxu0 0.0
  %1837 = vmatpush1.msra.mxu0 0.0
  %1838 = vmatprep.subr.mxu0 0.0
  %1839 = vmatpush1.msra.mxu0 0.0
  %1840 = vmatprep.subr.mxu0 0.0
  %1841 = vmatpush1.msra.mxu0 0.0
  %1842 = vmatprep.subr.mxu0 0.0
  %1843 = vmatpush1.msra.mxu0 0.0
  %1844 = vmatprep.subr.mxu0 0.0
  %1845 = vmatpush1.msra.mxu0 0.0
  %1846 = vmatprep.subr.mxu0 0.0
  %1847 = vmatpush1.msra.mxu0 0.0
  %1848 = vmatprep.subr.mxu0 0.0
  %1849 = vmatpush1.msra.mxu0 0.0
  %1850 = vmatprep.subr.mxu0 0.0
  %1851 = vmatpush1.msra.mxu0 0.0
  %1852 = vmatprep.subr.mxu0 0.0
  %1853 = vmatpush1.msra.mxu0 0.0
  %1854 = vmatprep.subr.mxu0 0.0
  %1855 = vmatpush1.msra.mxu0 0.0
  %1856 = vmatprep.subr.mxu0 0.0
  %1857 = vmatpush1.msra.mxu0 0.0
  %1858 = vmatprep.mubr.f32.mxu0 0.0
  %1859 = vmatmul.mubr.f32.gmra.mrb[0].mxu0 %v1792
  %v1860 = vpop.f32.mrb[0].mxu0
  %v1861 = vadd.f32 0.0, %v1860
  %v1862 = vpop.f32.mrb[0].mxu0
  %v1863 = vadd.f32 0.0, %v1862
  %1864 = vdwg.mxu0
  %v1865 = vadd.f32 %v1778, %v1861
  %v1866 = vadd.f32 %v1779, %v1863
  %1867 = vrot.lane.b32.xlu0 %v1258, 112
  %v1868 = vpop.permute.xlu0 %1867
  %1869 = vrot.lane.b32.xlu0 %v1259, 112
  %v1870 = vpop.permute.xlu0 %1869
  %v1871 = vsel %vm1053, %v1868, %v1870
  %v1875 = vsel %vm1053, %v1870, %v1868
  %v1876 = vmul.f32 %v1871, %v1062
  %v1877 = vmul.f32 %v1875, %v1066
  %v1879 = vsel %vm1294, %v1267, 0
  %1881 = vmatprep.subr.mxu0 %v1877
  %1882 = vmatpush1.msra.mxu0 %v1876
  %1883 = vmatprep.subr.mxu0 0.0
  %1884 = vmatpush1.msra.mxu0 0.0
  %1885 = vmatprep.subr.mxu0 0.0
  %1886 = vmatpush1.msra.mxu0 0.0
  %1887 = vmatprep.subr.mxu0 0.0
  %1888 = vmatpush1.msra.mxu0 0.0
  %1889 = vmatprep.subr.mxu0 0.0
  %1890 = vmatpush1.msra.mxu0 0.0
  %1891 = vmatprep.subr.mxu0 0.0
  %1892 = vmatpush1.msra.mxu0 0.0
  %1893 = vmatprep.subr.mxu0 0.0
  %1894 = vmatpush1.msra.mxu0 0.0
  %1895 = vmatprep.subr.mxu0 0.0
  %1896 = vmatpush1.msra.mxu0 0.0
  %1897 = vmatprep.subr.mxu0 0.0
  %1898 = vmatpush1.msra.mxu0 0.0
  %1899 = vmatprep.subr.mxu0 0.0
  %1900 = vmatpush1.msra.mxu0 0.0
  %1901 = vmatprep.subr.mxu0 0.0
  %1902 = vmatpush1.msra.mxu0 0.0
  %1903 = vmatprep.subr.mxu0 0.0
  %1904 = vmatpush1.msra.mxu0 0.0
  %1905 = vmatprep.subr.mxu0 0.0
  %1906 = vmatpush1.msra.mxu0 0.0
  %1907 = vmatprep.subr.mxu0 0.0
  %1908 = vmatpush1.msra.mxu0 0.0
  %1909 = vmatprep.subr.mxu0 0.0
  %1910 = vmatpush1.msra.mxu0 0.0
  %1911 = vmatprep.subr.mxu0 0.0
  %1912 = vmatpush1.msra.mxu0 0.0
  %1913 = vmatprep.subr.mxu0 0.0
  %1914 = vmatpush1.msra.mxu0 0.0
  %1915 = vmatprep.subr.mxu0 0.0
  %1916 = vmatpush1.msra.mxu0 0.0
  %1917 = vmatprep.subr.mxu0 0.0
  %1918 = vmatpush1.msra.mxu0 0.0
  %1919 = vmatprep.subr.mxu0 0.0
  %1920 = vmatpush1.msra.mxu0 0.0
  %1921 = vmatprep.subr.mxu0 0.0
  %1922 = vmatpush1.msra.mxu0 0.0
  %1923 = vmatprep.subr.mxu0 0.0
  %1924 = vmatpush1.msra.mxu0 0.0
  %1925 = vmatprep.subr.mxu0 0.0
  %1926 = vmatpush1.msra.mxu0 0.0
  %1927 = vmatprep.subr.mxu0 0.0
  %1928 = vmatpush1.msra.mxu0 0.0
  %1929 = vmatprep.subr.mxu0 0.0
  %1930 = vmatpush1.msra.mxu0 0.0
  %1931 = vmatprep.subr.mxu0 0.0
  %1932 = vmatpush1.msra.mxu0 0.0
  %1933 = vmatprep.subr.mxu0 0.0
  %1934 = vmatpush1.msra.mxu0 0.0
  %1935 = vmatprep.subr.mxu0 0.0
  %1936 = vmatpush1.msra.mxu0 0.0
  %1937 = vmatprep.subr.mxu0 0.0
  %1938 = vmatpush1.msra.mxu0 0.0
  %1939 = vmatprep.subr.mxu0 0.0
  %1940 = vmatpush1.msra.mxu0 0.0
  %1941 = vmatprep.subr.mxu0 0.0
  %1942 = vmatpush1.msra.mxu0 0.0
  %1943 = vmatprep.subr.mxu0 0.0
  %1944 = vmatpush1.msra.mxu0 0.0
  %1945 = vmatprep.mubr.f32.mxu0 0.0
  %1946 = vmatmul.mubr.f32.gmra.mrb[0].mxu0 %v1879
  %v1947 = vpop.f32.mrb[0].mxu0
  %v1948 = vadd.f32 0.0, %v1947
  %v1949 = vpop.f32.mrb[0].mxu0
  %v1950 = vadd.f32 0.0, %v1949
  %1951 = vdwg.mxu0
  %v1952 = vadd.f32 %v1865, %v1948
  %v1953 = vadd.f32 %v1866, %v1950
  %1954 = vrot.lane.b32.xlu0 %v1258, 111
  %v1955 = vpop.permute.xlu0 %1954
  %1956 = vrot.lane.b32.xlu0 %v1259, 111
  %v1957 = vpop.permute.xlu0 %1956
  %v1958 = vsel %vm1155, %v1955, %v1957
  %v1962 = vsel %vm1155, %v1957, %v1955
  %v1963 = vmul.f32 %v1958, %v1164
  %v1964 = vmul.f32 %v1962, %v1168
  %v1966 = vsel %vm1294, %v1268, 0
  %1968 = vmatprep.subr.mxu0 %v1964
  %1969 = vmatpush1.msra.mxu0 %v1963
  %1970 = vmatprep.subr.mxu0 0.0
  %1971 = vmatpush1.msra.mxu0 0.0
  %1972 = vmatprep.subr.mxu0 0.0
  %1973 = vmatpush1.msra.mxu0 0.0
  %1974 = vmatprep.subr.mxu0 0.0
  %1975 = vmatpush1.msra.mxu0 0.0
  %1976 = vmatprep.subr.mxu0 0.0
  %1977 = vmatpush1.msra.mxu0 0.0
  %1978 = vmatprep.subr.mxu0 0.0
  %1979 = vmatpush1.msra.mxu0 0.0
  %1980 = vmatprep.subr.mxu0 0.0
  %1981 = vmatpush1.msra.mxu0 0.0
  %1982 = vmatprep.subr.mxu0 0.0
  %1983 = vmatpush1.msra.mxu0 0.0
  %1984 = vmatprep.subr.mxu0 0.0
  %1985 = vmatpush1.msra.mxu0 0.0
  %1986 = vmatprep.subr.mxu0 0.0
  %1987 = vmatpush1.msra.mxu0 0.0
  %1988 = vmatprep.subr.mxu0 0.0
  %1989 = vmatpush1.msra.mxu0 0.0
  %1990 = vmatprep.subr.mxu0 0.0
  %1991 = vmatpush1.msra.mxu0 0.0
  %1992 = vmatprep.subr.mxu0 0.0
  %1993 = vmatpush1.msra.mxu0 0.0
  %1994 = vmatprep.subr.mxu0 0.0
  %1995 = vmatpush1.msra.mxu0 0.0
  %1996 = vmatprep.subr.mxu0 0.0
  %1997 = vmatpush1.msra.mxu0 0.0
  %1998 = vmatprep.subr.mxu0 0.0
  %1999 = vmatpush1.msra.mxu0 0.0
  %2000 = vmatprep.subr.mxu0 0.0
  %2001 = vmatpush1.msra.mxu0 0.0
  %2002 = vmatprep.subr.mxu0 0.0
  %2003 = vmatpush1.msra.mxu0 0.0
  %2004 = vmatprep.subr.mxu0 0.0
  %2005 = vmatpush1.msra.mxu0 0.0
  %2006 = vmatprep.subr.mxu0 0.0
  %2007 = vmatpush1.msra.mxu0 0.0
  %2008 = vmatprep.subr.mxu0 0.0
  %2009 = vmatpush1.msra.mxu0 0.0
  %2010 = vmatprep.subr.mxu0 0.0
  %2011 = vmatpush1.msra.mxu0 0.0
  %2012 = vmatprep.subr.mxu0 0.0
  %2013 = vmatpush1.msra.mxu0 0.0
  %2014 = vmatprep.subr.mxu0 0.0
  %2015 = vmatpush1.msra.mxu0 0.0
  %2016 = vmatprep.subr.mxu0 0.0
  %2017 = vmatpush1.msra.mxu0 0.0
  %2018 = vmatprep.subr.mxu0 0.0
  %2019 = vmatpush1.msra.mxu0 0.0
  %2020 = vmatprep.subr.mxu0 0.0
  %2021 = vmatpush1.msra.mxu0 0.0
  %2022 = vmatprep.subr.mxu0 0.0
  %2023 = vmatpush1.msra.mxu0 0.0
  %2024 = vmatprep.subr.mxu0 0.0
  %2025 = vmatpush1.msra.mxu0 0.0
  %2026 = vmatprep.subr.mxu0 0.0
  %2027 = vmatpush1.msra.mxu0 0.0
  %2028 = vmatprep.subr.mxu0 0.0
  %2029 = vmatpush1.msra.mxu0 0.0
  %2030 = vmatprep.subr.mxu0 0.0
  %2031 = vmatpush1.msra.mxu0 0.0
  %2032 = vmatprep.mubr.f32.mxu0 0.0
  %2033 = vmatmul.mubr.f32.gmra.mrb[0].mxu0 %v1966
  %v2034 = vpop.f32.mrb[0].mxu0
  %v2035 = vadd.f32 0.0, %v2034
  %v2036 = vpop.f32.mrb[0].mxu0
  %v2037 = vadd.f32 0.0, %v2036
  %2038 = vdwg.mxu0
  %v2039 = vadd.f32 %v1952, %v2035
  %v2040 = vadd.f32 %v1953, %v2037
  %2042 = vset.pattern.permute.xlu0 0
  %2043 = vperm.xlu0 %2042, %v1269
  %v2044 = vpop.permute.xlu0 %2043
  %v2046 = vadd.f32 %v2039, %v2044
  %v2047 = vadd.f32 %v2040, %v2044
  %v2048 = vadd.f32 %v2046, %v1258
  %v2049 = vadd.f32 %v2047, %v1259
  %v2050 = vmax.f32 %v2048, 0.0
  %v2051 = vmax.f32 %v2049, 0.0
  %v2052 = vld [vmem:[%s2] sm:$0xff]
  %v2053 = vld [vmem:[%s2 + $0x8] sm:$0xff]
  %v2054 = vld [vmem:[%s2 + $0x10] sm:$0xff]
  %v2055 = vld [vmem:[%s2 + $0x18] sm:$0xff]
  %v2056 = vld [vmem:[%s2 + $0x20] sm:$0xff]
  %v2057 = vld [vmem:[%s2 + $0x28] sm:$0xff]
  %v2058 = vld [vmem:[%s2 + $0x30] sm:$0xff]
  %v2059 = vld [vmem:[%s2 + $0x38] sm:$0xff]
  %v2060 = vld [vmem:[%s2 + $0x40] sm:$0xff]
  %v2061 = vld [vmem:[%s2 + $0x48] sm:$0xff]
  %v2062 = vld [vmem:[%s2 + $0x50] sm:$0xff]
  %v2063 = vld [vmem:[%s2 + $0x58] sm:$0xff]
  %v2064 = vld [vmem:[%s2 + $0x60] sm:$0xff]
  %v2065 = vld [vmem:[%s2 + $0x68] sm:$0xff]
  %v2066 = vld [vmem:[%s2 + $0x70] sm:$0xff]
  %v2067 = vld [vmem:[%s2 + $0x78] sm:$0xff]
  %v2068 = vld [vmem:[%s2 + $0x80] sm:$0xff]
  %v2069 = vld [vmem:[%s2 + $0x88] sm:$0xff]
  %v2070 = vld [vmem:[%s2 + $0x90] sm:$0xff]
  %v2071 = vld [vmem:[%s2 + $0x98] sm:$0xff]
  %v2072 = vld [vmem:[%s2 + $0xa0] sm:$0xff]
  %v2073 = vld [vmem:[%s2 + $0xa8] sm:$0xff]
  %v2074 = vld [vmem:[%s2 + $0xb0] sm:$0xff]
  %v2075 = vld [vmem:[%s2 + $0xb8] sm:$0xff]
  %v2076 = vld [vmem:[%s2 + $0xc0] sm:$0xff]
  %v2077 = vld [vmem:[%s2 + $0xc8] sm:$0xff]
  %v2078 = vld [vmem:[%s2 + $0xd0] sm:$0xff]
  %v2079 = vld [vmem:[%s2 + $0xd8] sm:$0xff]
  %v2080 = vld [vmem:[%s2 + $0xe0] sm:$0xff]
  %v2081 = vld [vmem:[%s2 + $0xe8] sm:$0xff]
  %v2082 = vld [vmem:[%s2 + $0xf0] sm:$0xff]
  %v2083 = vld [vmem:[%s2 + $0xf8] sm:$0xff]
  %v2084 = vld [vmem:[%s2 + $0x100] sm:$0xff]
  %v2085 = vld [vmem:[%s2 + $0x108] sm:$0xff]
  %v2086 = vld [vmem:[%s2 + $0x110] sm:$0xff]
  %v2087 = vld [vmem:[%s2 + $0x118] sm:$0xff]
  %v2088 = vld [vmem:[%s2 + $0x120] sm:$0xff]
  %v2089 = vld [vmem:[%s2 + $0x128] sm:$0xff]
  %v2090 = vld [vmem:[%s2 + $0x130] sm:$0xff]
  %v2091 = vld [vmem:[%s2 + $0x138] sm:$0xff]
  %v2092 = vld [vmem:[%s2 + $0x140] sm:$0xff]
  %v2093 = vld [vmem:[%s2 + $0x148] sm:$0xff]
  %v2094 = vld [vmem:[%s2 + $0x150] sm:$0xff]
  %v2095 = vld [vmem:[%s2 + $0x158] sm:$0xff]
  %v2096 = vld [vmem:[%s2 + $0x160] sm:$0xff]
  %v2097 = vld [vmem:[%s2 + $0x168] sm:$0xff]
  %v2098 = vld [vmem:[%s2 + $0x170] sm:$0xff]
  %v2099 = vld [vmem:[%s2 + $0x178] sm:$0xff]
  %v2100 = vld [vmem:[%s2 + $0x180] sm:$0xff]
  %v2101 = vld [vmem:[%s2 + $0x188] sm:$0xff]
  %v2102 = vld [vmem:[%s2 + $0x190] sm:$0xff]
  %v2103 = vld [vmem:[%s2 + $0x198] sm:$0xff]
  %v2104 = vld [vmem:[%s2 + $0x1a0] sm:$0xff]
  %v2105 = vld [vmem:[%s2 + $0x1a8] sm:$0xff]
  %v2106 = vld [vmem:[%s2 + $0x1b0] sm:$0xff]
  %v2107 = vld [vmem:[%s2 + $0x1b8] sm:$0xff]
  %v2108 = vld [vmem:[%s2 + $0x1c0] sm:$0xff]
  %v2109 = vld [vmem:[%s2 + $0x1c8] sm:$0xff]
  %v2110 = vld [vmem:[%s2 + $0x1d0] sm:$0xff]
  %v2111 = vld [vmem:[%s2 + $0x1d8] sm:$0xff]
  %v2112 = vld [vmem:[%s2 + $0x1e0] sm:$0xff]
  %v2113 = vld [vmem:[%s2 + $0x1e8] sm:$0xff]
  %v2114 = vld [vmem:[%s2 + $0x1f0] sm:$0xff]
  %v2115 = vld [vmem:[%s2 + $0x1f8] sm:$0xff]
  %v2116 = vld [vmem:[%s13] sm:$0xff]
  %v2117 = vld [vmem:[%s13 + $0x8] sm:$0xff]
  %v2119 = vsel %vm1294, %v2116, 0
  %v2122 = vsel %vm1294, %v2117, 0
  %2124 = vmatprep.subr.mxu0 %v2051
  %2125 = vmatpush1.msra.mxu0 %v2050
  %2126 = vmatprep.subr.mxu0 0.0
  %2127 = vmatpush1.msra.mxu0 0.0
  %2128 = vmatprep.subr.mxu0 0.0
  %2129 = vmatpush1.msra.mxu0 0.0
  %2130 = vmatprep.subr.mxu0 0.0
  %2131 = vmatpush1.msra.mxu0 0.0
  %2132 = vmatprep.subr.mxu0 0.0
  %2133 = vmatpush1.msra.mxu0 0.0
  %2134 = vmatprep.subr.mxu0 0.0
  %2135 = vmatpush1.msra.mxu0 0.0
  %2136 = vmatprep.subr.mxu0 0.0
  %2137 = vmatpush1.msra.mxu0 0.0
  %2138 = vmatprep.subr.mxu0 0.0
  %2139 = vmatpush1.msra.mxu0 0.0
  %2140 = vmatprep.subr.mxu0 0.0
  %2141 = vmatpush1.msra.mxu0 0.0
  %2142 = vmatprep.subr.mxu0 0.0
  %2143 = vmatpush1.msra.mxu0 0.0
  %2144 = vmatprep.subr.mxu0 0.0
  %2145 = vmatpush1.msra.mxu0 0.0
  %2146 = vmatprep.subr.mxu0 0.0
  %2147 = vmatpush1.msra.mxu0 0.0
  %2148 = vmatprep.subr.mxu0 0.0
  %2149 = vmatpush1.msra.mxu0 0.0
  %2150 = vmatprep.subr.mxu0 0.0
  %2151 = vmatpush1.msra.mxu0 0.0
  %2152 = vmatprep.subr.mxu0 0.0
  %2153 = vmatpush1.msra.mxu0 0.0
  %2154 = vmatprep.subr.mxu0 0.0
  %2155 = vmatpush1.msra.mxu0 0.0
  %2156 = vmatprep.subr.mxu0 0.0
  %2157 = vmatpush1.msra.mxu0 0.0
  %2158 = vmatprep.subr.mxu0 0.0
  %2159 = vmatpush1.msra.mxu0 0.0
  %2160 = vmatprep.subr.mxu0 0.0
  %2161 = vmatpush1.msra.mxu0 0.0
  %2162 = vmatprep.subr.mxu0 0.0
  %2163 = vmatpush1.msra.mxu0 0.0
  %2164 = vmatprep.subr.mxu0 0.0
  %2165 = vmatpush1.msra.mxu0 0.0
  %2166 = vmatprep.subr.mxu0 0.0
  %2167 = vmatpush1.msra.mxu0 0.0
  %2168 = vmatprep.subr.mxu0 0.0
  %2169 = vmatpush1.msra.mxu0 0.0
  %2170 = vmatprep.subr.mxu0 0.0
  %2171 = vmatpush1.msra.mxu0 0.0
  %2172 = vmatprep.subr.mxu0 0.0
  %2173 = vmatpush1.msra.mxu0 0.0
  %2174 = vmatprep.subr.mxu0 0.0
  %2175 = vmatpush1.msra.mxu0 0.0
  %2176 = vmatprep.subr.mxu0 0.0
  %2177 = vmatpush1.msra.mxu0 0.0
  %2178 = vmatprep.subr.mxu0 0.0
  %2179 = vmatpush1.msra.mxu0 0.0
  %2180 = vmatprep.subr.mxu0 0.0
  %2181 = vmatpush1.msra.mxu0 0.0
  %2182 = vmatprep.subr.mxu0 0.0
  %2183 = vmatpush1.msra.mxu0 0.0
  %2184 = vmatprep.subr.mxu0 0.0
  %2185 = vmatpush1.msra.mxu0 0.0
  %2186 = vmatprep.subr.mxu0 0.0
  %2187 = vmatpush1.msra.mxu0 0.0
  %2188 = vmatprep.mubr.f32.mxu0 0.0
  %2189 = vmatmul.mubr.f32.gmra.mrb[0].mxu0 %v2119
  %v2190 = vpop.f32.mrb[0].mxu0
  %v2191 = vadd.f32 0.0, %v2190
  %v2192 = vpop.f32.mrb[0].mxu0
  %v2193 = vadd.f32 0.0, %v2192
  %2194 = vmatprep.mubr.f32.mxu0 0.0
  %2195 = vmatmul.mubr.f32.gmra.mrb[0].mxu0 %v2122
  %v2196 = vpop.f32.mrb[0].mxu0
  %v2197 = vadd.f32 0.0, %v2196
  %v2198 = vpop.f32.mrb[0].mxu0
  %v2199 = vadd.f32 0.0, %v2198
  %2200 = vdwg.mxu0
  %v2201 = vld [vmem:[%s14] sm:$0xff]
  %v2202 = vld [vmem:[%s14 + $0x8] sm:$0xff]
  %2204 = vset.pattern.permute.xlu0 0
  %2205 = vperm.xlu0 %2204, %v2201
  %v2206 = vpop.permute.xlu0 %2205
  %2209 = vset.pattern.permute.xlu0 0
  %2210 = vperm.xlu0 %2209, %v2202
  %v2211 = vpop.permute.xlu0 %2210
  %2213 = vmatprep.subr.mxu0 %v2053
  %2214 = vmatpush1.msra.mxu0 %v2052
  %2215 = vmatprep.subr.mxu0 %v2055
  %2216 = vmatpush1.msra.mxu0 %v2054
  %2217 = vmatprep.subr.mxu0 %v2057
  %2218 = vmatpush1.msra.mxu0 %v2056
  %2219 = vmatprep.subr.mxu0 %v2059
  %2220 = vmatpush1.msra.mxu0 %v2058
  %2221 = vmatprep.subr.mxu0 %v2061
  %2222 = vmatpush1.msra.mxu0 %v2060
  %2223 = vmatprep.subr.mxu0 %v2063
  %2224 = vmatpush1.msra.mxu0 %v2062
  %2225 = vmatprep.subr.mxu0 %v2065
  %2226 = vmatpush1.msra.mxu0 %v2064
  %2227 = vmatprep.subr.mxu0 %v2067
  %2228 = vmatpush1.msra.mxu0 %v2066
  %2229 = vmatprep.subr.mxu0 %v2069
  %2230 = vmatpush1.msra.mxu0 %v2068
  %2231 = vmatprep.subr.mxu0 %v2071
  %2232 = vmatpush1.msra.mxu0 %v2070
  %2233 = vmatprep.subr.mxu0 %v2073
  %2234 = vmatpush1.msra.mxu0 %v2072
  %2235 = vmatprep.subr.mxu0 %v2075
  %2236 = vmatpush1.msra.mxu0 %v2074
  %2237 = vmatprep.subr.mxu0 %v2077
  %2238 = vmatpush1.msra.mxu0 %v2076
  %2239 = vmatprep.subr.mxu0 %v2079
  %2240 = vmatpush1.msra.mxu0 %v2078
  %2241 = vmatprep.subr.mxu0 %v2081
  %2242 = vmatpush1.msra.mxu0 %v2080
  %2243 = vmatprep.subr.mxu0 %v2083
  %2244 = vmatpush1.msra.mxu0 %v2082
  %2245 = vmatprep.subr.mxu0 %v2085
  %2246 = vmatpush1.msra.mxu0 %v2084
  %2247 = vmatprep.subr.mxu0 %v2087
  %2248 = vmatpush1.msra.mxu0 %v2086
  %2249 = vmatprep.subr.mxu0 %v2089
  %2250 = vmatpush1.msra.mxu0 %v2088
  %2251 = vmatprep.subr.mxu0 %v2091
  %2252 = vmatpush1.msra.mxu0 %v2090
  %2253 = vmatprep.subr.mxu0 %v2093
  %2254 = vmatpush1.msra.mxu0 %v2092
  %2255 = vmatprep.subr.mxu0 %v2095
  %2256 = vmatpush1.msra.mxu0 %v2094
  %2257 = vmatprep.subr.mxu0 %v2097
  %2258 = vmatpush1.msra.mxu0 %v2096
  %2259 = vmatprep.subr.mxu0 %v2099
  %2260 = vmatpush1.msra.mxu0 %v2098
  %2261 = vmatprep.subr.mxu0 %v2101
  %2262 = vmatpush1.msra.mxu0 %v2100
  %2263 = vmatprep.subr.mxu0 %v2103
  %2264 = vmatpush1.msra.mxu0 %v2102
  %2265 = vmatprep.subr.mxu0 %v2105
  %2266 = vmatpush1.msra.mxu0 %v2104
  %2267 = vmatprep.subr.mxu0 %v2107
  %2268 = vmatpush1.msra.mxu0 %v2106
  %2269 = vmatprep.subr.mxu0 %v2109
  %2270 = vmatpush1.msra.mxu0 %v2108
  %2271 = vmatprep.subr.mxu0 %v2111
  %2272 = vmatpush1.msra.mxu0 %v2110
  %2273 = vmatprep.subr.mxu0 %v2113
  %2274 = vmatpush1.msra.mxu0 %v2112
  %2275 = vmatprep.subr.mxu0 %v2115
  %2276 = vmatpush1.msra.mxu0 %v2114
  %2277 = vmatprep.mubr.f32.mxu0 %v2193
  %2278 = vmatmul.mubr.f32.gmra.mrb[0].mxu0 %v2191
  %v2279 = vpop.f32.mrb[0].mxu0
  %v2280 = vadd.f32 %v2206, %v2279
  %v2281 = vpop.f32.mrb[0].mxu0
  %v2282 = vadd.f32 %v2206, %v2281
  %2283 = vmatprep.mubr.f32.mxu0 %v2199
  %2284 = vmatmul.mubr.f32.gmra.mrb[0].mxu0 %v2197
  %v2285 = vpop.f32.mrb[0].mxu0
  %v2286 = vadd.f32 %v2211, %v2285
  %v2287 = vpop.f32.mrb[0].mxu0
  %v2288 = vadd.f32 %v2211, %v2287
  %2289 = vdwg.mxu0
  %v2290 = vld [vmem:[%s15] sm:$0xff]
  %v2291 = vld [vmem:[%s15 + $0x8] sm:$0xff]
  %v2293 = vsel %vm386, %v2290, 0
  %v2296 = vsel %vm386, %v2291, 0
  %2298 = vmatprep.subr.mxu0 %v2282
  %2299 = vmatpush1.msra.mxu0 %v2280
  %2300 = vmatprep.subr.mxu0 %v2288
  %2301 = vmatpush1.msra.mxu0 %v2286
  %2302 = vmatprep.subr.mxu0 0.0
  %2303 = vmatpush1.msra.mxu0 0.0
  %2304 = vmatprep.subr.mxu0 0.0
  %2305 = vmatpush1.msra.mxu0 0.0
  %2306 = vmatprep.subr.mxu0 0.0
  %2307 = vmatpush1.msra.mxu0 0.0
  %2308 = vmatprep.subr.mxu0 0.0
  %2309 = vmatpush1.msra.mxu0 0.0
  %2310 = vmatprep.subr.mxu0 0.0
  %2311 = vmatpush1.msra.mxu0 0.0
  %2312 = vmatprep.subr.mxu0 0.0
  %2313 = vmatpush1.msra.mxu0 0.0
  %2314 = vmatprep.subr.mxu0 0.0
  %2315 = vmatpush1.msra.mxu0 0.0
  %2316 = vmatprep.subr.mxu0 0.0
  %2317 = vmatpush1.msra.mxu0 0.0
  %2318 = vmatprep.subr.mxu0 0.0
  %2319 = vmatpush1.msra.mxu0 0.0
  %2320 = vmatprep.subr.mxu0 0.0
  %2321 = vmatpush1.msra.mxu0 0.0
  %2322 = vmatprep.subr.mxu0 0.0
  %2323 = vmatpush1.msra.mxu0 0.0
  %2324 = vmatprep.subr.mxu0 0.0
  %2325 = vmatpush1.msra.mxu0 0.0
  %2326 = vmatprep.subr.mxu0 0.0
  %2327 = vmatpush1.msra.mxu0 0.0
  %2328 = vmatprep.subr.mxu0 0.0
  %2329 = vmatpush1.msra.mxu0 0.0
  %2330 = vmatprep.subr.mxu0 0.0
  %2331 = vmatpush1.msra.mxu0 0.0
  %2332 = vmatprep.subr.mxu0 0.0
  %2333 = vmatpush1.msra.mxu0 0.0
  %2334 = vmatprep.subr.mxu0 0.0
  %2335 = vmatpush1.msra.mxu0 0.0
  %2336 = vmatprep.subr.mxu0 0.0
  %2337 = vmatpush1.msra.mxu0 0.0
  %2338 = vmatprep.subr.mxu0 0.0
  %2339 = vmatpush1.msra.mxu0 0.0
  %2340 = vmatprep.subr.mxu0 0.0
  %2341 = vmatpush1.msra.mxu0 0.0
  %2342 = vmatprep.subr.mxu0 0.0
  %2343 = vmatpush1.msra.mxu0 0.0
  %2344 = vmatprep.subr.mxu0 0.0
  %2345 = vmatpush1.msra.mxu0 0.0
  %2346 = vmatprep.subr.mxu0 0.0
  %2347 = vmatpush1.msra.mxu0 0.0
  %2348 = vmatprep.subr.mxu0 0.0
  %2349 = vmatpush1.msra.mxu0 0.0
  %2350 = vmatprep.subr.mxu0 0.0
  %2351 = vmatpush1.msra.mxu0 0.0
  %2352 = vmatprep.subr.mxu0 0.0
  %2353 = vmatpush1.msra.mxu0 0.0
  %2354 = vmatprep.subr.mxu0 0.0
  %2355 = vmatpush1.msra.mxu0 0.0
  %2356 = vmatprep.subr.mxu0 0.0
  %2357 = vmatpush1.msra.mxu0 0.0
  %2358 = vmatprep.subr.mxu0 0.0
  %2359 = vmatpush1.msra.mxu0 0.0
  %2360 = vmatprep.subr.mxu0 0.0
  %2361 = vmatpush1.msra.mxu0 0.0
  %2362 = vmatprep.mubr.f32.mxu0 0.0
  %2363 = vmatmul.mubr.f32.gmra.mrb[0].mxu0 %v2293
  %v2364 = vpop.f32.mrb[0].mxu0
  %v2365 = vadd.f32 0.0, %v2364
  %v2366 = vpop.f32.mrb[0].mxu0
  %v2367 = vadd.f32 0.0, %v2366
  %2368 = vmatprep.mubr.f32.mxu0 0.0
  %2369 = vmatmul.mubr.f32.gmra.mrb[0].mxu0 %v2296
  %v2370 = vpop.f32.mrb[0].mxu0
  %v2371 = vadd.f32 0.0, %v2370
  %v2372 = vpop.f32.mrb[0].mxu0
  %v2373 = vadd.f32 0.0, %v2372
  %2374 = vdwg.mxu0
  %v2375 = vld [vmem:[%s16] sm:$0xff]
  %v2376 = vld [vmem:[%s16 + $0x8] sm:$0xff]
  %2378 = vset.pattern.permute.xlu0 0
  %2379 = vperm.xlu0 %2378, %v2375
  %v2380 = vpop.permute.xlu0 %2379
  %2383 = vset.pattern.permute.xlu0 0
  %2384 = vperm.xlu0 %2383, %v2376
  %v2385 = vpop.permute.xlu0 %2384
  %2387 = vmatprep.subr.mxu0 %v2053
  %2388 = vmatpush1.msra.mxu0 %v2052
  %2389 = vmatprep.subr.mxu0 %v2055
  %2390 = vmatpush1.msra.mxu0 %v2054
  %2391 = vmatprep.subr.mxu0 %v2057
  %2392 = vmatpush1.msra.mxu0 %v2056
  %2393 = vmatprep.subr.mxu0 %v2059
  %2394 = vmatpush1.msra.mxu0 %v2058
  %2395 = vmatprep.subr.mxu0 %v2061
  %2396 = vmatpush1.msra.mxu0 %v2060
  %2397 = vmatprep.subr.mxu0 %v2063
  %2398 = vmatpush1.msra.mxu0 %v2062
  %2399 = vmatprep.subr.mxu0 %v2065
  %2400 = vmatpush1.msra.mxu0 %v2064
  %2401 = vmatprep.subr.mxu0 %v2067
  %2402 = vmatpush1.msra.mxu0 %v2066
  %2403 = vmatprep.subr.mxu0 %v2069
  %2404 = vmatpush1.msra.mxu0 %v2068
  %2405 = vmatprep.subr.mxu0 %v2071
  %2406 = vmatpush1.msra.mxu0 %v2070
  %2407 = vmatprep.subr.mxu0 %v2073
  %2408 = vmatpush1.msra.mxu0 %v2072
  %2409 = vmatprep.subr.mxu0 %v2075
  %2410 = vmatpush1.msra.mxu0 %v2074
  %2411 = vmatprep.subr.mxu0 %v2077
  %2412 = vmatpush1.msra.mxu0 %v2076
  %2413 = vmatprep.subr.mxu0 %v2079
  %2414 = vmatpush1.msra.mxu0 %v2078
  %2415 = vmatprep.subr.mxu0 %v2081
  %2416 = vmatpush1.msra.mxu0 %v2080
  %2417 = vmatprep.subr.mxu0 %v2083
  %2418 = vmatpush1.msra.mxu0 %v2082
  %2419 = vmatprep.subr.mxu0 %v2085
  %2420 = vmatpush1.msra.mxu0 %v2084
  %2421 = vmatprep.subr.mxu0 %v2087
  %2422 = vmatpush1.msra.mxu0 %v2086
  %2423 = vmatprep.subr.mxu0 %v2089
  %2424 = vmatpush1.msra.mxu0 %v2088
  %2425 = vmatprep.subr.mxu0 %v2091
  %2426 = vmatpush1.msra.mxu0 %v2090
  %2427 = vmatprep.subr.mxu0 %v2093
  %2428 = vmatpush1.msra.mxu0 %v2092
  %2429 = vmatprep.subr.mxu0 %v2095
  %2430 = vmatpush1.msra.mxu0 %v2094
  %2431 = vmatprep.subr.mxu0 %v2097
  %2432 = vmatpush1.msra.mxu0 %v2096
  %2433 = vmatprep.subr.mxu0 %v2099
  %2434 = vmatpush1.msra.mxu0 %v2098
  %2435 = vmatprep.subr.mxu0 %v2101
  %2436 = vmatpush1.msra.mxu0 %v2100
  %2437 = vmatprep.subr.mxu0 %v2103
  %2438 = vmatpush1.msra.mxu0 %v2102
  %2439 = vmatprep.subr.mxu0 %v2105
  %2440 = vmatpush1.msra.mxu0 %v2104
  %2441 = vmatprep.subr.mxu0 %v2107
  %2442 = vmatpush1.msra.mxu0 %v2106
  %2443 = vmatprep.subr.mxu0 %v2109
  %2444 = vmatpush1.msra.mxu0 %v2108
  %2445 = vmatprep.subr.mxu0 %v2111
  %2446 = vmatpush1.msra.mxu0 %v2110
  %2447 = vmatprep.subr.mxu0 %v2113
  %2448 = vmatpush1.msra.mxu0 %v2112
  %2449 = vmatprep.subr.mxu0 %v2115
  %2450 = vmatpush1.msra.mxu0 %v2114
  %2451 = vmatprep.mubr.f32.mxu0 %v2367
  %2452 = vmatmul.mubr.f32.gmra.mrb[0].mxu0 %v2365
  %v2453 = vpop.f32.mrb[0].mxu0
  %v2454 = vadd.f32 %v2380, %v2453
  %v2455 = vpop.f32.mrb[0].mxu0
  %v2456 = vadd.f32 %v2380, %v2455
  %2457 = vmatprep.mubr.f32.mxu0 %v2373
  %2458 = vmatmul.mubr.f32.gmra.mrb[0].mxu0 %v2371
  %v2459 = vpop.f32.mrb[0].mxu0
  %v2460 = vadd.f32 %v2385, %v2459
  %v2461 = vpop.f32.mrb[0].mxu0
  %v2462 = vadd.f32 %v2385, %v2461
  %2463 = vdwg.mxu0
  %v2464 = vld [vmem:[%s17] sm:$0xff]
  %v2466 = vsel %vm386, %v2464, 0
  %2468 = vmatprep.subr.mxu0 %v2456
  %2469 = vmatpush1.msra.mxu0 %v2454
  %2470 = vmatprep.subr.mxu0 %v2462
  %2471 = vmatpush1.msra.mxu0 %v2460
  %2472 = vmatprep.subr.mxu0 0.0
  %2473 = vmatpush1.msra.mxu0 0.0
  %2474 = vmatprep.subr.mxu0 0.0
  %2475 = vmatpush1.msra.mxu0 0.0
  %2476 = vmatprep.subr.mxu0 0.0
  %2477 = vmatpush1.msra.mxu0 0.0
  %2478 = vmatprep.subr.mxu0 0.0
  %2479 = vmatpush1.msra.mxu0 0.0
  %2480 = vmatprep.subr.mxu0 0.0
  %2481 = vmatpush1.msra.mxu0 0.0
  %2482 = vmatprep.subr.mxu0 0.0
  %2483 = vmatpush1.msra.mxu0 0.0
  %2484 = vmatprep.subr.mxu0 0.0
  %2485 = vmatpush1.msra.mxu0 0.0
  %2486 = vmatprep.subr.mxu0 0.0
  %2487 = vmatpush1.msra.mxu0 0.0
  %2488 = vmatprep.subr.mxu0 0.0
  %2489 = vmatpush1.msra.mxu0 0.0
  %2490 = vmatprep.subr.mxu0 0.0
  %2491 = vmatpush1.msra.mxu0 0.0
  %2492 = vmatprep.subr.mxu0 0.0
  %2493 = vmatpush1.msra.mxu0 0.0
  %2494 = vmatprep.subr.mxu0 0.0
  %2495 = vmatpush1.msra.mxu0 0.0
  %2496 = vmatprep.subr.mxu0 0.0
  %2497 = vmatpush1.msra.mxu0 0.0
  %2498 = vmatprep.subr.mxu0 0.0
  %2499 = vmatpush1.msra.mxu0 0.0
  %2500 = vmatprep.subr.mxu0 0.0
  %2501 = vmatpush1.msra.mxu0 0.0
  %2502 = vmatprep.subr.mxu0 0.0
  %2503 = vmatpush1.msra.mxu0 0.0
  %2504 = vmatprep.subr.mxu0 0.0
  %2505 = vmatpush1.msra.mxu0 0.0
  %2506 = vmatprep.subr.mxu0 0.0
  %2507 = vmatpush1.msra.mxu0 0.0
  %2508 = vmatprep.subr.mxu0 0.0
  %2509 = vmatpush1.msra.mxu0 0.0
  %2510 = vmatprep.subr.mxu0 0.0
  %2511 = vmatpush1.msra.mxu0 0.0
  %2512 = vmatprep.subr.mxu0 0.0
  %2513 = vmatpush1.msra.mxu0 0.0
  %2514 = vmatprep.subr.mxu0 0.0
  %2515 = vmatpush1.msra.mxu0 0.0
  %2516 = vmatprep.subr.mxu0 0.0
  %2517 = vmatpush1.msra.mxu0 0.0
  %2518 = vmatprep.subr.mxu0 0.0
  %2519 = vmatpush1.msra.mxu0 0.0
  %2520 = vmatprep.subr.mxu0 0.0
  %2521 = vmatpush1.msra.mxu0 0.0
  %2522 = vmatprep.subr.mxu0 0.0
  %2523 = vmatpush1.msra.mxu0 0.0
  %2524 = vmatprep.subr.mxu0 0.0
  %2525 = vmatpush1.msra.mxu0 0.0
  %2526 = vmatprep.subr.mxu0 0.0
  %2527 = vmatpush1.msra.mxu0 0.0
  %2528 = vmatprep.subr.mxu0 0.0
  %2529 = vmatpush1.msra.mxu0 0.0
  %2530 = vmatprep.subr.mxu0 0.0
  %2531 = vmatpush1.msra.mxu0 0.0
  %2532 = vmatprep.mubr.f32.mxu0 0.0
  %2533 = vmatmul.mubr.f32.gmra.mrb[0].mxu0 %v2466
  %v2534 = vpop.f32.mrb[0].mxu0
  %v2535 = vadd.f32 0.0, %v2534
  %v2536 = vpop.f32.mrb[0].mxu0
  %v2537 = vadd.f32 0.0, %v2536
  %2538 = vdwg.mxu0
  %v2539 = vld [vmem:[%s18] sm:$0xff]
  %2541 = vset.pattern.permute.xlu0 0
  %2542 = vperm.xlu0 %2541, %v2539
  %v2543 = vpop.permute.xlu0 %2542
  %2545 = vmatprep.subr.mxu0 %v2053
  %2546 = vmatpush1.msra.mxu0 %v2052
  %2547 = vmatprep.subr.mxu0 %v2055
  %2548 = vmatpush1.msra.mxu0 %v2054
  %2549 = vmatprep.subr.mxu0 %v2057
  %2550 = vmatpush1.msra.mxu0 %v2056
  %2551 = vmatprep.subr.mxu0 %v2059
  %2552 = vmatpush1.msra.mxu0 %v2058
  %2553 = vmatprep.subr.mxu0 %v2061
  %2554 = vmatpush1.msra.mxu0 %v2060
  %2555 = vmatprep.subr.mxu0 %v2063
  %2556 = vmatpush1.msra.mxu0 %v2062
  %2557 = vmatprep.subr.mxu0 %v2065
  %2558 = vmatpush1.msra.mxu0 %v2064
  %2559 = vmatprep.subr.mxu0 %v2067
  %2560 = vmatpush1.msra.mxu0 %v2066
  %2561 = vmatprep.subr.mxu0 %v2069
  %2562 = vmatpush1.msra.mxu0 %v2068
  %2563 = vmatprep.subr.mxu0 %v2071
  %2564 = vmatpush1.msra.mxu0 %v2070
  %2565 = vmatprep.subr.mxu0 %v2073
  %2566 = vmatpush1.msra.mxu0 %v2072
  %2567 = vmatprep.subr.mxu0 %v2075
  %2568 = vmatpush1.msra.mxu0 %v2074
  %2569 = vmatprep.subr.mxu0 %v2077
  %2570 = vmatpush1.msra.mxu0 %v2076
  %2571 = vmatprep.subr.mxu0 %v2079
  %2572 = vmatpush1.msra.mxu0 %v2078
  %2573 = vmatprep.subr.mxu0 %v2081
  %2574 = vmatpush1.msra.mxu0 %v2080
  %2575 = vmatprep.subr.mxu0 %v2083
  %2576 = vmatpush1.msra.mxu0 %v2082
  %2577 = vmatprep.subr.mxu0 %v2085
  %2578 = vmatpush1.msra.mxu0 %v2084
  %2579 = vmatprep.subr.mxu0 %v2087
  %2580 = vmatpush1.msra.mxu0 %v2086
  %2581 = vmatprep.subr.mxu0 %v2089
  %2582 = vmatpush1.msra.mxu0 %v2088
  %2583 = vmatprep.subr.mxu0 %v2091
  %2584 = vmatpush1.msra.mxu0 %v2090
  %2585 = vmatprep.subr.mxu0 %v2093
  %2586 = vmatpush1.msra.mxu0 %v2092
  %2587 = vmatprep.subr.mxu0 %v2095
  %2588 = vmatpush1.msra.mxu0 %v2094
  %2589 = vmatprep.subr.mxu0 %v2097
  %2590 = vmatpush1.msra.mxu0 %v2096
  %2591 = vmatprep.subr.mxu0 %v2099
  %2592 = vmatpush1.msra.mxu0 %v2098
  %2593 = vmatprep.subr.mxu0 %v2101
  %2594 = vmatpush1.msra.mxu0 %v2100
  %2595 = vmatprep.subr.mxu0 %v2103
  %2596 = vmatpush1.msra.mxu0 %v2102
  %2597 = vmatprep.subr.mxu0 %v2105
  %2598 = vmatpush1.msra.mxu0 %v2104
  %2599 = vmatprep.subr.mxu0 %v2107
  %2600 = vmatpush1.msra.mxu0 %v2106
  %2601 = vmatprep.subr.mxu0 %v2109
  %2602 = vmatpush1.msra.mxu0 %v2108
  %2603 = vmatprep.subr.mxu0 %v2111
  %2604 = vmatpush1.msra.mxu0 %v2110
  %2605 = vmatprep.subr.mxu0 %v2113
  %2606 = vmatpush1.msra.mxu0 %v2112
  %2607 = vmatprep.subr.mxu0 %v2115
  %2608 = vmatpush1.msra.mxu0 %v2114
  %2609 = vmatprep.mubr.f32.mxu0 %v2537
  %2610 = vmatmul.mubr.f32.gmra.mrb[0].mxu0 %v2535
  %v2611 = vpop.f32.mrb[0].mxu0
  %v2612 = vadd.f32 %v2543, %v2611
  %v2613 = vpop.f32.mrb[0].mxu0
  %v2614 = vadd.f32 %v2543, %v2613
  %2615 = vdwg.mxu0
  %v2616 = vmax.f32 %v2612, 0.0
  %v2617 = vmax.f32 %v2614, 0.0
  %v2618 = vadd.f32 %v2616, %v2050
  %v2619 = vadd.f32 %v2617, %v2051
  %v2620 = vld [vmem:[%s19] sm:$0xff]
  %v2621 = vld [vmem:[%s19 + $0x8] sm:$0xff]
  %v2622 = vld [vmem:[%s19 + $0x10] sm:$0xff]
  %v2623 = vld [vmem:[%s19 + $0x18] sm:$0xff]
  %v2624 = vld [vmem:[%s19 + $0x20] sm:$0xff]
  %v2625 = vld [vmem:[%s19 + $0x28] sm:$0xff]
  %v2626 = vld [vmem:[%s19 + $0x30] sm:$0xff]
  %v2627 = vld [vmem:[%s19 + $0x38] sm:$0xff]
  %v2628 = vld [vmem:[%s19 + $0x40] sm:$0xff]
  %v2629 = vld [vmem:[%s20] sm:$0xff]
  %2631 = vrot.lane.b32.xlu0 %v2619, 17
  %v2632 = vpop.permute.xlu0 %2631
  %2635 = vrot.lane.b32.xlu0 %v2618, 17
  %v2636 = vpop.permute.xlu0 %2635
  %v2637 = vsel %vm366, %v2636, %v2632
  %v2640 = vsel %vm366, %v2632, %v2636
  %v2641 = vmul.f32 %v2640, %v374
  %v2642 = vmul.f32 %v2637, %v378
  %2643 = vrot.lane.b32.xlu0 %v2619, 16
  %v2644 = vpop.permute.xlu0 %2643
  %2646 = vrot.lane.b32.xlu0 %v2618, 16
  %v2647 = vpop.permute.xlu0 %2646
  %v2648 = vsel %vm386, %v2647, %v2644
  %v2651 = vsel %vm386, %v2644, %v2647
  %v2652 = vmul.f32 %v2651, %v394
  %v2653 = vmul.f32 %v2648, %v398
  %v2655 = vsel %vm1294, %v2621, 0
  %2657 = vmatprep.subr.mxu0 %v2653
  %2658 = vmatpush1.msra.mxu0 %v2652
  %2659 = vmatprep.subr.mxu0 0.0
  %2660 = vmatpush1.msra.mxu0 0.0
  %2661 = vmatprep.subr.mxu0 0.0
  %2662 = vmatpush1.msra.mxu0 0.0
  %2663 = vmatprep.subr.mxu0 0.0
  %2664 = vmatpush1.msra.mxu0 0.0
  %2665 = vmatprep.subr.mxu0 0.0
  %2666 = vmatpush1.msra.mxu0 0.0
  %2667 = vmatprep.subr.mxu0 0.0
  %2668 = vmatpush1.msra.mxu0 0.0
  %2669 = vmatprep.subr.mxu0 0.0
  %2670 = vmatpush1.msra.mxu0 0.0
  %2671 = vmatprep.subr.mxu0 0.0
  %2672 = vmatpush1.msra.mxu0 0.0
  %2673 = vmatprep.subr.mxu0 0.0
  %2674 = vmatpush1.msra.mxu0 0.0
  %2675 = vmatprep.subr.mxu0 0.0
  %2676 = vmatpush1.msra.mxu0 0.0
  %2677 = vmatprep.subr.mxu0 0.0
  %2678 = vmatpush1.msra.mxu0 0.0
  %2679 = vmatprep.subr.mxu0 0.0
  %2680 = vmatpush1.msra.mxu0 0.0
  %2681 = vmatprep.subr.mxu0 0.0
  %2682 = vmatpush1.msra.mxu0 0.0
  %2683 = vmatprep.subr.mxu0 0.0
  %2684 = vmatpush1.msra.mxu0 0.0
  %2685 = vmatprep.subr.mxu0 0.0
  %2686 = vmatpush1.msra.mxu0 0.0
  %2687 = vmatprep.subr.mxu0 0.0
  %2688 = vmatpush1.msra.mxu0 0.0
  %2689 = vmatprep.subr.mxu0 0.0
  %2690 = vmatpush1.msra.mxu0 0.0
  %2691 = vmatprep.subr.mxu0 0.0
  %2692 = vmatpush1.msra.mxu0 0.0
  %2693 = vmatprep.subr.mxu0 0.0
  %2694 = vmatpush1.msra.mxu0 0.0
  %2695 = vmatprep.subr.mxu0 0.0
  %2696 = vmatpush1.msra.mxu0 0.0
  %2697 = vmatprep.subr.mxu0 0.0
  %2698 = vmatpush1.msra.mxu0 0.0
  %2699 = vmatprep.subr.mxu0 0.0
  %2700 = vmatpush1.msra.mxu0 0.0
  %2701 = vmatprep.subr.mxu0 0.0
  %2702 = vmatpush1.msra.mxu0 0.0
  %2703 = vmatprep.subr.mxu0 0.0
  %2704 = vmatpush1.msra.mxu0 0.0
  %2705 = vmatprep.subr.mxu0 0.0
  %2706 = vmatpush1.msra.mxu0 0.0
  %2707 = vmatprep.subr.mxu0 0.0
  %2708 = vmatpush1.msra.mxu0 0.0
  %2709 = vmatprep.subr.mxu0 0.0
  %2710 = vmatpush1.msra.mxu0 0.0
  %2711 = vmatprep.subr.mxu0 0.0
  %2712 = vmatpush1.msra.mxu0 0.0
  %2713 = vmatprep.subr.mxu0 0.0
  %2714 = vmatpush1.msra.mxu0 0.0
  %2715 = vmatprep.subr.mxu0 0.0
  %2716 = vmatpush1.msra.mxu0 0.0
  %2717 = vmatprep.subr.mxu0 0.0
  %2718 = vmatpush1.msra.mxu0 0.0
  %2719 = vmatprep.subr.mxu0 0.0
  %2720 = vmatpush1.msra.mxu0 0.0
  %2721 = vmatprep.mubr.f32.mxu0 0.0
  %2722 = vmatmul.mubr.f32.gmra.mrb[0].mxu0 %v2655
  %v2723 = vpop.f32.mrb[0].mxu0
  %v2724 = vadd.f32 0.0, %v2723
  %v2725 = vpop.f32.mrb[0].mxu0
  %v2726 = vadd.f32 0.0, %v2725
  %2727 = vdwg.mxu0
  %v2729 = vsel %vm1294, %v2620, 0
  %2731 = vmatprep.subr.mxu0 %v2642
  %2732 = vmatpush1.msra.mxu0 %v2641
  %2733 = vmatprep.subr.mxu0 0.0
  %2734 = vmatpush1.msra.mxu0 0.0
  %2735 = vmatprep.subr.mxu0 0.0
  %2736 = vmatpush1.msra.mxu0 0.0
  %2737 = vmatprep.subr.mxu0 0.0
  %2738 = vmatpush1.msra.mxu0 0.0
  %2739 = vmatprep.subr.mxu0 0.0
  %2740 = vmatpush1.msra.mxu0 0.0
  %2741 = vmatprep.subr.mxu0 0.0
  %2742 = vmatpush1.msra.mxu0 0.0
  %2743 = vmatprep.subr.mxu0 0.0
  %2744 = vmatpush1.msra.mxu0 0.0
  %2745 = vmatprep.subr.mxu0 0.0
  %2746 = vmatpush1.msra.mxu0 0.0
  %2747 = vmatprep.subr.mxu0 0.0
  %2748 = vmatpush1.msra.mxu0 0.0
  %2749 = vmatprep.subr.mxu0 0.0
  %2750 = vmatpush1.msra.mxu0 0.0
  %2751 = vmatprep.subr.mxu0 0.0
  %2752 = vmatpush1.msra.mxu0 0.0
  %2753 = vmatprep.subr.mxu0 0.0
  %2754 = vmatpush1.msra.mxu0 0.0
  %2755 = vmatprep.subr.mxu0 0.0
  %2756 = vmatpush1.msra.mxu0 0.0
  %2757 = vmatprep.subr.mxu0 0.0
  %2758 = vmatpush1.msra.mxu0 0.0
  %2759 = vmatprep.subr.mxu0 0.0
  %2760 = vmatpush1.msra.mxu0 0.0
  %2761 = vmatprep.subr.mxu0 0.0
  %2762 = vmatpush1.msra.mxu0 0.0
  %2763 = vmatprep.subr.mxu0 0.0
  %2764 = vmatpush1.msra.mxu0 0.0
  %2765 = vmatprep.subr.mxu0 0.0
  %2766 = vmatpush1.msra.mxu0 0.0
  %2767 = vmatprep.subr.mxu0 0.0
  %2768 = vmatpush1.msra.mxu0 0.0
  %2769 = vmatprep.subr.mxu0 0.0
  %2770 = vmatpush1.msra.mxu0 0.0
  %2771 = vmatprep.subr.mxu0 0.0
  %2772 = vmatpush1.msra.mxu0 0.0
  %2773 = vmatprep.subr.mxu0 0.0
  %2774 = vmatpush1.msra.mxu0 0.0
  %2775 = vmatprep.subr.mxu0 0.0
  %2776 = vmatpush1.msra.mxu0 0.0
  %2777 = vmatprep.subr.mxu0 0.0
  %2778 = vmatpush1.msra.mxu0 0.0
  %2779 = vmatprep.subr.mxu0 0.0
  %2780 = vmatpush1.msra.mxu0 0.0
  %2781 = vmatprep.subr.mxu0 0.0
  %2782 = vmatpush1.msra.mxu0 0.0
  %2783 = vmatprep.subr.mxu0 0.0
  %2784 = vmatpush1.msra.mxu0 0.0
  %2785 = vmatprep.subr.mxu0 0.0
  %2786 = vmatpush1.msra.mxu0 0.0
  %2787 = vmatprep.subr.mxu0 0.0
  %2788 = vmatpush1.msra.mxu0 0.0
  %2789 = vmatprep.subr.mxu0 0.0
  %2790 = vmatpush1.msra.mxu0 0.0
  %2791 = vmatprep.subr.mxu0 0.0
  %2792 = vmatpush1.msra.mxu0 0.0
  %2793 = vmatprep.subr.mxu0 0.0
  %2794 = vmatpush1.msra.mxu0 0.0
  %2795 = vmatprep.mubr.f32.mxu0 0.0
  %2796 = vmatmul.mubr.f32.gmra.mrb[0].mxu0 %v2729
  %v2797 = vpop.f32.mrb[0].mxu0
  %v2798 = vadd.f32 %v2724, %v2797
  %v2799 = vpop.f32.mrb[0].mxu0
  %v2800 = vadd.f32 %v2726, %v2799
  %2801 = vdwg.mxu0
  %2802 = vrot.lane.b32.xlu0 %v2619, 15
  %v2803 = vpop.permute.xlu0 %2802
  %2805 = vrot.lane.b32.xlu0 %v2618, 15
  %v2806 = vpop.permute.xlu0 %2805
  %v2807 = vsel %vm567, %v2806, %v2803
  %v2810 = vsel %vm567, %v2803, %v2806
  %v2811 = vmul.f32 %v2810, %v575
  %v2812 = vmul.f32 %v2807, %v579
  %v2814 = vsel %vm1294, %v2622, 0
  %2816 = vmatprep.subr.mxu0 %v2812
  %2817 = vmatpush1.msra.mxu0 %v2811
  %2818 = vmatprep.subr.mxu0 0.0
  %2819 = vmatpush1.msra.mxu0 0.0
  %2820 = vmatprep.subr.mxu0 0.0
  %2821 = vmatpush1.msra.mxu0 0.0
  %2822 = vmatprep.subr.mxu0 0.0
  %2823 = vmatpush1.msra.mxu0 0.0
  %2824 = vmatprep.subr.mxu0 0.0
  %2825 = vmatpush1.msra.mxu0 0.0
  %2826 = vmatprep.subr.mxu0 0.0
  %2827 = vmatpush1.msra.mxu0 0.0
  %2828 = vmatprep.subr.mxu0 0.0
  %2829 = vmatpush1.msra.mxu0 0.0
  %2830 = vmatprep.subr.mxu0 0.0
  %2831 = vmatpush1.msra.mxu0 0.0
  %2832 = vmatprep.subr.mxu0 0.0
  %2833 = vmatpush1.msra.mxu0 0.0
  %2834 = vmatprep.subr.mxu0 0.0
  %2835 = vmatpush1.msra.mxu0 0.0
  %2836 = vmatprep.subr.mxu0 0.0
  %2837 = vmatpush1.msra.mxu0 0.0
  %2838 = vmatprep.subr.mxu0 0.0
  %2839 = vmatpush1.msra.mxu0 0.0
  %2840 = vmatprep.subr.mxu0 0.0
  %2841 = vmatpush1.msra.mxu0 0.0
  %2842 = vmatprep.subr.mxu0 0.0
  %2843 = vmatpush1.msra.mxu0 0.0
  %2844 = vmatprep.subr.mxu0 0.0
  %2845 = vmatpush1.msra.mxu0 0.0
  %2846 = vmatprep.subr.mxu0 0.0
  %2847 = vmatpush1.msra.mxu0 0.0
  %2848 = vmatprep.subr.mxu0 0.0
  %2849 = vmatpush1.msra.mxu0 0.0
  %2850 = vmatprep.subr.mxu0 0.0
  %2851 = vmatpush1.msra.mxu0 0.0
  %2852 = vmatprep.subr.mxu0 0.0
  %2853 = vmatpush1.msra.mxu0 0.0
  %2854 = vmatprep.subr.mxu0 0.0
  %2855 = vmatpush1.msra.mxu0 0.0
  %2856 = vmatprep.subr.mxu0 0.0
  %2857 = vmatpush1.msra.mxu0 0.0
  %2858 = vmatprep.subr.mxu0 0.0
  %2859 = vmatpush1.msra.mxu0 0.0
  %2860 = vmatprep.subr.mxu0 0.0
  %2861 = vmatpush1.msra.mxu0 0.0
  %2862 = vmatprep.subr.mxu0 0.0
  %2863 = vmatpush1.msra.mxu0 0.0
  %2864 = vmatprep.subr.mxu0 0.0
  %2865 = vmatpush1.msra.mxu0 0.0
  %2866 = vmatprep.subr.mxu0 0.0
  %2867 = vmatpush1.msra.mxu0 0.0
  %2868 = vmatprep.subr.mxu0 0.0
  %2869 = vmatpush1.msra.mxu0 0.0
  %2870 = vmatprep.subr.mxu0 0.0
  %2871 = vmatpush1.msra.mxu0 0.0
  %2872 = vmatprep.subr.mxu0 0.0
  %2873 = vmatpush1.msra.mxu0 0.0
  %2874 = vmatprep.subr.mxu0 0.0
  %2875 = vmatpush1.msra.mxu0 0.0
  %2876 = vmatprep.subr.mxu0 0.0
  %2877 = vmatpush1.msra.mxu0 0.0
  %2878 = vmatprep.subr.mxu0 0.0
  %2879 = vmatpush1.msra.mxu0 0.0
  %2880 = vmatprep.mubr.f32.mxu0 0.0
  %2881 = vmatmul.mubr.f32.gmra.mrb[0].mxu0 %v2814
  %v2882 = vpop.f32.mrb[0].mxu0
  %v2883 = vadd.f32 0.0, %v2882
  %v2884 = vpop.f32.mrb[0].mxu0
  %v2885 = vadd.f32 0.0, %v2884
  %2886 = vdwg.mxu0
  %v2887 = vadd.f32 %v2798, %v2883
  %v2888 = vadd.f32 %v2800, %v2885
  %2889 = vrot.lane.b32.xlu0 %v2619, 1
  %v2890 = vpop.permute.xlu0 %2889
  %2892 = vrot.lane.b32.xlu0 %v2618, 1
  %v2893 = vpop.permute.xlu0 %2892
  %v2894 = vsel %vm188, %v2893, %v2890
  %v2897 = vsel %vm188, %v2890, %v2893
  %v2898 = vmul.f32 %v2897, %v676
  %v2899 = vmul.f32 %v2894, %v680
  %v2901 = vsel %vm1294, %v2623, 0
  %2903 = vmatprep.subr.mxu0 %v2899
  %2904 = vmatpush1.msra.mxu0 %v2898
  %2905 = vmatprep.subr.mxu0 0.0
  %2906 = vmatpush1.msra.mxu0 0.0
  %2907 = vmatprep.subr.mxu0 0.0
  %2908 = vmatpush1.msra.mxu0 0.0
  %2909 = vmatprep.subr.mxu0 0.0
  %2910 = vmatpush1.msra.mxu0 0.0
  %2911 = vmatprep.subr.mxu0 0.0
  %2912 = vmatpush1.msra.mxu0 0.0
  %2913 = vmatprep.subr.mxu0 0.0
  %2914 = vmatpush1.msra.mxu0 0.0
  %2915 = vmatprep.subr.mxu0 0.0
  %2916 = vmatpush1.msra.mxu0 0.0
  %2917 = vmatprep.subr.mxu0 0.0
  %2918 = vmatpush1.msra.mxu0 0.0
  %2919 = vmatprep.subr.mxu0 0.0
  %2920 = vmatpush1.msra.mxu0 0.0
  %2921 = vmatprep.subr.mxu0 0.0
  %2922 = vmatpush1.msra.mxu0 0.0
  %2923 = vmatprep.subr.mxu0 0.0
  %2924 = vmatpush1.msra.mxu0 0.0
  %2925 = vmatprep.subr.mxu0 0.0
  %2926 = vmatpush1.msra.mxu0 0.0
  %2927 = vmatprep.subr.mxu0 0.0
  %2928 = vmatpush1.msra.mxu0 0.0
  %2929 = vmatprep.subr.mxu0 0.0
  %2930 = vmatpush1.msra.mxu0 0.0
  %2931 = vmatprep.subr.mxu0 0.0
  %2932 = vmatpush1.msra.mxu0 0.0
  %2933 = vmatprep.subr.mxu0 0.0
  %2934 = vmatpush1.msra.mxu0 0.0
  %2935 = vmatprep.subr.mxu0 0.0
  %2936 = vmatpush1.msra.mxu0 0.0
  %2937 = vmatprep.subr.mxu0 0.0
  %2938 = vmatpush1.msra.mxu0 0.0
  %2939 = vmatprep.subr.mxu0 0.0
  %2940 = vmatpush1.msra.mxu0 0.0
  %2941 = vmatprep.subr.mxu0 0.0
  %2942 = vmatpush1.msra.mxu0 0.0
  %2943 = vmatprep.subr.mxu0 0.0
  %2944 = vmatpush1.msra.mxu0 0.0
  %2945 = vmatprep.subr.mxu0 0.0
  %2946 = vmatpush1.msra.mxu0 0.0
  %2947 = vmatprep.subr.mxu0 0.0
  %2948 = vmatpush1.msra.mxu0 0.0
  %2949 = vmatprep.subr.mxu0 0.0
  %2950 = vmatpush1.msra.mxu0 0.0
  %2951 = vmatprep.subr.mxu0 0.0
  %2952 = vmatpush1.msra.mxu0 0.0
  %2953 = vmatprep.subr.mxu0 0.0
  %2954 = vmatpush1.msra.mxu0 0.0
  %2955 = vmatprep.subr.mxu0 0.0
  %2956 = vmatpush1.msra.mxu0 0.0
  %2957 = vmatprep.subr.mxu0 0.0
  %2958 = vmatpush1.msra.mxu0 0.0
  %2959 = vmatprep.subr.mxu0 0.0
  %2960 = vmatpush1.msra.mxu0 0.0
  %2961 = vmatprep.subr.mxu0 0.0
  %2962 = vmatpush1.msra.mxu0 0.0
  %2963 = vmatprep.subr.mxu0 0.0
  %2964 = vmatpush1.msra.mxu0 0.0
  %2965 = vmatprep.subr.mxu0 0.0
  %2966 = vmatpush1.msra.mxu0 0.0
  %2967 = vmatprep.mubr.f32.mxu0 0.0
  %2968 = vmatmul.mubr.f32.gmra.mrb[0].mxu0 %v2901
  %v2969 = vpop.f32.mrb[0].mxu0
  %v2970 = vadd.f32 0.0, %v2969
  %v2971 = vpop.f32.mrb[0].mxu0
  %v2972 = vadd.f32 0.0, %v2971
  %2973 = vdwg.mxu0
  %v2974 = vadd.f32 %v2887, %v2970
  %v2975 = vadd.f32 %v2888, %v2972
  %v2977 = vsel %vm1294, %v2624, 0
  %2979 = vmatprep.subr.mxu0 %v2619
  %2980 = vmatpush1.msra.mxu0 %v2618
  %2981 = vmatprep.subr.mxu0 0.0
  %2982 = vmatpush1.msra.mxu0 0.0
  %2983 = vmatprep.subr.mxu0 0.0
  %2984 = vmatpush1.msra.mxu0 0.0
  %2985 = vmatprep.subr.mxu0 0.0
  %2986 = vmatpush1.msra.mxu0 0.0
  %2987 = vmatprep.subr.mxu0 0.0
  %2988 = vmatpush1.msra.mxu0 0.0
  %2989 = vmatprep.subr.mxu0 0.0
  %2990 = vmatpush1.msra.mxu0 0.0
  %2991 = vmatprep.subr.mxu0 0.0
  %2992 = vmatpush1.msra.mxu0 0.0
  %2993 = vmatprep.subr.mxu0 0.0
  %2994 = vmatpush1.msra.mxu0 0.0
  %2995 = vmatprep.subr.mxu0 0.0
  %2996 = vmatpush1.msra.mxu0 0.0
  %2997 = vmatprep.subr.mxu0 0.0
  %2998 = vmatpush1.msra.mxu0 0.0
  %2999 = vmatprep.subr.mxu0 0.0
  %3000 = vmatpush1.msra.mxu0 0.0
  %3001 = vmatprep.subr.mxu0 0.0
  %3002 = vmatpush1.msra.mxu0 0.0
  %3003 = vmatprep.subr.mxu0 0.0
  %3004 = vmatpush1.msra.mxu0 0.0
  %3005 = vmatprep.subr.mxu0 0.0
  %3006 = vmatpush1.msra.mxu0 0.0
  %3007 = vmatprep.subr.mxu0 0.0
  %3008 = vmatpush1.msra.mxu0 0.0
  %3009 = vmatprep.subr.mxu0 0.0
  %3010 = vmatpush1.msra.mxu0 0.0
  %3011 = vmatprep.subr.mxu0 0.0
  %3012 = vmatpush1.msra.mxu0 0.0
  %3013 = vmatprep.subr.mxu0 0.0
  %3014 = vmatpush1.msra.mxu0 0.0
  %3015 = vmatprep.subr.mxu0 0.0
  %3016 = vmatpush1.msra.mxu0 0.0
  %3017 = vmatprep.subr.mxu0 0.0
  %3018 = vmatpush1.msra.mxu0 0.0
  %3019 = vmatprep.subr.mxu0 0.0
  %3020 = vmatpush1.msra.mxu0 0.0
  %3021 = vmatprep.subr.mxu0 0.0
  %3022 = vmatpush1.msra.mxu0 0.0
  %3023 = vmatprep.subr.mxu0 0.0
  %3024 = vmatpush1.msra.mxu0 0.0
  %3025 = vmatprep.subr.mxu0 0.0
  %3026 = vmatpush1.msra.mxu0 0.0
  %3027 = vmatprep.subr.mxu0 0.0
  %3028 = vmatpush1.msra.mxu0 0.0
  %3029 = vmatprep.subr.mxu0 0.0
  %3030 = vmatpush1.msra.mxu0 0.0
  %3031 = vmatprep.subr.mxu0 0.0
  %3032 = vmatpush1.msra.mxu0 0.0
  %3033 = vmatprep.subr.mxu0 0.0
  %3034 = vmatpush1.msra.mxu0 0.0
  %3035 = vmatprep.subr.mxu0 0.0
  %3036 = vmatpush1.msra.mxu0 0.0
  %3037 = vmatprep.subr.mxu0 0.0
  %3038 = vmatpush1.msra.mxu0 0.0
  %3039 = vmatprep.subr.mxu0 0.0
  %3040 = vmatpush1.msra.mxu0 0.0
  %3041 = vmatprep.subr.mxu0 0.0
  %3042 = vmatpush1.msra.mxu0 0.0
  %3043 = vmatprep.mubr.f32.mxu0 0.0
  %3044 = vmatmul.mubr.f32.gmra.mrb[0].mxu0 %v2977
  %v3045 = vpop.f32.mrb[0].mxu0
  %v3046 = vadd.f32 0.0, %v3045
  %v3047 = vpop.f32.mrb[0].mxu0
  %v3048 = vadd.f32 0.0, %v3047
  %3049 = vdwg.mxu0
  %v3050 = vadd.f32 %v2974, %v3046
  %v3051 = vadd.f32 %v2975, %v3048
  %3052 = vrot.lane.b32.xlu0 %v2618, 127
  %v3053 = vpop.permute.xlu0 %3052
  %3054 = vrot.lane.b32.xlu0 %v2619, 127
  %v3055 = vpop.permute.xlu0 %3054
  %v3056 = vsel %vm849, %v3053, %v3055
  %v3060 = vsel %vm849, %v3055, %v3053
  %v3061 = vmul.f32 %v3056, %v858
  %v3062 = vmul.f32 %v3060, %v862
  %v3064 = vsel %vm1294, %v2625, 0
  %3066 = vmatprep.subr.mxu0 %v3062
  %3067 = vmatpush1.msra.mxu0 %v3061
  %3068 = vmatprep.subr.mxu0 0.0
  %3069 = vmatpush1.msra.mxu0 0.0
  %3070 = vmatprep.subr.mxu0 0.0
  %3071 = vmatpush1.msra.mxu0 0.0
  %3072 = vmatprep.subr.mxu0 0.0
  %3073 = vmatpush1.msra.mxu0 0.0
  %3074 = vmatprep.subr.mxu0 0.0
  %3075 = vmatpush1.msra.mxu0 0.0
  %3076 = vmatprep.subr.mxu0 0.0
  %3077 = vmatpush1.msra.mxu0 0.0
  %3078 = vmatprep.subr.mxu0 0.0
  %3079 = vmatpush1.msra.mxu0 0.0
  %3080 = vmatprep.subr.mxu0 0.0
  %3081 = vmatpush1.msra.mxu0 0.0
  %3082 = vmatprep.subr.mxu0 0.0
  %3083 = vmatpush1.msra.mxu0 0.0
  %3084 = vmatprep.subr.mxu0 0.0
  %3085 = vmatpush1.msra.mxu0 0.0
  %3086 = vmatprep.subr.mxu0 0.0
  %3087 = vmatpush1.msra.mxu0 0.0
  %3088 = vmatprep.subr.mxu0 0.0
  %3089 = vmatpush1.msra.mxu0 0.0
  %3090 = vmatprep.subr.mxu0 0.0
  %3091 = vmatpush1.msra.mxu0 0.0
  %3092 = vmatprep.subr.mxu0 0.0
  %3093 = vmatpush1.msra.mxu0 0.0
  %3094 = vmatprep.subr.mxu0 0.0
  %3095 = vmatpush1.msra.mxu0 0.0
  %3096 = vmatprep.subr.mxu0 0.0
  %3097 = vmatpush1.msra.mxu0 0.0
  %3098 = vmatprep.subr.mxu0 0.0
  %3099 = vmatpush1.msra.mxu0 0.0
  %3100 = vmatprep.subr.mxu0 0.0
  %3101 = vmatpush1.msra.mxu0 0.0
  %3102 = vmatprep.subr.mxu0 0.0
  %3103 = vmatpush1.msra.mxu0 0.0
  %3104 = vmatprep.subr.mxu0 0.0
  %3105 = vmatpush1.msra.mxu0 0.0
  %3106 = vmatprep.subr.mxu0 0.0
  %3107 = vmatpush1.msra.mxu0 0.0
  %3108 = vmatprep.subr.mxu0 0.0
  %3109 = vmatpush1.msra.mxu0 0.0
  %3110 = vmatprep.subr.mxu0 0.0
  %3111 = vmatpush1.msra.mxu0 0.0
  %3112 = vmatprep.subr.mxu0 0.0
  %3113 = vmatpush1.msra.mxu0 0.0
  %3114 = vmatprep.subr.mxu0 0.0
  %3115 = vmatpush1.msra.mxu0 0.0
  %3116 = vmatprep.subr.mxu0 0.0
  %3117 = vmatpush1.msra.mxu0 0.0
  %3118 = vmatprep.subr.mxu0 0.0
  %3119 = vmatpush1.msra.mxu0 0.0
  %3120 = vmatprep.subr.mxu0 0.0
  %3121 = vmatpush1.msra.mxu0 0.0
  %3122 = vmatprep.subr.mxu0 0.0
  %3123 = vmatpush1.msra.mxu0 0.0
  %3124 = vmatprep.subr.mxu0 0.0
  %3125 = vmatpush1.msra.mxu0 0.0
  %3126 = vmatprep.subr.mxu0 0.0
  %3127 = vmatpush1.msra.mxu0 0.0
  %3128 = vmatprep.subr.mxu0 0.0
  %3129 = vmatpush1.msra.mxu0 0.0
  %3130 = vmatprep.mubr.f32.mxu0 0.0
  %3131 = vmatmul.mubr.f32.gmra.mrb[0].mxu0 %v3064
  %v3132 = vpop.f32.mrb[0].mxu0
  %v3133 = vadd.f32 0.0, %v3132
  %v3134 = vpop.f32.mrb[0].mxu0
  %v3135 = vadd.f32 0.0, %v3134
  %3136 = vdwg.mxu0
  %v3137 = vadd.f32 %v3050, %v3133
  %v3138 = vadd.f32 %v3051, %v3135
  %3139 = vrot.lane.b32.xlu0 %v2618, 113
  %v3140 = vpop.permute.xlu0 %3139
  %3141 = vrot.lane.b32.xlu0 %v2619, 113
  %v3142 = vpop.permute.xlu0 %3141
  %v3143 = vsel %vm951, %v3140, %v3142
  %v3147 = vsel %vm951, %v3142, %v3140
  %v3148 = vmul.f32 %v3143, %v960
  %v3149 = vmul.f32 %v3147, %v964
  %v3151 = vsel %vm1294, %v2626, 0
  %3153 = vmatprep.subr.mxu0 %v3149
  %3154 = vmatpush1.msra.mxu0 %v3148
  %3155 = vmatprep.subr.mxu0 0.0
  %3156 = vmatpush1.msra.mxu0 0.0
  %3157 = vmatprep.subr.mxu0 0.0
  %3158 = vmatpush1.msra.mxu0 0.0
  %3159 = vmatprep.subr.mxu0 0.0
  %3160 = vmatpush1.msra.mxu0 0.0
  %3161 = vmatprep.subr.mxu0 0.0
  %3162 = vmatpush1.msra.mxu0 0.0
  %3163 = vmatprep.subr.mxu0 0.0
  %3164 = vmatpush1.msra.mxu0 0.0
  %3165 = vmatprep.subr.mxu0 0.0
  %3166 = vmatpush1.msra.mxu0 0.0
  %3167 = vmatprep.subr.mxu0 0.0
  %3168 = vmatpush1.msra.mxu0 0.0
  %3169 = vmatprep.subr.mxu0 0.0
  %3170 = vmatpush1.msra.mxu0 0.0
  %3171 = vmatprep.subr.mxu0 0.0
  %3172 = vmatpush1.msra.mxu0 0.0
  %3173 = vmatprep.subr.mxu0 0.0
  %3174 = vmatpush1.msra.mxu0 0.0
  %3175 = vmatprep.subr.mxu0 0.0
  %3176 = vmatpush1.msra.mxu0 0.0
  %3177 = vmatprep.subr.mxu0 0.0
  %3178 = vmatpush1.msra.mxu0 0.0
  %3179 = vmatprep.subr.mxu0 0.0
  %3180 = vmatpush1.msra.mxu0 0.0
  %3181 = vmatprep.subr.mxu0 0.0
  %3182 = vmatpush1.msra.mxu0 0.0
  %3183 = vmatprep.subr.mxu0 0.0
  %3184 = vmatpush1.msra.mxu0 0.0
  %3185 = vmatprep.subr.mxu0 0.0
  %3186 = vmatpush1.msra.mxu0 0.0
  %3187 = vmatprep.subr.mxu0 0.0
  %3188 = vmatpush1.msra.mxu0 0.0
  %3189 = vmatprep.subr.mxu0 0.0
  %3190 = vmatpush1.msra.mxu0 0.0
  %3191 = vmatprep.subr.mxu0 0.0
  %3192 = vmatpush1.msra.mxu0 0.0
  %3193 = vmatprep.subr.mxu0 0.0
  %3194 = vmatpush1.msra.mxu0 0.0
  %3195 = vmatprep.subr.mxu0 0.0
  %3196 = vmatpush1.msra.mxu0 0.0
  %3197 = vmatprep.subr.mxu0 0.0
  %3198 = vmatpush1.msra.mxu0 0.0
  %3199 = vmatprep.subr.mxu0 0.0
  %3200 = vmatpush1.msra.mxu0 0.0
  %3201 = vmatprep.subr.mxu0 0.0
  %3202 = vmatpush1.msra.mxu0 0.0
  %3203 = vmatprep.subr.mxu0 0.0
  %3204 = vmatpush1.msra.mxu0 0.0
  %3205 = vmatprep.subr.mxu0 0.0
  %3206 = vmatpush1.msra.mxu0 0.0
  %3207 = vmatprep.subr.mxu0 0.0
  %3208 = vmatpush1.msra.mxu0 0.0
  %3209 = vmatprep.subr.mxu0 0.0
  %3210 = vmatpush1.msra.mxu0 0.0
  %3211 = vmatprep.subr.mxu0 0.0
  %3212 = vmatpush1.msra.mxu0 0.0
  %3213 = vmatprep.subr.mxu0 0.0
  %3214 = vmatpush1.msra.mxu0 0.0
  %3215 = vmatprep.subr.mxu0 0.0
  %3216 = vmatpush1.msra.mxu0 0.0
  %3217 = vmatprep.mubr.f32.mxu0 0.0
  %3218 = vmatmul.mubr.f32.gmra.mrb[0].mxu0 %v3151
  %v3219 = vpop.f32.mrb[0].mxu0
  %v3220 = vadd.f32 0.0, %v3219
  %v3221 = vpop.f32.mrb[0].mxu0
  %v3222 = vadd.f32 0.0, %v3221
  %3223 = vdwg.mxu0
  %v3224 = vadd.f32 %v3137, %v3220
  %v3225 = vadd.f32 %v3138, %v3222
  %3226 = vrot.lane.b32.xlu0 %v2618, 112
  %v3227 = vpop.permute.xlu0 %3226
  %3228 = vrot.lane.b32.xlu0 %v2619, 112
  %v3229 = vpop.permute.xlu0 %3228
  %v3230 = vsel %vm1053, %v3227, %v3229
  %v3234 = vsel %vm1053, %v3229, %v3227
  %v3235 = vmul.f32 %v3230, %v1062
  %v3236 = vmul.f32 %v3234, %v1066
  %v3238 = vsel %vm1294, %v2627, 0
  %3240 = vmatprep.subr.mxu0 %v3236
  %3241 = vmatpush1.msra.mxu0 %v3235
  %3242 = vmatprep.subr.mxu0 0.0
  %3243 = vmatpush1.msra.mxu0 0.0
  %3244 = vmatprep.subr.mxu0 0.0
  %3245 = vmatpush1.msra.mxu0 0.0
  %3246 = vmatprep.subr.mxu0 0.0
  %3247 = vmatpush1.msra.mxu0 0.0
  %3248 = vmatprep.subr.mxu0 0.0
  %3249 = vmatpush1.msra.mxu0 0.0
  %3250 = vmatprep.subr.mxu0 0.0
  %3251 = vmatpush1.msra.mxu0 0.0
  %3252 = vmatprep.subr.mxu0 0.0
  %3253 = vmatpush1.msra.mxu0 0.0
  %3254 = vmatprep.subr.mxu0 0.0
  %3255 = vmatpush1.msra.mxu0 0.0
  %3256 = vmatprep.subr.mxu0 0.0
  %3257 = vmatpush1.msra.mxu0 0.0
  %3258 = vmatprep.subr.mxu0 0.0
  %3259 = vmatpush1.msra.mxu0 0.0
  %3260 = vmatprep.subr.mxu0 0.0
  %3261 = vmatpush1.msra.mxu0 0.0
  %3262 = vmatprep.subr.mxu0 0.0
  %3263 = vmatpush1.msra.mxu0 0.0
  %3264 = vmatprep.subr.mxu0 0.0
  %3265 = vmatpush1.msra.mxu0 0.0
  %3266 = vmatprep.subr.mxu0 0.0
  %3267 = vmatpush1.msra.mxu0 0.0
  %3268 = vmatprep.subr.mxu0 0.0
  %3269 = vmatpush1.msra.mxu0 0.0
  %3270 = vmatprep.subr.mxu0 0.0
  %3271 = vmatpush1.msra.mxu0 0.0
  %3272 = vmatprep.subr.mxu0 0.0
  %3273 = vmatpush1.msra.mxu0 0.0
  %3274 = vmatprep.subr.mxu0 0.0
  %3275 = vmatpush1.msra.mxu0 0.0
  %3276 = vmatprep.subr.mxu0 0.0
  %3277 = vmatpush1.msra.mxu0 0.0
  %3278 = vmatprep.subr.mxu0 0.0
  %3279 = vmatpush1.msra.mxu0 0.0
  %3280 = vmatprep.subr.mxu0 0.0
  %3281 = vmatpush1.msra.mxu0 0.0
  %3282 = vmatprep.subr.mxu0 0.0
  %3283 = vmatpush1.msra.mxu0 0.0
  %3284 = vmatprep.subr.mxu0 0.0
  %3285 = vmatpush1.msra.mxu0 0.0
  %3286 = vmatprep.subr.mxu0 0.0
  %3287 = vmatpush1.msra.mxu0 0.0
  %3288 = vmatprep.subr.mxu0 0.0
  %3289 = vmatpush1.msra.mxu0 0.0
  %3290 = vmatprep.subr.mxu0 0.0
  %3291 = vmatpush1.msra.mxu0 0.0
  %3292 = vmatprep.subr.mxu0 0.0
  %3293 = vmatpush1.msra.mxu0 0.0
  %3294 = vmatprep.subr.mxu0 0.0
  %3295 = vmatpush1.msra.mxu0 0.0
  %3296 = vmatprep.subr.mxu0 0.0
  %3297 = vmatpush1.msra.mxu0 0.0
  %3298 = vmatprep.subr.mxu0 0.0
  %3299 = vmatpush1.msra.mxu0 0.0
  %3300 = vmatprep.subr.mxu0 0.0
  %3301 = vmatpush1.msra.mxu0 0.0
  %3302 = vmatprep.subr.mxu0 0.0
  %3303 = vmatpush1.msra.mxu0 0.0
  %3304 = vmatprep.mubr.f32.mxu0 0.0
  %3305 = vmatmul.mubr.f32.gmra.mrb[0].mxu0 %v3238
  %v3306 = vpop.f32.mrb[0].mxu0
  %v3307 = vadd.f32 0.0, %v3306
  %v3308 = vpop.f32.mrb[0].mxu0
  %v3309 = vadd.f32 0.0, %v3308
  %3310 = vdwg.mxu0
  %v3311 = vadd.f32 %v3224, %v3307
  %v3312 = vadd.f32 %v3225, %v3309
  %3313 = vrot.lane.b32.xlu0 %v2618, 111
  %v3314 = vpop.permute.xlu0 %3313
  %3315 = vrot.lane.b32.xlu0 %v2619, 111
  %v3316 = vpop.permute.xlu0 %3315
  %v3317 = vsel %vm1155, %v3314, %v3316
  %v3321 = vsel %vm1155, %v3316, %v3314
  %v3322 = vmul.f32 %v3317, %v1164
  %v3323 = vmul.f32 %v3321, %v1168
  %v3325 = vsel %vm1294, %v2628, 0
  %3327 = vmatprep.subr.mxu0 %v3323
  %3328 = vmatpush1.msra.mxu0 %v3322
  %3329 = vmatprep.subr.mxu0 0.0
  %3330 = vmatpush1.msra.mxu0 0.0
  %3331 = vmatprep.subr.mxu0 0.0
  %3332 = vmatpush1.msra.mxu0 0.0
  %3333 = vmatprep.subr.mxu0 0.0
  %3334 = vmatpush1.msra.mxu0 0.0
  %3335 = vmatprep.subr.mxu0 0.0
  %3336 = vmatpush1.msra.mxu0 0.0
  %3337 = vmatprep.subr.mxu0 0.0
  %3338 = vmatpush1.msra.mxu0 0.0
  %3339 = vmatprep.subr.mxu0 0.0
  %3340 = vmatpush1.msra.mxu0 0.0
  %3341 = vmatprep.subr.mxu0 0.0
  %3342 = vmatpush1.msra.mxu0 0.0
  %3343 = vmatprep.subr.mxu0 0.0
  %3344 = vmatpush1.msra.mxu0 0.0
  %3345 = vmatprep.subr.mxu0 0.0
  %3346 = vmatpush1.msra.mxu0 0.0
  %3347 = vmatprep.subr.mxu0 0.0
  %3348 = vmatpush1.msra.mxu0 0.0
  %3349 = vmatprep.subr.mxu0 0.0
  %3350 = vmatpush1.msra.mxu0 0.0
  %3351 = vmatprep.subr.mxu0 0.0
  %3352 = vmatpush1.msra.mxu0 0.0
  %3353 = vmatprep.subr.mxu0 0.0
  %3354 = vmatpush1.msra.mxu0 0.0
  %3355 = vmatprep.subr.mxu0 0.0
  %3356 = vmatpush1.msra.mxu0 0.0
  %3357 = vmatprep.subr.mxu0 0.0
  %3358 = vmatpush1.msra.mxu0 0.0
  %3359 = vmatprep.subr.mxu0 0.0
  %3360 = vmatpush1.msra.mxu0 0.0
  %3361 = vmatprep.subr.mxu0 0.0
  %3362 = vmatpush1.msra.mxu0 0.0
  %3363 = vmatprep.subr.mxu0 0.0
  %3364 = vmatpush1.msra.mxu0 0.0
  %3365 = vmatprep.subr.mxu0 0.0
  %3366 = vmatpush1.msra.mxu0 0.0
  %3367 = vmatprep.subr.mxu0 0.0
  %3368 = vmatpush1.msra.mxu0 0.0
  %3369 = vmatprep.subr.mxu0 0.0
  %3370 = vmatpush1.msra.mxu0 0.0
  %3371 = vmatprep.subr.mxu0 0.0
  %3372 = vmatpush1.msra.mxu0 0.0
  %3373 = vmatprep.subr.mxu0 0.0
  %3374 = vmatpush1.msra.mxu0 0.0
  %3375 = vmatprep.subr.mxu0 0.0
  %3376 = vmatpush1.msra.mxu0 0.0
  %3377 = vmatprep.subr.mxu0 0.0
  %3378 = vmatpush1.msra.mxu0 0.0
  %3379 = vmatprep.subr.mxu0 0.0
  %3380 = vmatpush1.msra.mxu0 0.0
  %3381 = vmatprep.subr.mxu0 0.0
  %3382 = vmatpush1.msra.mxu0 0.0
  %3383 = vmatprep.subr.mxu0 0.0
  %3384 = vmatpush1.msra.mxu0 0.0
  %3385 = vmatprep.subr.mxu0 0.0
  %3386 = vmatpush1.msra.mxu0 0.0
  %3387 = vmatprep.subr.mxu0 0.0
  %3388 = vmatpush1.msra.mxu0 0.0
  %3389 = vmatprep.subr.mxu0 0.0
  %3390 = vmatpush1.msra.mxu0 0.0
  %3391 = vmatprep.mubr.f32.mxu0 0.0
  %3392 = vmatmul.mubr.f32.gmra.mrb[0].mxu0 %v3325
  %v3393 = vpop.f32.mrb[0].mxu0
  %v3394 = vadd.f32 0.0, %v3393
  %v3395 = vpop.f32.mrb[0].mxu0
  %v3396 = vadd.f32 0.0, %v3395
  %3397 = vdwg.mxu0
  %v3398 = vadd.f32 %v3311, %v3394
  %v3399 = vadd.f32 %v3312, %v3396
  %3401 = vset.pattern.permute.xlu0 0
  %3402 = vperm.xlu0 %3401, %v2629
  %v3403 = vpop.permute.xlu0 %3402
  %v3405 = vadd.f32 %v3398, %v3403
  %v3406 = vadd.f32 %v3399, %v3403
  %v3407 = vadd.f32 %v2618, %v3405
  %v3408 = vadd.f32 %v2619, %v3406
  %v3409 = vld [vmem:[%s21] sm:$0xff]
  %v3410 = vld [vmem:[%s21 + $0x8] sm:$0xff]
  %v3411 = vld [vmem:[%s21 + $0x10] sm:$0xff]
  %v3412 = vld [vmem:[%s21 + $0x18] sm:$0xff]
  %v3413 = vld [vmem:[%s21 + $0x20] sm:$0xff]
  %v3414 = vld [vmem:[%s21 + $0x28] sm:$0xff]
  %v3415 = vld [vmem:[%s21 + $0x30] sm:$0xff]
  %v3416 = vld [vmem:[%s21 + $0x38] sm:$0xff]
  %v3417 = vld [vmem:[%s21 + $0x40] sm:$0xff]
  %v3418 = vld [vmem:[%s22] sm:$0xff]
  %3420 = vrot.lane.b32.xlu0 %v3406, 17
  %v3421 = vpop.permute.xlu0 %3420
  %3424 = vrot.lane.b32.xlu0 %v3405, 17
  %v3425 = vpop.permute.xlu0 %3424
  %v3426 = vsel %vm366, %v3425, %v3421
  %v3429 = vsel %vm366, %v3421, %v3425
  %v3430 = vmul.f32 %v3429, %v374
  %v3431 = vmul.f32 %v3426, %v378
  %3432 = vrot.lane.b32.xlu0 %v3406, 16
  %v3433 = vpop.permute.xlu0 %3432
  %3435 = vrot.lane.b32.xlu0 %v3405, 16
  %v3436 = vpop.permute.xlu0 %3435
  %v3437 = vsel %vm386, %v3436, %v3433
  %v3440 = vsel %vm386, %v3433, %v3436
  %v3441 = vmul.f32 %v3440, %v394
  %v3442 = vmul.f32 %v3437, %v398
  %v3444 = vsel %vm1294, %v3410, 0
  %3446 = vmatprep.subr.mxu0 %v3442
  %3447 = vmatpush1.msra.mxu0 %v3441
  %3448 = vmatprep.subr.mxu0 0.0
  %3449 = vmatpush1.msra.mxu0 0.0
  %3450 = vmatprep.subr.mxu0 0.0
  %3451 = vmatpush1.msra.mxu0 0.0
  %3452 = vmatprep.subr.mxu0 0.0
  %3453 = vmatpush1.msra.mxu0 0.0
  %3454 = vmatprep.subr.mxu0 0.0
  %3455 = vmatpush1.msra.mxu0 0.0
  %3456 = vmatprep.subr.mxu0 0.0
  %3457 = vmatpush1.msra.mxu0 0.0
  %3458 = vmatprep.subr.mxu0 0.0
  %3459 = vmatpush1.msra.mxu0 0.0
  %3460 = vmatprep.subr.mxu0 0.0
  %3461 = vmatpush1.msra.mxu0 0.0
  %3462 = vmatprep.subr.mxu0 0.0
  %3463 = vmatpush1.msra.mxu0 0.0
  %3464 = vmatprep.subr.mxu0 0.0
  %3465 = vmatpush1.msra.mxu0 0.0
  %3466 = vmatprep.subr.mxu0 0.0
  %3467 = vmatpush1.msra.mxu0 0.0
  %3468 = vmatprep.subr.mxu0 0.0
  %3469 = vmatpush1.msra.mxu0 0.0
  %3470 = vmatprep.subr.mxu0 0.0
  %3471 = vmatpush1.msra.mxu0 0.0
  %3472 = vmatprep.subr.mxu0 0.0
  %3473 = vmatpush1.msra.mxu0 0.0
  %3474 = vmatprep.subr.mxu0 0.0
  %3475 = vmatpush1.msra.mxu0 0.0
  %3476 = vmatprep.subr.mxu0 0.0
  %3477 = vmatpush1.msra.mxu0 0.0
  %3478 = vmatprep.subr.mxu0 0.0
  %3479 = vmatpush1.msra.mxu0 0.0
  %3480 = vmatprep.subr.mxu0 0.0
  %3481 = vmatpush1.msra.mxu0 0.0
  %3482 = vmatprep.subr.mxu0 0.0
  %3483 = vmatpush1.msra.mxu0 0.0
  %3484 = vmatprep.subr.mxu0 0.0
  %3485 = vmatpush1.msra.mxu0 0.0
  %3486 = vmatprep.subr.mxu0 0.0
  %3487 = vmatpush1.msra.mxu0 0.0
  %3488 = vmatprep.subr.mxu0 0.0
  %3489 = vmatpush1.msra.mxu0 0.0
  %3490 = vmatprep.subr.mxu0 0.0
  %3491 = vmatpush1.msra.mxu0 0.0
  %3492 = vmatprep.subr.mxu0 0.0
  %3493 = vmatpush1.msra.mxu0 0.0
  %3494 = vmatprep.subr.mxu0 0.0
  %3495 = vmatpush1.msra.mxu0 0.0
  %3496 = vmatprep.subr.mxu0 0.0
  %3497 = vmatpush1.msra.mxu0 0.0
  %3498 = vmatprep.subr.mxu0 0.0
  %3499 = vmatpush1.msra.mxu0 0.0
  %3500 = vmatprep.subr.mxu0 0.0
  %3501 = vmatpush1.msra.mxu0 0.0
  %3502 = vmatprep.subr.mxu0 0.0
  %3503 = vmatpush1.msra.mxu0 0.0
  %3504 = vmatprep.subr.mxu0 0.0
  %3505 = vmatpush1.msra.mxu0 0.0
  %3506 = vmatprep.subr.mxu0 0.0
  %3507 = vmatpush1.msra.mxu0 0.0
  %3508 = vmatprep.subr.mxu0 0.0
  %3509 = vmatpush1.msra.mxu0 0.0
  %3510 = vmatprep.mubr.f32.mxu0 0.0
  %3511 = vmatmul.mubr.f32.gmra.mrb[0].mxu0 %v3444
  %v3512 = vpop.f32.mrb[0].mxu0
  %v3513 = vadd.f32 0.0, %v3512
  %v3514 = vpop.f32.mrb[0].mxu0
  %v3515 = vadd.f32 0.0, %v3514
  %3516 = vdwg.mxu0
  %v3518 = vsel %vm1294, %v3409, 0
  %3520 = vmatprep.subr.mxu0 %v3431
  %3521 = vmatpush1.msra.mxu0 %v3430
  %3522 = vmatprep.subr.mxu0 0.0
  %3523 = vmatpush1.msra.mxu0 0.0
  %3524 = vmatprep.subr.mxu0 0.0
  %3525 = vmatpush1.msra.mxu0 0.0
  %3526 = vmatprep.subr.mxu0 0.0
  %3527 = vmatpush1.msra.mxu0 0.0
  %3528 = vmatprep.subr.mxu0 0.0
  %3529 = vmatpush1.msra.mxu0 0.0
  %3530 = vmatprep.subr.mxu0 0.0
  %3531 = vmatpush1.msra.mxu0 0.0
  %3532 = vmatprep.subr.mxu0 0.0
  %3533 = vmatpush1.msra.mxu0 0.0
  %3534 = vmatprep.subr.mxu0 0.0
  %3535 = vmatpush1.msra.mxu0 0.0
  %3536 = vmatprep.subr.mxu0 0.0
  %3537 = vmatpush1.msra.mxu0 0.0
  %3538 = vmatprep.subr.mxu0 0.0
  %3539 = vmatpush1.msra.mxu0 0.0
  %3540 = vmatprep.subr.mxu0 0.0
  %3541 = vmatpush1.msra.mxu0 0.0
  %3542 = vmatprep.subr.mxu0 0.0
  %3543 = vmatpush1.msra.mxu0 0.0
  %3544 = vmatprep.subr.mxu0 0.0
  %3545 = vmatpush1.msra.mxu0 0.0
  %3546 = vmatprep.subr.mxu0 0.0
  %3547 = vmatpush1.msra.mxu0 0.0
  %3548 = vmatprep.subr.mxu0 0.0
  %3549 = vmatpush1.msra.mxu0 0.0
  %3550 = vmatprep.subr.mxu0 0.0
  %3551 = vmatpush1.msra.mxu0 0.0
  %3552 = vmatprep.subr.mxu0 0.0
  %3553 = vmatpush1.msra.mxu0 0.0
  %3554 = vmatprep.subr.mxu0 0.0
  %3555 = vmatpush1.msra.mxu0 0.0
  %3556 = vmatprep.subr.mxu0 0.0
  %3557 = vmatpush1.msra.mxu0 0.0
  %3558 = vmatprep.subr.mxu0 0.0
  %3559 = vmatpush1.msra.mxu0 0.0
  %3560 = vmatprep.subr.mxu0 0.0
  %3561 = vmatpush1.msra.mxu0 0.0
  %3562 = vmatprep.subr.mxu0 0.0
  %3563 = vmatpush1.msra.mxu0 0.0
  %3564 = vmatprep.subr.mxu0 0.0
  %3565 = vmatpush1.msra.mxu0 0.0
  %3566 = vmatprep.subr.mxu0 0.0
  %3567 = vmatpush1.msra.mxu0 0.0
  %3568 = vmatprep.subr.mxu0 0.0
  %3569 = vmatpush1.msra.mxu0 0.0
  %3570 = vmatprep.subr.mxu0 0.0
  %3571 = vmatpush1.msra.mxu0 0.0
  %3572 = vmatprep.subr.mxu0 0.0
  %3573 = vmatpush1.msra.mxu0 0.0
  %3574 = vmatprep.subr.mxu0 0.0
  %3575 = vmatpush1.msra.mxu0 0.0
  %3576 = vmatprep.subr.mxu0 0.0
  %3577 = vmatpush1.msra.mxu0 0.0
  %3578 = vmatprep.subr.mxu0 0.0
  %3579 = vmatpush1.msra.mxu0 0.0
  %3580 = vmatprep.subr.mxu0 0.0
  %3581 = vmatpush1.msra.mxu0 0.0
  %3582 = vmatprep.subr.mxu0 0.0
  %3583 = vmatpush1.msra.mxu0 0.0
  %3584 = vmatprep.mubr.f32.mxu0 0.0
  %3585 = vmatmul.mubr.f32.gmra.mrb[0].mxu0 %v3518
  %v3586 = vpop.f32.mrb[0].mxu0
  %v3587 = vadd.f32 %v3513, %v3586
  %v3588 = vpop.f32.mrb[0].mxu0
  %v3589 = vadd.f32 %v3515, %v3588
  %3590 = vdwg.mxu0
  %3591 = vrot.lane.b32.xlu0 %v3406, 15
  %v3592 = vpop.permute.xlu0 %3591
  %3594 = vrot.lane.b32.xlu0 %v3405, 15
  %v3595 = vpop.permute.xlu0 %3594
  %v3596 = vsel %vm567, %v3595, %v3592
  %v3599 = vsel %vm567, %v3592, %v3595
  %v3600 = vmul.f32 %v3599, %v575
  %v3601 = vmul.f32 %v3596, %v579
  %v3603 = vsel %vm1294, %v3411, 0
  %3605 = vmatprep.subr.mxu0 %v3601
  %3606 = vmatpush1.msra.mxu0 %v3600
  %3607 = vmatprep.subr.mxu0 0.0
  %3608 = vmatpush1.msra.mxu0 0.0
  %3609 = vmatprep.subr.mxu0 0.0
  %3610 = vmatpush1.msra.mxu0 0.0
  %3611 = vmatprep.subr.mxu0 0.0
  %3612 = vmatpush1.msra.mxu0 0.0
  %3613 = vmatprep.subr.mxu0 0.0
  %3614 = vmatpush1.msra.mxu0 0.0
  %3615 = vmatprep.subr.mxu0 0.0
  %3616 = vmatpush1.msra.mxu0 0.0
  %3617 = vmatprep.subr.mxu0 0.0
  %3618 = vmatpush1.msra.mxu0 0.0
  %3619 = vmatprep.subr.mxu0 0.0
  %3620 = vmatpush1.msra.mxu0 0.0
  %3621 = vmatprep.subr.mxu0 0.0
  %3622 = vmatpush1.msra.mxu0 0.0
  %3623 = vmatprep.subr.mxu0 0.0
  %3624 = vmatpush1.msra.mxu0 0.0
  %3625 = vmatprep.subr.mxu0 0.0
  %3626 = vmatpush1.msra.mxu0 0.0
  %3627 = vmatprep.subr.mxu0 0.0
  %3628 = vmatpush1.msra.mxu0 0.0
  %3629 = vmatprep.subr.mxu0 0.0
  %3630 = vmatpush1.msra.mxu0 0.0
  %3631 = vmatprep.subr.mxu0 0.0
  %3632 = vmatpush1.msra.mxu0 0.0
  %3633 = vmatprep.subr.mxu0 0.0
  %3634 = vmatpush1.msra.mxu0 0.0
  %3635 = vmatprep.subr.mxu0 0.0
  %3636 = vmatpush1.msra.mxu0 0.0
  %3637 = vmatprep.subr.mxu0 0.0
  %3638 = vmatpush1.msra.mxu0 0.0
  %3639 = vmatprep.subr.mxu0 0.0
  %3640 = vmatpush1.msra.mxu0 0.0
  %3641 = vmatprep.subr.mxu0 0.0
  %3642 = vmatpush1.msra.mxu0 0.0
  %3643 = vmatprep.subr.mxu0 0.0
  %3644 = vmatpush1.msra.mxu0 0.0
  %3645 = vmatprep.subr.mxu0 0.0
  %3646 = vmatpush1.msra.mxu0 0.0
  %3647 = vmatprep.subr.mxu0 0.0
  %3648 = vmatpush1.msra.mxu0 0.0
  %3649 = vmatprep.subr.mxu0 0.0
  %3650 = vmatpush1.msra.mxu0 0.0
  %3651 = vmatprep.subr.mxu0 0.0
  %3652 = vmatpush1.msra.mxu0 0.0
  %3653 = vmatprep.subr.mxu0 0.0
  %3654 = vmatpush1.msra.mxu0 0.0
  %3655 = vmatprep.subr.mxu0 0.0
  %3656 = vmatpush1.msra.mxu0 0.0
  %3657 = vmatprep.subr.mxu0 0.0
  %3658 = vmatpush1.msra.mxu0 0.0
  %3659 = vmatprep.subr.mxu0 0.0
  %3660 = vmatpush1.msra.mxu0 0.0
  %3661 = vmatprep.subr.mxu0 0.0
  %3662 = vmatpush1.msra.mxu0 0.0
  %3663 = vmatprep.subr.mxu0 0.0
  %3664 = vmatpush1.msra.mxu0 0.0
  %3665 = vmatprep.subr.mxu0 0.0
  %3666 = vmatpush1.msra.mxu0 0.0
  %3667 = vmatprep.subr.mxu0 0.0
  %3668 = vmatpush1.msra.mxu0 0.0
  %3669 = vmatprep.mubr.f32.mxu0 0.0
  %3670 = vmatmul.mubr.f32.gmra.mrb[0].mxu0 %v3603
  %v3671 = vpop.f32.mrb[0].mxu0
  %v3672 = vadd.f32 0.0, %v3671
  %v3673 = vpop.f32.mrb[0].mxu0
  %v3674 = vadd.f32 0.0, %v3673
  %3675 = vdwg.mxu0
  %v3676 = vadd.f32 %v3587, %v3672
  %v3677 = vadd.f32 %v3589, %v3674
  %3678 = vrot.lane.b32.xlu0 %v3406, 1
  %v3679 = vpop.permute.xlu0 %3678
  %3681 = vrot.lane.b32.xlu0 %v3405, 1
  %v3682 = vpop.permute.xlu0 %3681
  %v3683 = vsel %vm188, %v3682, %v3679
  %v3686 = vsel %vm188, %v3679, %v3682
  %v3687 = vmul.f32 %v3686, %v676
  %v3688 = vmul.f32 %v3683, %v680
  %v3690 = vsel %vm1294, %v3412, 0
  %3692 = vmatprep.subr.mxu0 %v3688
  %3693 = vmatpush1.msra.mxu0 %v3687
  %3694 = vmatprep.subr.mxu0 0.0
  %3695 = vmatpush1.msra.mxu0 0.0
  %3696 = vmatprep.subr.mxu0 0.0
  %3697 = vmatpush1.msra.mxu0 0.0
  %3698 = vmatprep.subr.mxu0 0.0
  %3699 = vmatpush1.msra.mxu0 0.0
  %3700 = vmatprep.subr.mxu0 0.0
  %3701 = vmatpush1.msra.mxu0 0.0
  %3702 = vmatprep.subr.mxu0 0.0
  %3703 = vmatpush1.msra.mxu0 0.0
  %3704 = vmatprep.subr.mxu0 0.0
  %3705 = vmatpush1.msra.mxu0 0.0
  %3706 = vmatprep.subr.mxu0 0.0
  %3707 = vmatpush1.msra.mxu0 0.0
  %3708 = vmatprep.subr.mxu0 0.0
  %3709 = vmatpush1.msra.mxu0 0.0
  %3710 = vmatprep.subr.mxu0 0.0
  %3711 = vmatpush1.msra.mxu0 0.0
  %3712 = vmatprep.subr.mxu0 0.0
  %3713 = vmatpush1.msra.mxu0 0.0
  %3714 = vmatprep.subr.mxu0 0.0
  %3715 = vmatpush1.msra.mxu0 0.0
  %3716 = vmatprep.subr.mxu0 0.0
  %3717 = vmatpush1.msra.mxu0 0.0
  %3718 = vmatprep.subr.mxu0 0.0
  %3719 = vmatpush1.msra.mxu0 0.0
  %3720 = vmatprep.subr.mxu0 0.0
  %3721 = vmatpush1.msra.mxu0 0.0
  %3722 = vmatprep.subr.mxu0 0.0
  %3723 = vmatpush1.msra.mxu0 0.0
  %3724 = vmatprep.subr.mxu0 0.0
  %3725 = vmatpush1.msra.mxu0 0.0
  %3726 = vmatprep.subr.mxu0 0.0
  %3727 = vmatpush1.msra.mxu0 0.0
  %3728 = vmatprep.subr.mxu0 0.0
  %3729 = vmatpush1.msra.mxu0 0.0
  %3730 = vmatprep.subr.mxu0 0.0
  %3731 = vmatpush1.msra.mxu0 0.0
  %3732 = vmatprep.subr.mxu0 0.0
  %3733 = vmatpush1.msra.mxu0 0.0
  %3734 = vmatprep.subr.mxu0 0.0
  %3735 = vmatpush1.msra.mxu0 0.0
  %3736 = vmatprep.subr.mxu0 0.0
  %3737 = vmatpush1.msra.mxu0 0.0
  %3738 = vmatprep.subr.mxu0 0.0
  %3739 = vmatpush1.msra.mxu0 0.0
  %3740 = vmatprep.subr.mxu0 0.0
  %3741 = vmatpush1.msra.mxu0 0.0
  %3742 = vmatprep.subr.mxu0 0.0
  %3743 = vmatpush1.msra.mxu0 0.0
  %3744 = vmatprep.subr.mxu0 0.0
  %3745 = vmatpush1.msra.mxu0 0.0
  %3746 = vmatprep.subr.mxu0 0.0
  %3747 = vmatpush1.msra.mxu0 0.0
  %3748 = vmatprep.subr.mxu0 0.0
  %3749 = vmatpush1.msra.mxu0 0.0
  %3750 = vmatprep.subr.mxu0 0.0
  %3751 = vmatpush1.msra.mxu0 0.0
  %3752 = vmatprep.subr.mxu0 0.0
  %3753 = vmatpush1.msra.mxu0 0.0
  %3754 = vmatprep.subr.mxu0 0.0
  %3755 = vmatpush1.msra.mxu0 0.0
  %3756 = vmatprep.mubr.f32.mxu0 0.0
  %3757 = vmatmul.mubr.f32.gmra.mrb[0].mxu0 %v3690
  %v3758 = vpop.f32.mrb[0].mxu0
  %v3759 = vadd.f32 0.0, %v3758
  %v3760 = vpop.f32.mrb[0].mxu0
  %v3761 = vadd.f32 0.0, %v3760
  %3762 = vdwg.mxu0
  %v3763 = vadd.f32 %v3676, %v3759
  %v3764 = vadd.f32 %v3677, %v3761
  %v3766 = vsel %vm1294, %v3413, 0
  %3768 = vmatprep.subr.mxu0 %v3406
  %3769 = vmatpush1.msra.mxu0 %v3405
  %3770 = vmatprep.subr.mxu0 0.0
  %3771 = vmatpush1.msra.mxu0 0.0
  %3772 = vmatprep.subr.mxu0 0.0
  %3773 = vmatpush1.msra.mxu0 0.0
  %3774 = vmatprep.subr.mxu0 0.0
  %3775 = vmatpush1.msra.mxu0 0.0
  %3776 = vmatprep.subr.mxu0 0.0
  %3777 = vmatpush1.msra.mxu0 0.0
  %3778 = vmatprep.subr.mxu0 0.0
  %3779 = vmatpush1.msra.mxu0 0.0
  %3780 = vmatprep.subr.mxu0 0.0
  %3781 = vmatpush1.msra.mxu0 0.0
  %3782 = vmatprep.subr.mxu0 0.0
  %3783 = vmatpush1.msra.mxu0 0.0
  %3784 = vmatprep.subr.mxu0 0.0
  %3785 = vmatpush1.msra.mxu0 0.0
  %3786 = vmatprep.subr.mxu0 0.0
  %3787 = vmatpush1.msra.mxu0 0.0
  %3788 = vmatprep.subr.mxu0 0.0
  %3789 = vmatpush1.msra.mxu0 0.0
  %3790 = vmatprep.subr.mxu0 0.0
  %3791 = vmatpush1.msra.mxu0 0.0
  %3792 = vmatprep.subr.mxu0 0.0
  %3793 = vmatpush1.msra.mxu0 0.0
  %3794 = vmatprep.subr.mxu0 0.0
  %3795 = vmatpush1.msra.mxu0 0.0
  %3796 = vmatprep.subr.mxu0 0.0
  %3797 = vmatpush1.msra.mxu0 0.0
  %3798 = vmatprep.subr.mxu0 0.0
  %3799 = vmatpush1.msra.mxu0 0.0
  %3800 = vmatprep.subr.mxu0 0.0
  %3801 = vmatpush1.msra.mxu0 0.0
  %3802 = vmatprep.subr.mxu0 0.0
  %3803 = vmatpush1.msra.mxu0 0.0
  %3804 = vmatprep.subr.mxu0 0.0
  %3805 = vmatpush1.msra.mxu0 0.0
  %3806 = vmatprep.subr.mxu0 0.0
  %3807 = vmatpush1.msra.mxu0 0.0
  %3808 = vmatprep.subr.mxu0 0.0
  %3809 = vmatpush1.msra.mxu0 0.0
  %3810 = vmatprep.subr.mxu0 0.0
  %3811 = vmatpush1.msra.mxu0 0.0
  %3812 = vmatprep.subr.mxu0 0.0
  %3813 = vmatpush1.msra.mxu0 0.0
  %3814 = vmatprep.subr.mxu0 0.0
  %3815 = vmatpush1.msra.mxu0 0.0
  %3816 = vmatprep.subr.mxu0 0.0
  %3817 = vmatpush1.msra.mxu0 0.0
  %3818 = vmatprep.subr.mxu0 0.0
  %3819 = vmatpush1.msra.mxu0 0.0
  %3820 = vmatprep.subr.mxu0 0.0
  %3821 = vmatpush1.msra.mxu0 0.0
  %3822 = vmatprep.subr.mxu0 0.0
  %3823 = vmatpush1.msra.mxu0 0.0
  %3824 = vmatprep.subr.mxu0 0.0
  %3825 = vmatpush1.msra.mxu0 0.0
  %3826 = vmatprep.subr.mxu0 0.0
  %3827 = vmatpush1.msra.mxu0 0.0
  %3828 = vmatprep.subr.mxu0 0.0
  %3829 = vmatpush1.msra.mxu0 0.0
  %3830 = vmatprep.subr.mxu0 0.0
  %3831 = vmatpush1.msra.mxu0 0.0
  %3832 = vmatprep.mubr.f32.mxu0 0.0
  %3833 = vmatmul.mubr.f32.gmra.mrb[0].mxu0 %v3766
  %v3834 = vpop.f32.mrb[0].mxu0
  %v3835 = vadd.f32 0.0, %v3834
  %v3836 = vpop.f32.mrb[0].mxu0
  %v3837 = vadd.f32 0.0, %v3836
  %3838 = vdwg.mxu0
  %v3839 = vadd.f32 %v3763, %v3835
  %v3840 = vadd.f32 %v3764, %v3837
  %3841 = vrot.lane.b32.xlu0 %v3405, 127
  %v3842 = vpop.permute.xlu0 %3841
  %3843 = vrot.lane.b32.xlu0 %v3406, 127
  %v3844 = vpop.permute.xlu0 %3843
  %v3845 = vsel %vm849, %v3842, %v3844
  %v3849 = vsel %vm849, %v3844, %v3842
  %v3850 = vmul.f32 %v3845, %v858
  %v3851 = vmul.f32 %v3849, %v862
  %v3853 = vsel %vm1294, %v3414, 0
  %3855 = vmatprep.subr.mxu0 %v3851
  %3856 = vmatpush1.msra.mxu0 %v3850
  %3857 = vmatprep.subr.mxu0 0.0
  %3858 = vmatpush1.msra.mxu0 0.0
  %3859 = vmatprep.subr.mxu0 0.0
  %3860 = vmatpush1.msra.mxu0 0.0
  %3861 = vmatprep.subr.mxu0 0.0
  %3862 = vmatpush1.msra.mxu0 0.0
  %3863 = vmatprep.subr.mxu0 0.0
  %3864 = vmatpush1.msra.mxu0 0.0
  %3865 = vmatprep.subr.mxu0 0.0
  %3866 = vmatpush1.msra.mxu0 0.0
  %3867 = vmatprep.subr.mxu0 0.0
  %3868 = vmatpush1.msra.mxu0 0.0
  %3869 = vmatprep.subr.mxu0 0.0
  %3870 = vmatpush1.msra.mxu0 0.0
  %3871 = vmatprep.subr.mxu0 0.0
  %3872 = vmatpush1.msra.mxu0 0.0
  %3873 = vmatprep.subr.mxu0 0.0
  %3874 = vmatpush1.msra.mxu0 0.0
  %3875 = vmatprep.subr.mxu0 0.0
  %3876 = vmatpush1.msra.mxu0 0.0
  %3877 = vmatprep.subr.mxu0 0.0
  %3878 = vmatpush1.msra.mxu0 0.0
  %3879 = vmatprep.subr.mxu0 0.0
  %3880 = vmatpush1.msra.mxu0 0.0
  %3881 = vmatprep.subr.mxu0 0.0
  %3882 = vmatpush1.msra.mxu0 0.0
  %3883 = vmatprep.subr.mxu0 0.0
  %3884 = vmatpush1.msra.mxu0 0.0
  %3885 = vmatprep.subr.mxu0 0.0
  %3886 = vmatpush1.msra.mxu0 0.0
  %3887 = vmatprep.subr.mxu0 0.0
  %3888 = vmatpush1.msra.mxu0 0.0
  %3889 = vmatprep.subr.mxu0 0.0
  %3890 = vmatpush1.msra.mxu0 0.0
  %3891 = vmatprep.subr.mxu0 0.0
  %3892 = vmatpush1.msra.mxu0 0.0
  %3893 = vmatprep.subr.mxu0 0.0
  %3894 = vmatpush1.msra.mxu0 0.0
  %3895 = vmatprep.subr.mxu0 0.0
  %3896 = vmatpush1.msra.mxu0 0.0
  %3897 = vmatprep.subr.mxu0 0.0
  %3898 = vmatpush1.msra.mxu0 0.0
  %3899 = vmatprep.subr.mxu0 0.0
  %3900 = vmatpush1.msra.mxu0 0.0
  %3901 = vmatprep.subr.mxu0 0.0
  %3902 = vmatpush1.msra.mxu0 0.0
  %3903 = vmatprep.subr.mxu0 0.0
  %3904 = vmatpush1.msra.mxu0 0.0
  %3905 = vmatprep.subr.mxu0 0.0
  %3906 = vmatpush1.msra.mxu0 0.0
  %3907 = vmatprep.subr.mxu0 0.0
  %3908 = vmatpush1.msra.mxu0 0.0
  %3909 = vmatprep.subr.mxu0 0.0
  %3910 = vmatpush1.msra.mxu0 0.0
  %3911 = vmatprep.subr.mxu0 0.0
  %3912 = vmatpush1.msra.mxu0 0.0
  %3913 = vmatprep.subr.mxu0 0.0
  %3914 = vmatpush1.msra.mxu0 0.0
  %3915 = vmatprep.subr.mxu0 0.0
  %3916 = vmatpush1.msra.mxu0 0.0
  %3917 = vmatprep.subr.mxu0 0.0
  %3918 = vmatpush1.msra.mxu0 0.0
  %3919 = vmatprep.mubr.f32.mxu0 0.0
  %3920 = vmatmul.mubr.f32.gmra.mrb[0].mxu0 %v3853
  %v3921 = vpop.f32.mrb[0].mxu0
  %v3922 = vadd.f32 0.0, %v3921
  %v3923 = vpop.f32.mrb[0].mxu0
  %v3924 = vadd.f32 0.0, %v3923
  %3925 = vdwg.mxu0
  %v3926 = vadd.f32 %v3839, %v3922
  %v3927 = vadd.f32 %v3840, %v3924
  %3928 = vrot.lane.b32.xlu0 %v3405, 113
  %v3929 = vpop.permute.xlu0 %3928
  %3930 = vrot.lane.b32.xlu0 %v3406, 113
  %v3931 = vpop.permute.xlu0 %3930
  %v3932 = vsel %vm951, %v3929, %v3931
  %v3936 = vsel %vm951, %v3931, %v3929
  %v3937 = vmul.f32 %v3932, %v960
  %v3938 = vmul.f32 %v3936, %v964
  %v3940 = vsel %vm1294, %v3415, 0
  %3942 = vmatprep.subr.mxu0 %v3938
  %3943 = vmatpush1.msra.mxu0 %v3937
  %3944 = vmatprep.subr.mxu0 0.0
  %3945 = vmatpush1.msra.mxu0 0.0
  %3946 = vmatprep.subr.mxu0 0.0
  %3947 = vmatpush1.msra.mxu0 0.0
  %3948 = vmatprep.subr.mxu0 0.0
  %3949 = vmatpush1.msra.mxu0 0.0
  %3950 = vmatprep.subr.mxu0 0.0
  %3951 = vmatpush1.msra.mxu0 0.0
  %3952 = vmatprep.subr.mxu0 0.0
  %3953 = vmatpush1.msra.mxu0 0.0
  %3954 = vmatprep.subr.mxu0 0.0
  %3955 = vmatpush1.msra.mxu0 0.0
  %3956 = vmatprep.subr.mxu0 0.0
  %3957 = vmatpush1.msra.mxu0 0.0
  %3958 = vmatprep.subr.mxu0 0.0
  %3959 = vmatpush1.msra.mxu0 0.0
  %3960 = vmatprep.subr.mxu0 0.0
  %3961 = vmatpush1.msra.mxu0 0.0
  %3962 = vmatprep.subr.mxu0 0.0
  %3963 = vmatpush1.msra.mxu0 0.0
  %3964 = vmatprep.subr.mxu0 0.0
  %3965 = vmatpush1.msra.mxu0 0.0
  %3966 = vmatprep.subr.mxu0 0.0
  %3967 = vmatpush1.msra.mxu0 0.0
  %3968 = vmatprep.subr.mxu0 0.0
  %3969 = vmatpush1.msra.mxu0 0.0
  %3970 = vmatprep.subr.mxu0 0.0
  %3971 = vmatpush1.msra.mxu0 0.0
  %3972 = vmatprep.subr.mxu0 0.0
  %3973 = vmatpush1.msra.mxu0 0.0
  %3974 = vmatprep.subr.mxu0 0.0
  %3975 = vmatpush1.msra.mxu0 0.0
  %3976 = vmatprep.subr.mxu0 0.0
  %3977 = vmatpush1.msra.mxu0 0.0
  %3978 = vmatprep.subr.mxu0 0.0
  %3979 = vmatpush1.msra.mxu0 0.0
  %3980 = vmatprep.subr.mxu0 0.0
  %3981 = vmatpush1.msra.mxu0 0.0
  %3982 = vmatprep.subr.mxu0 0.0
  %3983 = vmatpush1.msra.mxu0 0.0
  %3984 = vmatprep.subr.mxu0 0.0
  %3985 = vmatpush1.msra.mxu0 0.0
  %3986 = vmatprep.subr.mxu0 0.0
  %3987 = vmatpush1.msra.mxu0 0.0
  %3988 = vmatprep.subr.mxu0 0.0
  %3989 = vmatpush1.msra.mxu0 0.0
  %3990 = vmatprep.subr.mxu0 0.0
  %3991 = vmatpush1.msra.mxu0 0.0
  %3992 = vmatprep.subr.mxu0 0.0
  %3993 = vmatpush1.msra.mxu0 0.0
  %3994 = vmatprep.subr.mxu0 0.0
  %3995 = vmatpush1.msra.mxu0 0.0
  %3996 = vmatprep.subr.mxu0 0.0
  %3997 = vmatpush1.msra.mxu0 0.0
  %3998 = vmatprep.subr.mxu0 0.0
  %3999 = vmatpush1.msra.mxu0 0.0
  %4000 = vmatprep.subr.mxu0 0.0
  %4001 = vmatpush1.msra.mxu0 0.0
  %4002 = vmatprep.subr.mxu0 0.0
  %4003 = vmatpush1.msra.mxu0 0.0
  %4004 = vmatprep.subr.mxu0 0.0
  %4005 = vmatpush1.msra.mxu0 0.0
  %4006 = vmatprep.mubr.f32.mxu0 0.0
  %4007 = vmatmul.mubr.f32.gmra.mrb[0].mxu0 %v3940
  %v4008 = vpop.f32.mrb[0].mxu0
  %v4009 = vadd.f32 0.0, %v4008
  %v4010 = vpop.f32.mrb[0].mxu0
  %v4011 = vadd.f32 0.0, %v4010
  %4012 = vdwg.mxu0
  %v4013 = vadd.f32 %v3926, %v4009
  %v4014 = vadd.f32 %v3927, %v4011
  %4015 = vrot.lane.b32.xlu0 %v3405, 112
  %v4016 = vpop.permute.xlu0 %4015
  %4017 = vrot.lane.b32.xlu0 %v3406, 112
  %v4018 = vpop.permute.xlu0 %4017
  %v4019 = vsel %vm1053, %v4016, %v4018
  %v4023 = vsel %vm1053, %v4018, %v4016
  %v4024 = vmul.f32 %v4019, %v1062
  %v4025 = vmul.f32 %v4023, %v1066
  %v4027 = vsel %vm1294, %v3416, 0
  %4029 = vmatprep.subr.mxu0 %v4025
  %4030 = vmatpush1.msra.mxu0 %v4024
  %4031 = vmatprep.subr.mxu0 0.0
  %4032 = vmatpush1.msra.mxu0 0.0
  %4033 = vmatprep.subr.mxu0 0.0
  %4034 = vmatpush1.msra.mxu0 0.0
  %4035 = vmatprep.subr.mxu0 0.0
  %4036 = vmatpush1.msra.mxu0 0.0
  %4037 = vmatprep.subr.mxu0 0.0
  %4038 = vmatpush1.msra.mxu0 0.0
  %4039 = vmatprep.subr.mxu0 0.0
  %4040 = vmatpush1.msra.mxu0 0.0
  %4041 = vmatprep.subr.mxu0 0.0
  %4042 = vmatpush1.msra.mxu0 0.0
  %4043 = vmatprep.subr.mxu0 0.0
  %4044 = vmatpush1.msra.mxu0 0.0
  %4045 = vmatprep.subr.mxu0 0.0
  %4046 = vmatpush1.msra.mxu0 0.0
  %4047 = vmatprep.subr.mxu0 0.0
  %4048 = vmatpush1.msra.mxu0 0.0
  %4049 = vmatprep.subr.mxu0 0.0
  %4050 = vmatpush1.msra.mxu0 0.0
  %4051 = vmatprep.subr.mxu0 0.0
  %4052 = vmatpush1.msra.mxu0 0.0
  %4053 = vmatprep.subr.mxu0 0.0
  %4054 = vmatpush1.msra.mxu0 0.0
  %4055 = vmatprep.subr.mxu0 0.0
  %4056 = vmatpush1.msra.mxu0 0.0
  %4057 = vmatprep.subr.mxu0 0.0
  %4058 = vmatpush1.msra.mxu0 0.0
  %4059 = vmatprep.subr.mxu0 0.0
  %4060 = vmatpush1.msra.mxu0 0.0
  %4061 = vmatprep.subr.mxu0 0.0
  %4062 = vmatpush1.msra.mxu0 0.0
  %4063 = vmatprep.subr.mxu0 0.0
  %4064 = vmatpush1.msra.mxu0 0.0
  %4065 = vmatprep.subr.mxu0 0.0
  %4066 = vmatpush1.msra.mxu0 0.0
  %4067 = vmatprep.subr.mxu0 0.0
  %4068 = vmatpush1.msra.mxu0 0.0
  %4069 = vmatprep.subr.mxu0 0.0
  %4070 = vmatpush1.msra.mxu0 0.0
  %4071 = vmatprep.subr.mxu0 0.0
  %4072 = vmatpush1.msra.mxu0 0.0
  %4073 = vmatprep.subr.mxu0 0.0
  %4074 = vmatpush1.msra.mxu0 0.0
  %4075 = vmatprep.subr.mxu0 0.0
  %4076 = vmatpush1.msra.mxu0 0.0
  %4077 = vmatprep.subr.mxu0 0.0
  %4078 = vmatpush1.msra.mxu0 0.0
  %4079 = vmatprep.subr.mxu0 0.0
  %4080 = vmatpush1.msra.mxu0 0.0
  %4081 = vmatprep.subr.mxu0 0.0
  %4082 = vmatpush1.msra.mxu0 0.0
  %4083 = vmatprep.subr.mxu0 0.0
  %4084 = vmatpush1.msra.mxu0 0.0
  %4085 = vmatprep.subr.mxu0 0.0
  %4086 = vmatpush1.msra.mxu0 0.0
  %4087 = vmatprep.subr.mxu0 0.0
  %4088 = vmatpush1.msra.mxu0 0.0
  %4089 = vmatprep.subr.mxu0 0.0
  %4090 = vmatpush1.msra.mxu0 0.0
  %4091 = vmatprep.subr.mxu0 0.0
  %4092 = vmatpush1.msra.mxu0 0.0
  %4093 = vmatprep.mubr.f32.mxu0 0.0
  %4094 = vmatmul.mubr.f32.gmra.mrb[0].mxu0 %v4027
  %v4095 = vpop.f32.mrb[0].mxu0
  %v4096 = vadd.f32 0.0, %v4095
  %v4097 = vpop.f32.mrb[0].mxu0
  %v4098 = vadd.f32 0.0, %v4097
  %4099 = vdwg.mxu0
  %v4100 = vadd.f32 %v4013, %v4096
  %v4101 = vadd.f32 %v4014, %v4098
  %4102 = vrot.lane.b32.xlu0 %v3405, 111
  %v4103 = vpop.permute.xlu0 %4102
  %4104 = vrot.lane.b32.xlu0 %v3406, 111
  %v4105 = vpop.permute.xlu0 %4104
  %v4106 = vsel %vm1155, %v4103, %v4105
  %v4110 = vsel %vm1155, %v4105, %v4103
  %v4111 = vmul.f32 %v4106, %v1164
  %v4112 = vmul.f32 %v4110, %v1168
  %v4114 = vsel %vm1294, %v3417, 0
  %4116 = vmatprep.subr.mxu0 %v4112
  %4117 = vmatpush1.msra.mxu0 %v4111
  %4118 = vmatprep.subr.mxu0 0.0
  %4119 = vmatpush1.msra.mxu0 0.0
  %4120 = vmatprep.subr.mxu0 0.0
  %4121 = vmatpush1.msra.mxu0 0.0
  %4122 = vmatprep.subr.mxu0 0.0
  %4123 = vmatpush1.msra.mxu0 0.0
  %4124 = vmatprep.subr.mxu0 0.0
  %4125 = vmatpush1.msra.mxu0 0.0
  %4126 = vmatprep.subr.mxu0 0.0
  %4127 = vmatpush1.msra.mxu0 0.0
  %4128 = vmatprep.subr.mxu0 0.0
  %4129 = vmatpush1.msra.mxu0 0.0
  %4130 = vmatprep.subr.mxu0 0.0
  %4131 = vmatpush1.msra.mxu0 0.0
  %4132 = vmatprep.subr.mxu0 0.0
  %4133 = vmatpush1.msra.mxu0 0.0
  %4134 = vmatprep.subr.mxu0 0.0
  %4135 = vmatpush1.msra.mxu0 0.0
  %4136 = vmatprep.subr.mxu0 0.0
  %4137 = vmatpush1.msra.mxu0 0.0
  %4138 = vmatprep.subr.mxu0 0.0
  %4139 = vmatpush1.msra.mxu0 0.0
  %4140 = vmatprep.subr.mxu0 0.0
  %4141 = vmatpush1.msra.mxu0 0.0
  %4142 = vmatprep.subr.mxu0 0.0
  %4143 = vmatpush1.msra.mxu0 0.0
  %4144 = vmatprep.subr.mxu0 0.0
  %4145 = vmatpush1.msra.mxu0 0.0
  %4146 = vmatprep.subr.mxu0 0.0
  %4147 = vmatpush1.msra.mxu0 0.0
  %4148 = vmatprep.subr.mxu0 0.0
  %4149 = vmatpush1.msra.mxu0 0.0
  %4150 = vmatprep.subr.mxu0 0.0
  %4151 = vmatpush1.msra.mxu0 0.0
  %4152 = vmatprep.subr.mxu0 0.0
  %4153 = vmatpush1.msra.mxu0 0.0
  %4154 = vmatprep.subr.mxu0 0.0
  %4155 = vmatpush1.msra.mxu0 0.0
  %4156 = vmatprep.subr.mxu0 0.0
  %4157 = vmatpush1.msra.mxu0 0.0
  %4158 = vmatprep.subr.mxu0 0.0
  %4159 = vmatpush1.msra.mxu0 0.0
  %4160 = vmatprep.subr.mxu0 0.0
  %4161 = vmatpush1.msra.mxu0 0.0
  %4162 = vmatprep.subr.mxu0 0.0
  %4163 = vmatpush1.msra.mxu0 0.0
  %4164 = vmatprep.subr.mxu0 0.0
  %4165 = vmatpush1.msra.mxu0 0.0
  %4166 = vmatprep.subr.mxu0 0.0
  %4167 = vmatpush1.msra.mxu0 0.0
  %4168 = vmatprep.subr.mxu0 0.0
  %4169 = vmatpush1.msra.mxu0 0.0
  %4170 = vmatprep.subr.mxu0 0.0
  %4171 = vmatpush1.msra.mxu0 0.0
  %4172 = vmatprep.subr.mxu0 0.0
  %4173 = vmatpush1.msra.mxu0 0.0
  %4174 = vmatprep.subr.mxu0 0.0
  %4175 = vmatpush1.msra.mxu0 0.0
  %4176 = vmatprep.subr.mxu0 0.0
  %4177 = vmatpush1.msra.mxu0 0.0
  %4178 = vmatprep.subr.mxu0 0.0
  %4179 = vmatpush1.msra.mxu0 0.0
  %4180 = vmatprep.mubr.f32.mxu0 0.0
  %4181 = vmatmul.mubr.f32.gmra.mrb[0].mxu0 %v4114
  %v4182 = vpop.f32.mrb[0].mxu0
  %v4183 = vadd.f32 0.0, %v4182
  %v4184 = vpop.f32.mrb[0].mxu0
  %v4185 = vadd.f32 0.0, %v4184
  %4186 = vdwg.mxu0
  %v4187 = vadd.f32 %v4100, %v4183
  %v4188 = vadd.f32 %v4101, %v4185
  %4190 = vset.pattern.permute.xlu0 0
  %4191 = vperm.xlu0 %4190, %v3418
  %v4192 = vpop.permute.xlu0 %4191
  %v4194 = vadd.f32 %v4187, %v4192
  %v4195 = vadd.f32 %v4188, %v4192
  %v4196 = vadd.f32 %v3407, %v4194
  %v4197 = vadd.f32 %v3408, %v4195
  %v4198 = vtanh.pop %v4196
  %v4199 = vtanh.pop %v4197
  %4200 = vst [vmem:[%s23] sm:$0xff] %v4198
  %4201 = vst [vmem:[%s23 + $0x8] sm:$0xff] %v4199
  // Predicated region
  $region94: #{atgcn_forward.1} parent=0 // pred_check
    _
  $region95: #{atgcn_forward.1} parent=0 // pred_check_branch
    %4203 = sbr.rel (0) target = $region97
  $region96: #{atgcn_forward.1} parent=0 // pred_region
    _
  $region97: #{atgcn_forward.1} parent=0 // pred_fallthru
    _
  // Predicated region
  $region98: #{atgcn_forward.1} parent=0 // pred_check
    _
  $region99: #{atgcn_forward.1} parent=0 // pred_check_branch
    %4205 = sbr.rel (0) target = $region101
  $region100: #{atgcn_forward.1} parent=0 // pred_region
    _
  $region101: #{atgcn_forward.1} parent=0 // pred_fallthru
    _

</llo_original>
